<compile_context>
chip_gen: v6e
topology: v6e:2x2x1
jax: 0.10.0
libtpu: 0.0.40
codegen_flags: <defaults>
</compile_context>

<pallas_src>
import functools
import numpy as np
import jax
import jax.numpy as jnp
from jax.experimental import pallas as pl
from jax.experimental.pallas import tpu as pltpu

C_PAD = 128  # lane-padded class dimension


def _round_up(a, b):
    return (a + b - 1) // b * b


def _vmem_budget_bytes(requested=None):
    """Generation-aware scoped-VMEM budget (bytes)."""
    if requested is not None:
        return int(requested)
    cap = None
    try:
        info = pltpu.get_tpu_info()
        for attr in ("vmem_capacity_bytes", "vmem_size_bytes", "vmem_bytes"):
            v = getattr(info, attr, None)
            if v:
                cap = int(v)
                break
    except Exception:
        cap = None
    if not cap:
        cap = 64 * 1024 * 1024  # conservative fallback: v7x per-TensorCore VMEM
    # ~48 MB on v7x (64 MiB physical), ~96 MB on v5e/v6e (128 MiB physical).
    return max(32 * 1024 * 1024, (cap * 3) // 4)


# ---------------------------------------------------------------------------
# Kernels
# ---------------------------------------------------------------------------
def _masked_log_softmax(y, num_classes):
    """Log-softmax over the first `num_classes` lanes of a (rows, 128) f32."""
    lane = jax.lax.broadcasted_iota(jnp.int32, y.shape, 1)
    valid = lane < num_classes
    ymask = jnp.where(valid, y, -jnp.inf)
    m = jnp.max(ymask, axis=-1, keepdims=True)
    e = jnp.where(valid, jnp.exp(y - m), 0.0)
    lse = jnp.log(jnp.sum(e, axis=-1, keepdims=True))
    return jnp.where(valid, y - m - lse, 0.0)


def _make_fused_kernel(k_plus_1, num_classes):
    """Whole forward in one kernel: adj stays resident in VMEM, cur stays f32."""

    def kernel(gamma_ref, x_ref, w1_ref, b1_ref, w2_ref, b2_ref, adj_ref,
               out_ref):
        h = jnp.dot(x_ref[...], w1_ref[...], preferred_element_type=jnp.float32)
        h = jnp.maximum(h + b1_ref[...], 0.0)                    # f32 bias+relu
        z = jnp.dot(h.astype(jnp.bfloat16), w2_ref[...],
                    preferred_element_type=jnp.float32) + b2_ref[...]
        y = gamma_ref[0] * z
        cur = z                                                   # f32 between hops
        adj = adj_ref[...]                                        # bf16, resident
        for s in range(1, k_plus_1):                              # static unroll
            cur = jnp.dot(adj, cur.astype(jnp.bfloat16),
                          preferred_element_type=jnp.float32)
            y = y + gamma_ref[s] * cur
        out_ref[...] = _masked_log_softmax(y, num_classes)

    return kernel


def _encoder_kernel(gamma0_ref, x_ref, w1_ref, b1_ref, w2_ref, b2_ref,
                    z_ref, y_ref):
    # x_ref: (tm, F) bf16 ; w1_ref: (F, H_PAD) bf16 ; w2_ref: (H_PAD, C_PAD) bf16
    h = jnp.dot(x_ref[...], w1_ref[...], preferred_element_type=jnp.float32)
    h = jnp.maximum(h + b1_ref[...], 0.0)                        # f32 bias+relu
    z = jnp.dot(h.astype(jnp.bfloat16), w2_ref[...],
                preferred_element_type=jnp.float32) + b2_ref[...]
    z_ref[...] = z.astype(jnp.bfloat16)       # bf16 operand for the adj chain
    y_ref[...] = gamma0_ref[0] * z            # gamma[0] * (adj^0 @ z), f32


def _make_prop_kernel(num_classes, final_step):
    """One GPR propagation step: cur_out = adj @ cur ; y_out = y + gamma*cur_out.
    On the final step a masked log-softmax over the first `num_classes` lanes
    is fused into the y_out store.

    NOTE: correctness of the init/store-at-last accumulator pattern relies on
    the reduction (column) axis being the LAST grid dimension."""

    def kernel(gamma_ref, adj_ref, cur_ref, y_in_ref, cur_out_ref, y_out_ref,
               acc_ref):
        j = pl.program_id(1)

        @pl.when(j == 0)
        def _():
            acc_ref[...] = jnp.zeros_like(acc_ref)

        # adj tile (tm, tk) bf16  @  cur slice (tk, 128) bf16  -> f32 acc
        acc_ref[...] += jnp.dot(adj_ref[...], cur_ref[...],
                                preferred_element_type=jnp.float32)

        @pl.when(j == pl.num_programs(1) - 1)
        def _():
            new_cur = acc_ref[...]                        # (adj^s @ z), f32
            cur_out_ref[...] = new_cur.astype(jnp.bfloat16)
            y = y_in_ref[...] + gamma_ref[0] * new_cur    # f32 gamma update
            if final_step:
                y = _masked_log_softmax(y, num_classes)
            y_out_ref[...] = y

    return kernel


# ---------------------------------------------------------------------------
# Wrapper
# ---------------------------------------------------------------------------
def gprgnn_forward(x, adj, w1, b1, w2, b2, gamma, *,
                   tile_m=512, tile_k=2048, vmem_limit_bytes=None,
                   force_tiled=False):
    """GPRGNN forward (eval mode).

    Weights are stored transposed vs. nn.Linear: w1 [F, H], w2 [H, C];
    biases b1 [H], b2 [C]; gamma [K+1]. Returns [N, C] log-probabilities.
    """
    N, F = x.shape
    Hd = w1.shape[1]
    C = w2.shape[1]
    k_plus_1 = int(gamma.shape[0])
    assert k_plus_1 >= 2, "this implementation assumes GPR depth k >= 1"
    assert adj.shape == (N, N)
    assert C <= C_PAD

    f32, bf16 = jnp.float32, jnp.bfloat16
    H_PAD = _round_up(Hd, 128)
    budget = _vmem_budget_bytes(vmem_limit_bytes)

    # One-time casts / lane padding (plain XLA ops, outside the kernels).
    x_bf = x.astype(bf16)                              # halves the x HBM read
    adj_bf = adj.astype(bf16)                          # halves the adj stream
    w1_pad = jnp.zeros((F, H_PAD), bf16).at[:, :Hd].set(w1.astype(bf16))
    b1_pad = jnp.zeros((1, H_PAD), f32).at[0, :Hd].set(
        jnp.asarray(b1, f32).reshape(-1))
    w2_pad = jnp.zeros((H_PAD, C_PAD), bf16).at[:Hd, :C].set(w2.astype(bf16))
    b2_pad = jnp.zeros((1, C_PAD), f32).at[0, :C].set(
        jnp.asarray(b2, f32).reshape(-1))
    gamma = jnp.asarray(gamma, f32)

    smem = pl.BlockSpec(memory_space=pltpu.MemorySpace.SMEM)

    # ---------------- fused path: adj resident in VMEM ----------------
    N128 = _round_up(N, 128)
    fused_bytes = (2 * N128 * N128 * 2        # adj bf16 (double-buffer worst case)
                   + 2 * N128 * F * 2         # x bf16
                   + 2 * N128 * C_PAD * 4     # out f32
                   + 4 * N128 * C_PAD * 4     # cur / y live f32 values
                   + N128 * H_PAD * 4         # h
                   + (4 << 20))               # weights + compiler headroom
    if (not force_tiled) and fused_bytes <= budget:
        if N128 != N:
            adj_p = jnp.zeros((N128, N128), bf16).at[:N, :N].set(adj_bf)
            x_p = jnp.zeros((N128, F), bf16).at[:N, :].set(x_bf)
        else:
            adj_p, x_p = adj_bf, x_bf
        out = pl.pallas_call(
            _make_fused_kernel(k_plus_1, C),
            out_shape=jax.ShapeDtypeStruct((N128, C_PAD), f32),
            grid=(1,),
            in_specs=[smem,                                           # gamma
                      pl.BlockSpec((N128, F), lambda i: (0, 0)),      # x
                      pl.BlockSpec((F, H_PAD), lambda i: (0, 0)),     # w1
                      pl.BlockSpec((1, H_PAD), lambda i: (0, 0)),     # b1
                      pl.BlockSpec((H_PAD, C_PAD), lambda i: (0, 0)),  # w2
                      pl.BlockSpec((1, C_PAD), lambda i: (0, 0)),     # b2
                      pl.BlockSpec((N128, N128), lambda i: (0, 0))],  # adj
            out_specs=pl.BlockSpec((N128, C_PAD), lambda i: (0, 0)),
            compiler_params=pltpu.CompilerParams(
                dimension_semantics=("arbitrary",),
                vmem_limit_bytes=budget),
        )(gamma, x_p, w1_pad, b1_pad, w2_pad, b2_pad, adj_p)
        return out[:N, :C]

    # ---------------- tiled path: adj streamed from HBM ----------------
    def _pick_tile(requested, upper):
        t = 128
        while t * 2 <= requested and t * 2 <= upper:
            t *= 2
        return t

    tile_m = _pick_tile(tile_m, N128)
    tile_k = _pick_tile(tile_k, N128)
    # Keep >= 2 row tiles so the "parallel" row axis feeds both v7x TensorCores.
    while tile_m > 128 and _round_up(N128, tile_m) // tile_m < 2:
        tile_m //= 2

    def _prop_vmem_bytes(tm, tk):
        return (2 * tm * tk * 2                 # adj tile bf16, double-buffered
                + 2 * tk * C_PAD * 2            # cur j-slice bf16, double-buffered
                + 2 * tm * C_PAD * (4 + 2 + 4)  # y_in f32 + cur_out bf16 + y_out f32
                + tm * C_PAD * 4                # f32 accumulator scratch
                + (2 << 20))                    # compiler scratch headroom

    while _prop_vmem_bytes(tile_m, tile_k) > budget and tile_k > 128:
        tile_k //= 2
    while _prop_vmem_bytes(tile_m, tile_k) > budget and tile_m > 128:
        tile_m //= 2

    N_pad = _round_up(N, int(np.lcm(tile_m, tile_k)))
    n_i = N_pad // tile_m
    n_j = N_pad // tile_k

    if N_pad != N:
        adj_p = jnp.zeros((N_pad, N_pad), bf16).at[:N, :N].set(adj_bf)
        x_p = jnp.zeros((N_pad, F), bf16).at[:N, :].set(x_bf)
    else:
        adj_p, x_p = adj_bf, x_bf

    # ---- 1) feature encoder: z (bf16, lane-padded) and y0 = gamma[0] * z ----
    enc = pl.pallas_call(
        _encoder_kernel,
        out_shape=(jax.ShapeDtypeStruct((N_pad, C_PAD), bf16),
                   jax.ShapeDtypeStruct((N_pad, C_PAD), f32)),
        grid=(n_i,),
        in_specs=[smem,
                  pl.BlockSpec((tile_m, F), lambda i: (i, 0)),
                  pl.BlockSpec((F, H_PAD), lambda i: (0, 0)),
                  pl.BlockSpec((1, H_PAD), lambda i: (0, 0)),
                  pl.BlockSpec((H_PAD, C_PAD), lambda i: (0, 0)),
                  pl.BlockSpec((1, C_PAD), lambda i: (0, 0))],
        out_specs=(pl.BlockSpec((tile_m, C_PAD), lambda i: (i, 0)),
                   pl.BlockSpec((tile_m, C_PAD), lambda i: (i, 0))),
        compiler_params=pltpu.CompilerParams(
            dimension_semantics=("parallel",),
            vmem_limit_bytes=budget),
    )
    cur, y = enc(gamma[0:1], x_p, w1_pad, b1_pad, w2_pad, b2_pad)

    # ---- 2) K propagation steps: cur <- adj @ cur ; y += gamma[s] * cur ----
    # TODO(synk): for very deep K or poorly conditioned adj, carry cur in f32
    # between steps (bf16 re-quantization error compounds over hops).
    def prop_call(final_step):
        kern = _make_prop_kernel(C, final_step)
        return pl.pallas_call(
            kern,
            out_shape=(jax.ShapeDtypeStruct((N_pad, C_PAD), bf16),
                       jax.ShapeDtypeStruct((N_pad, C_PAD), f32)),
            grid=(n_i, n_j),                  # reduction axis MUST stay last
            in_specs=[smem,                                                # gamma[s]
                      pl.BlockSpec((tile_m, tile_k), lambda i, j: (i, j)),  # adj
                      pl.BlockSpec((tile_k, C_PAD), lambda i, j: (j, 0)),   # cur slice
                      pl.BlockSpec((tile_m, C_PAD), lambda i, j: (i, 0))],  # y in
            out_specs=(pl.BlockSpec((tile_m, C_PAD), lambda i, j: (i, 0)),  # cur out
                       pl.BlockSpec((tile_m, C_PAD), lambda i, j: (i, 0))),  # y out
            scratch_shapes=[pltpu.VMEM((tile_m, C_PAD), f32)],
            input_output_aliases={3: 1},      # y updated in place across steps
            compiler_params=pltpu.CompilerParams(
                dimension_semantics=("parallel", "arbitrary"),
                vmem_limit_bytes=budget),
        )

    k = k_plus_1 - 1
    mid_call = prop_call(False) if k > 1 else None
    last_call = prop_call(True)
    for s in range(1, k + 1):
        call = last_call if s == k else mid_call
        cur, y = call(gamma[s:s + 1], adj_p, cur, y)

    # Final lane-dense kernel output is [N_pad, 128]; slice back to [N, C].
    return y[:N, :C]


# ---------------------------------------------------------------------------
# Pure-JAX reference (f32)
# ---------------------------------------------------------------------------
def gprgnn_reference(x, adj, w1, b1, w2, b2, gamma):
    h = jax.nn.relu(x @ w1 + b1[None, :])
    z = h @ w2 + b2[None, :]
    y = gamma[0] * z
    cur = z
    for s in range(1, gamma.shape[0]):
        cur = adj @ cur
        y = y + gamma[s] * cur
    return jax.nn.log_softmax(y, axis=1)


if __name__ == "__main__":
    # Small, TPU-friendly shapes consistent with the module's forward.
    N = 512          # num nodes
    F = 32           # num_features
    H = 64           # hidden_dim
    C = 16           # num_classes
    K = 4            # GPR propagation depth
    ALPHA = 0.1      # PPR alpha

    key = jax.random.PRNGKey(0)
    kx, kadj, kw1, kw2 = jax.random.split(key, 4)

    # Node features.
    x = jax.random.normal(kx, (N, F), dtype=jnp.float32)

    # Symmetric, row-normalized dense adjacency (synthetic).
    a = jax.random.uniform(kadj, (N, N), dtype=jnp.float32)
    a = (a > 0.97).astype(jnp.float32)
    a = a + a.T + jnp.eye(N, dtype=jnp.float32)
    deg = jnp.sum(a, axis=1, keepdims=True)
    adj = a / jnp.maximum(deg, 1.0)

    # Xavier-uniform init (weights stored transposed as [in, out]), zero biases
    # (matches reset_parameter).
    bound1 = float(np.sqrt(6.0 / (F + H)))
    w1 = jax.random.uniform(kw1, (F, H), jnp.float32, -bound1, bound1)
    b1 = jnp.zeros((H,), jnp.float32)
    bound2 = float(np.sqrt(6.0 / (H + C)))
    w2 = jax.random.uniform(kw2, (H, C), jnp.float32, -bound2, bound2)
    b2 = jnp.zeros((C,), jnp.float32)

    # GPRConv gamma, init_method='PPR'.
    gamma_np = ALPHA * (1.0 - ALPHA) ** np.arange(K + 1)
    gamma_np[-1] = (1.0 - ALPHA) ** K
    gamma = jnp.asarray(gamma_np, dtype=jnp.float32)

    ref = gprgnn_reference(x, adj, w1, b1, w2, b2, gamma)

    # 1) Fused (adj-resident) path — the one actually chosen at this size.
    fused_fn = jax.jit(gprgnn_forward)
    out_fused = jax.block_until_ready(fused_fn(x, adj, w1, b1, w2, b2, gamma))
    assert out_fused.shape == (N, C)
    np.testing.assert_allclose(np.asarray(out_fused), np.asarray(ref),
                               rtol=5e-2, atol=5e-2)

    # 2) Tiled (adj-streaming) path — forced with small tiles so the j-grid
    #    reduction, accumulator scratch and y aliasing are all exercised.
    tiled_fn = jax.jit(functools.partial(gprgnn_forward, force_tiled=True,
                                         tile_m=128, tile_k=128))
    out_tiled = jax.block_until_ready(tiled_fn(x, adj, w1, b1, w2, b2, gamma))
    assert out_tiled.shape == (N, C)
    # bf16 MXU operands (f32 accumulation) vs. an all-f32 reference -> loosened
    # tolerance.
    np.testing.assert_allclose(np.asarray(out_tiled), np.asarray(ref),
                               rtol=5e-2, atol=5e-2)

    print("KERNEL_OK")
</pallas_src>

<mosaic_0001>
module attributes {stable_mosaic.version = 11 : i64} {
  func.func @kernel(%arg0: i32, %arg1: memref<5xf32, #tpu.memory_space<smem>>, %arg2: memref<512x32xbf16, #tpu.memory_space<vmem>>, %arg3: memref<32x128xbf16, #tpu.memory_space<vmem>>, %arg4: memref<1x128xf32, #tpu.memory_space<vmem>>, %arg5: memref<128x128xbf16, #tpu.memory_space<vmem>>, %arg6: memref<1x128xf32, #tpu.memory_space<vmem>>, %arg7: memref<512x512xbf16, #tpu.memory_space<vmem>>, %arg8: memref<512x128xf32, #tpu.memory_space<vmem>>) attributes {dimension_semantics = [#tpu.dimension_semantics<arbitrary>], iteration_bounds = array<i64: 1>, scalar_prefetch = 0 : i64, scratch_operands = 0 : i64, tpu.core_type = #tpu.core_type<tc>, window_params = [{transform_indices = @transform_0, window_bounds = array<i64: 5>}, {pipeline_mode = #tpu.pipeline_mode<synchronous>, transform_indices = @transform_1, window_bounds = array<i64: 512, 32>}, {pipeline_mode = #tpu.pipeline_mode<synchronous>, transform_indices = @transform_2, window_bounds = array<i64: 32, 128>}, {pipeline_mode = #tpu.pipeline_mode<synchronous>, transform_indices = @transform_3, window_bounds = array<i64: 1, 128>}, {pipeline_mode = #tpu.pipeline_mode<synchronous>, transform_indices = @transform_4, window_bounds = array<i64: 128, 128>}, {pipeline_mode = #tpu.pipeline_mode<synchronous>, transform_indices = @transform_5, window_bounds = array<i64: 1, 128>}, {pipeline_mode = #tpu.pipeline_mode<synchronous>, transform_indices = @transform_6, window_bounds = array<i64: 512, 512>}, {pipeline_mode = #tpu.pipeline_mode<synchronous>, transform_indices = @transform_7, window_bounds = array<i64: 512, 128>}]} {
    %c0 = arith.constant 0 : index
    %c0_0 = arith.constant 0 : index
    %0 = vector.load %arg2[%c0, %c0_0] : memref<512x32xbf16, #tpu.memory_space<vmem>>, vector<512x32xbf16>
    %c0_1 = arith.constant 0 : index
    %c0_2 = arith.constant 0 : index
    %1 = vector.load %arg3[%c0_1, %c0_2] : memref<32x128xbf16, #tpu.memory_space<vmem>>, vector<32x128xbf16>
    %cst = arith.constant dense<0.000000e+00> : vector<512x128xf32>
    %2 = tpu.matmul %0, %1, %cst {dimension_numbers = #tpu.dot_dimension_numbers<[1], [0], [0], [1], [0, 0, 1, 1], [], []>} : vector<512x32xbf16>, vector<32x128xbf16>, vector<512x128xf32> -> vector<512x128xf32>
    %c0_3 = arith.constant 0 : index
    %c0_4 = arith.constant 0 : index
    %3 = vector.load %arg4[%c0_3, %c0_4] : memref<1x128xf32, #tpu.memory_space<vmem>>, vector<1x128xf32>
    %4 = vector.broadcast %3 : vector<1x128xf32> to vector<512x128xf32>
    %5 = arith.addf %2, %4 : vector<512x128xf32>
    %cst_5 = arith.constant 0.000000e+00 : f32
    %6 = vector.broadcast %cst_5 : f32 to vector<512x128xf32>
    %7 = arith.maximumf %5, %6 : vector<512x128xf32>
    %8 = arith.truncf %7 : vector<512x128xf32> to vector<512x128xbf16>
    %c0_6 = arith.constant 0 : index
    %c0_7 = arith.constant 0 : index
    %9 = vector.load %arg5[%c0_6, %c0_7] : memref<128x128xbf16, #tpu.memory_space<vmem>>, vector<128x128xbf16>
    %cst_8 = arith.constant dense<0.000000e+00> : vector<512x128xf32>
    %10 = tpu.matmul %8, %9, %cst_8 {dimension_numbers = #tpu.dot_dimension_numbers<[1], [0], [0], [1], [0, 0, 1, 1], [], []>} : vector<512x128xbf16>, vector<128x128xbf16>, vector<512x128xf32> -> vector<512x128xf32>
    %c0_9 = arith.constant 0 : index
    %c0_10 = arith.constant 0 : index
    %11 = vector.load %arg6[%c0_9, %c0_10] : memref<1x128xf32, #tpu.memory_space<vmem>>, vector<1x128xf32>
    %12 = vector.broadcast %11 : vector<1x128xf32> to vector<512x128xf32>
    %13 = arith.addf %10, %12 : vector<512x128xf32>
    %c0_11 = arith.constant 0 : index
    %14 = memref.load %arg1[%c0_11] : memref<5xf32, #tpu.memory_space<smem>>
    %15 = vector.broadcast %14 : f32 to vector<512x128xf32>
    %16 = arith.mulf %15, %13 : vector<512x128xf32>
    %c0_12 = arith.constant 0 : index
    %c0_13 = arith.constant 0 : index
    %17 = vector.load %arg7[%c0_12, %c0_13] : memref<512x512xbf16, #tpu.memory_space<vmem>>, vector<512x512xbf16>
    %18 = arith.truncf %13 : vector<512x128xf32> to vector<512x128xbf16>
    %cst_14 = arith.constant dense<0.000000e+00> : vector<512x128xf32>
    %19 = tpu.matmul %17, %18, %cst_14 {dimension_numbers = #tpu.dot_dimension_numbers<[1], [0], [0], [1], [0, 0, 1, 1], [], []>} : vector<512x512xbf16>, vector<512x128xbf16>, vector<512x128xf32> -> vector<512x128xf32>
    %c1 = arith.constant 1 : index
    %20 = memref.load %arg1[%c1] : memref<5xf32, #tpu.memory_space<smem>>
    %21 = vector.broadcast %20 : f32 to vector<512x128xf32>
    %22 = arith.mulf %21, %19 : vector<512x128xf32>
    %23 = arith.addf %16, %22 : vector<512x128xf32>
    %24 = arith.truncf %19 : vector<512x128xf32> to vector<512x128xbf16>
    %cst_15 = arith.constant dense<0.000000e+00> : vector<512x128xf32>
    %25 = tpu.matmul %17, %24, %cst_15 {dimension_numbers = #tpu.dot_dimension_numbers<[1], [0], [0], [1], [0, 0, 1, 1], [], []>} : vector<512x512xbf16>, vector<512x128xbf16>, vector<512x128xf32> -> vector<512x128xf32>
    %c2 = arith.constant 2 : index
    %26 = memref.load %arg1[%c2] : memref<5xf32, #tpu.memory_space<smem>>
    %27 = vector.broadcast %26 : f32 to vector<512x128xf32>
    %28 = arith.mulf %27, %25 : vector<512x128xf32>
    %29 = arith.addf %23, %28 : vector<512x128xf32>
    %30 = arith.truncf %25 : vector<512x128xf32> to vector<512x128xbf16>
    %cst_16 = arith.constant dense<0.000000e+00> : vector<512x128xf32>
    %31 = tpu.matmul %17, %30, %cst_16 {dimension_numbers = #tpu.dot_dimension_numbers<[1], [0], [0], [1], [0, 0, 1, 1], [], []>} : vector<512x512xbf16>, vector<512x128xbf16>, vector<512x128xf32> -> vector<512x128xf32>
    %c3 = arith.constant 3 : index
    %32 = memref.load %arg1[%c3] : memref<5xf32, #tpu.memory_space<smem>>
    %33 = vector.broadcast %32 : f32 to vector<512x128xf32>
    %34 = arith.mulf %33, %31 : vector<512x128xf32>
    %35 = arith.addf %29, %34 : vector<512x128xf32>
    %36 = arith.truncf %31 : vector<512x128xf32> to vector<512x128xbf16>
    %cst_17 = arith.constant dense<0.000000e+00> : vector<512x128xf32>
    %37 = tpu.matmul %17, %36, %cst_17 {dimension_numbers = #tpu.dot_dimension_numbers<[1], [0], [0], [1], [0, 0, 1, 1], [], []>} : vector<512x512xbf16>, vector<512x128xbf16>, vector<512x128xf32> -> vector<512x128xf32>
    %c4 = arith.constant 4 : index
    %38 = memref.load %arg1[%c4] : memref<5xf32, #tpu.memory_space<smem>>
    %39 = vector.broadcast %38 : f32 to vector<512x128xf32>
    %40 = arith.mulf %39, %37 : vector<512x128xf32>
    %41 = arith.addf %35, %40 : vector<512x128xf32>
    %42 = tpu.iota {dimensions = array<i32: 1>} : vector<512x128xi32>
    %c16_i32 = arith.constant 16 : i32
    %43 = vector.broadcast %c16_i32 : i32 to vector<512x128xi32>
    %44 = arith.cmpi slt, %42, %43 : vector<512x128xi32>
    %cst_18 = arith.constant 0xFF800000 : f32
    %45 = vector.broadcast %cst_18 : f32 to vector<512x128xf32>
    %46 = arith.select %44, %41, %45 : vector<512x128xi1>, vector<512x128xf32>
    %cst_19 = arith.constant dense<0xFF800000> : vector<512xf32>
    %47 = vector.multi_reduction <maximumf>, %46, %cst_19 [1] : vector<512x128xf32> to vector<512xf32>
    %48 = vector.shape_cast %47 : vector<512xf32> to vector<512x1xf32>
    %49 = vector.broadcast %48 : vector<512x1xf32> to vector<512x128xf32>
    %50 = arith.subf %41, %49 : vector<512x128xf32>
    %51 = math.exp %50 : vector<512x128xf32>
    %cst_20 = arith.constant 0.000000e+00 : f32
    %52 = vector.broadcast %cst_20 : f32 to vector<512x128xf32>
    %53 = arith.select %44, %51, %52 : vector<512x128xi1>, vector<512x128xf32>
    %cst_21 = arith.constant dense<0.000000e+00> : vector<512xf32>
    %54 = vector.multi_reduction <add>, %53, %cst_21 [1] : vector<512x128xf32> to vector<512xf32>
    %55 = vector.shape_cast %54 : vector<512xf32> to vector<512x1xf32>
    %56 = math.log %55 : vector<512x1xf32>
    %57 = vector.broadcast %48 : vector<512x1xf32> to vector<512x128xf32>
    %58 = arith.subf %41, %57 : vector<512x128xf32>
    %59 = vector.broadcast %56 : vector<512x1xf32> to vector<512x128xf32>
    %60 = arith.subf %58, %59 : vector<512x128xf32>
    %cst_22 = arith.constant 0.000000e+00 : f32
    %61 = vector.broadcast %cst_22 : f32 to vector<512x128xf32>
    %62 = arith.select %44, %60, %61 : vector<512x128xi1>, vector<512x128xf32>
    %c0_23 = arith.constant 0 : index
    %c0_24 = arith.constant 0 : index
    %63 = vector.load %arg8[%c0_23, %c0_24] : memref<512x128xf32, #tpu.memory_space<vmem>>, vector<512x128xf32>
    tpu.vector_store %arg8[%c0_23, %c0_24], %62 {strides = array<i32>} : memref<512x128xf32, #tpu.memory_space<vmem>>, vector<512x128xf32>,
    return
  }
  func.func @transform_0(%arg0: i32) -> i32 {
    %c0_i32 = arith.constant 0 : i32
    %c0_i32_0 = arith.constant 0 : i32
    return %c0_i32 : i32
  }
  func.func @transform_1(%arg0: i32) -> (i32, i32) {
    %c0_i32 = arith.constant 0 : i32
    %c0_i32_0 = arith.constant 0 : i32
    %c0_i32_1 = arith.constant 0 : i32
    return %c0_i32, %c0_i32_0 : i32, i32
  }
  func.func @transform_2(%arg0: i32) -> (i32, i32) {
    %c0_i32 = arith.constant 0 : i32
    %c0_i32_0 = arith.constant 0 : i32
    %c0_i32_1 = arith.constant 0 : i32
    return %c0_i32, %c0_i32_0 : i32, i32
  }
  func.func @transform_3(%arg0: i32) -> (i32, i32) {
    %c0_i32 = arith.constant 0 : i32
    %c0_i32_0 = arith.constant 0 : i32
    %c0_i32_1 = arith.constant 0 : i32
    return %c0_i32, %c0_i32_0 : i32, i32
  }
  func.func @transform_4(%arg0: i32) -> (i32, i32) {
    %c0_i32 = arith.constant 0 : i32
    %c0_i32_0 = arith.constant 0 : i32
    %c0_i32_1 = arith.constant 0 : i32
    return %c0_i32, %c0_i32_0 : i32, i32
  }
  func.func @transform_5(%arg0: i32) -> (i32, i32) {
    %c0_i32 = arith.constant 0 : i32
    %c0_i32_0 = arith.constant 0 : i32
    %c0_i32_1 = arith.constant 0 : i32
    return %c0_i32, %c0_i32_0 : i32, i32
  }
  func.func @transform_6(%arg0: i32) -> (i32, i32) {
    %c0_i32 = arith.constant 0 : i32
    %c0_i32_0 = arith.constant 0 : i32
    %c0_i32_1 = arith.constant 0 : i32
    return %c0_i32, %c0_i32_0 : i32, i32
  }
  func.func @transform_7(%arg0: i32) -> (i32, i32) {
    %c0_i32 = arith.constant 0 : i32
    %c0_i32_0 = arith.constant 0 : i32
    %c0_i32_1 = arith.constant 0 : i32
    return %c0_i32, %c0_i32_0 : i32, i32
  }
}

</mosaic_0001>

<llo_original>
// kernel: gprgnn_forward.1
$region0: #{gprgnn_forward.1}
  #allocation0 [shape = 'u32[]', space=smem, size = 0x4, offset = 0x4, fixed_abs, tag = 'smem constant byte address 0x4 - core index']
  #allocation1 [shape = 'u32[144,128]{1,0:T(1,128)}', space=vmem, size = 0x12000, scoped, tag = 'internal scratch']
  %s0 = inlined_call_operand.vmem [shape: f32[5], index: 0, kind: input, shape index: {}]
  %s1 = inlined_call_operand.vmem [shape: bf16[512,32], index: 1, kind: input, shape index: {}]
  %s2 = inlined_call_operand.vmem [shape: bf16[32,128], index: 2, kind: input, shape index: {}]
  %s3 = inlined_call_operand.vmem [shape: f32[1,128], index: 3, kind: input, shape index: {}]
  %s4 = inlined_call_operand.vmem [shape: bf16[128,128], index: 4, kind: input, shape index: {}]
  %s5 = inlined_call_operand.vmem [shape: f32[1,128], index: 5, kind: input, shape index: {}]
  %s6 = inlined_call_operand.vmem [shape: bf16[512,512], index: 6, kind: input, shape index: {}]
  %s7 = inlined_call_operand.vmem [shape: f32[512,128], index: 7, kind: output, shape index: {}]
  %s8 = sld [smem:[#allocation0]]
  $region42: #{gprgnn_forward.1} parent=0
    _
  %s10 = ssub.s32 1, %s8
  %s11 = scalar_select 0, %s10, %s8
  $region1: #{gprgnn_forward.1} parent=0
    #allocation2 [shape = 'u8[512]{0}', space=smem, size = 0x200, scoped, tag = 'input window, operand 0, single buffered']
    #allocation3 [shape = 's32[1]{0}', space=sflag, size = 0x4, scoped, tag = 'scoped memory for gprgnn_forward.1']
    %12 = vsyncpa [#allocation3], 0
    // Predicated region
    $region2: #{gprgnn_forward.1} parent=1 // pred_check
      _
    $region3: #{gprgnn_forward.1} parent=1 // pred_check_branch
      %14 = sbr.rel (0) target = $region5
    $region4: #{gprgnn_forward.1} parent=1 // pred_region
      %s16 = ssub.s32 16, 16
      %17 = vsyncadd [#allocation3], %s16
      %s19 = sshll.u32 %s0, 4
      %s20 = int_to_ptr.vmem [resolvable:$true] %s19
      %22 = dma.vmem_to_smem %s20, 16, [#allocation2], [#allocation3]
    $region5: #{gprgnn_forward.1} parent=1 // pred_fallthru
      _
    // Predicated region
    $region6: #{gprgnn_forward.1} parent=1 // pred_check
      _
    $region7: #{gprgnn_forward.1} parent=1 // pred_check_branch
      %24 = sbr.rel (0) target = $region9
    $region8: #{gprgnn_forward.1} parent=1 // pred_region
      _
    $region9: #{gprgnn_forward.1} parent=1 // pred_fallthru
      _
    // Predicated region
    $region10: #{gprgnn_forward.1} parent=1 // pred_check
      _
    $region11: #{gprgnn_forward.1} parent=1 // pred_check_branch
      %26 = sbr.rel (0) target = $region13
    $region12: #{gprgnn_forward.1} parent=1 // pred_region
      _
    $region13: #{gprgnn_forward.1} parent=1 // pred_fallthru
      _
    // Predicated region
    $region14: #{gprgnn_forward.1} parent=1 // pred_check
      _
    $region15: #{gprgnn_forward.1} parent=1 // pred_check_branch
      %28 = sbr.rel (0) target = $region17
    $region16: #{gprgnn_forward.1} parent=1 // pred_region
      _
    $region17: #{gprgnn_forward.1} parent=1 // pred_fallthru
      _
    // Predicated region
    $region18: #{gprgnn_forward.1} parent=1 // pred_check
      _
    $region19: #{gprgnn_forward.1} parent=1 // pred_check_branch
      %30 = sbr.rel (0) target = $region21
    $region20: #{gprgnn_forward.1} parent=1 // pred_region
      _
    $region21: #{gprgnn_forward.1} parent=1 // pred_fallthru
      _
    // Predicated region
    $region22: #{gprgnn_forward.1} parent=1 // pred_check
      _
    $region23: #{gprgnn_forward.1} parent=1 // pred_check_branch
      %32 = sbr.rel (0) target = $region25
    $region24: #{gprgnn_forward.1} parent=1 // pred_region
      _
    $region25: #{gprgnn_forward.1} parent=1 // pred_fallthru
      _
    // Predicated region
    $region26: #{gprgnn_forward.1} parent=1 // pred_check
      _
    $region27: #{gprgnn_forward.1} parent=1 // pred_check_branch
      %34 = sbr.rel (0) target = $region29
    $region28: #{gprgnn_forward.1} parent=1 // pred_region
      _
    $region29: #{gprgnn_forward.1} parent=1 // pred_fallthru
      _
    // Predicated region
    $region30: #{gprgnn_forward.1} parent=1 // pred_check
      _
    $region31: #{gprgnn_forward.1} parent=1 // pred_check_branch
      %36 = sbr.rel (0) target = $region33
    $region32: #{gprgnn_forward.1} parent=1 // pred_region
      %37 = dma.done [#allocation3], 16
    $region33: #{gprgnn_forward.1} parent=1 // pred_fallthru
      _
    %38 = sfence
    %v40 = vld [vmem:[%s1] sm:$0xf]
    %v41 = vld [vmem:[%s1 + $0x4] sm:$0xf]
    %v42 = vld [vmem:[%s1 + $0x8] sm:$0xf]
    %v43 = vld [vmem:[%s1 + $0xc] sm:$0xf]
    %v44 = vld [vmem:[%s1 + $0x10] sm:$0xf]
    %v45 = vld [vmem:[%s1 + $0x14] sm:$0xf]
    %v46 = vld [vmem:[%s1 + $0x18] sm:$0xf]
    %v47 = vld [vmem:[%s1 + $0x1c] sm:$0xf]
    %v48 = vld [vmem:[%s1 + $0x20] sm:$0xf]
    %v49 = vld [vmem:[%s1 + $0x24] sm:$0xf]
    %v50 = vld [vmem:[%s1 + $0x28] sm:$0xf]
    %v51 = vld [vmem:[%s1 + $0x2c] sm:$0xf]
    %v52 = vld [vmem:[%s1 + $0x30] sm:$0xf]
    %v53 = vld [vmem:[%s1 + $0x34] sm:$0xf]
    %v54 = vld [vmem:[%s1 + $0x38] sm:$0xf]
    %v55 = vld [vmem:[%s1 + $0x3c] sm:$0xf]
    %v56 = vld [vmem:[%s1 + $0x40] sm:$0xf]
    %v57 = vld [vmem:[%s1 + $0x44] sm:$0xf]
    %v58 = vld [vmem:[%s1 + $0x48] sm:$0xf]
    %v59 = vld [vmem:[%s1 + $0x4c] sm:$0xf]
    %v60 = vld [vmem:[%s1 + $0x50] sm:$0xf]
    %v61 = vld [vmem:[%s1 + $0x54] sm:$0xf]
    %v62 = vld [vmem:[%s1 + $0x58] sm:$0xf]
    %v63 = vld [vmem:[%s1 + $0x5c] sm:$0xf]
    %v64 = vld [vmem:[%s1 + $0x60] sm:$0xf]
    %v65 = vld [vmem:[%s1 + $0x64] sm:$0xf]
    %v66 = vld [vmem:[%s1 + $0x68] sm:$0xf]
    %v67 = vld [vmem:[%s1 + $0x6c] sm:$0xf]
    %v68 = vld [vmem:[%s1 + $0x70] sm:$0xf]
    %v69 = vld [vmem:[%s1 + $0x74] sm:$0xf]
    %v70 = vld [vmem:[%s1 + $0x78] sm:$0xf]
    %v71 = vld [vmem:[%s1 + $0x7c] sm:$0xf]
    %v72 = vld [vmem:[%s1 + $0x80] sm:$0xf]
    %v73 = vld [vmem:[%s1 + $0x84] sm:$0xf]
    %v74 = vld [vmem:[%s1 + $0x88] sm:$0xf]
    %v75 = vld [vmem:[%s1 + $0x8c] sm:$0xf]
    %v76 = vld [vmem:[%s1 + $0x90] sm:$0xf]
    %v77 = vld [vmem:[%s1 + $0x94] sm:$0xf]
    %v78 = vld [vmem:[%s1 + $0x98] sm:$0xf]
    %v79 = vld [vmem:[%s1 + $0x9c] sm:$0xf]
    %v80 = vld [vmem:[%s1 + $0xa0] sm:$0xf]
    %v81 = vld [vmem:[%s1 + $0xa4] sm:$0xf]
    %v82 = vld [vmem:[%s1 + $0xa8] sm:$0xf]
    %v83 = vld [vmem:[%s1 + $0xac] sm:$0xf]
    %v84 = vld [vmem:[%s1 + $0xb0] sm:$0xf]
    %v85 = vld [vmem:[%s1 + $0xb4] sm:$0xf]
    %v86 = vld [vmem:[%s1 + $0xb8] sm:$0xf]
    %v87 = vld [vmem:[%s1 + $0xbc] sm:$0xf]
    %v88 = vld [vmem:[%s1 + $0xc0] sm:$0xf]
    %v89 = vld [vmem:[%s1 + $0xc4] sm:$0xf]
    %v90 = vld [vmem:[%s1 + $0xc8] sm:$0xf]
    %v91 = vld [vmem:[%s1 + $0xcc] sm:$0xf]
    %v92 = vld [vmem:[%s1 + $0xd0] sm:$0xf]
    %v93 = vld [vmem:[%s1 + $0xd4] sm:$0xf]
    %v94 = vld [vmem:[%s1 + $0xd8] sm:$0xf]
    %v95 = vld [vmem:[%s1 + $0xdc] sm:$0xf]
    %v96 = vld [vmem:[%s1 + $0xe0] sm:$0xf]
    %v97 = vld [vmem:[%s1 + $0xe4] sm:$0xf]
    %v98 = vld [vmem:[%s1 + $0xe8] sm:$0xf]
    %v99 = vld [vmem:[%s1 + $0xec] sm:$0xf]
    %v100 = vld [vmem:[%s1 + $0xf0] sm:$0xf]
    %v101 = vld [vmem:[%s1 + $0xf4] sm:$0xf]
    %v102 = vld [vmem:[%s1 + $0xf8] sm:$0xf]
    %v103 = vld [vmem:[%s1 + $0xfc] sm:$0xf]
    %v104 = vld [vmem:[%s2] sm:$0xf]
    %v105 = vld [vmem:[%s2 + $0x4] sm:$0xf]
    %v106 = vld [vmem:[%s2 + $0x8] sm:$0xf]
    %v107 = vld [vmem:[%s2 + $0xc] sm:$0xf]
    %v108 = vld [vmem:[%s3] sm:$0x1]
    %v110 = vlaneseq
    %v111 = vshrl.u32 %v110, 7
    %v112 = vsub.s32 0, %v111
    %v113 = vrot.slane %v108, %v112
    %v179 = vunpack.c.l.b16 %v40
    %v180 = vunpack.c.l.b16 %v41
    %v181 = vunpack.c.l.b16 %v42
    %v182 = vunpack.c.l.b16 %v43
    %v183 = vunpack.c.l.b16 %v44
    %v184 = vunpack.c.l.b16 %v45
    %v185 = vunpack.c.l.b16 %v46
    %v186 = vunpack.c.l.b16 %v47
    %v187 = vunpack.c.l.b16 %v48
    %v188 = vunpack.c.l.b16 %v49
    %v189 = vunpack.c.l.b16 %v50
    %v190 = vunpack.c.l.b16 %v51
    %v191 = vunpack.c.l.b16 %v52
    %v192 = vunpack.c.l.b16 %v53
    %v193 = vunpack.c.l.b16 %v54
    %v194 = vunpack.c.l.b16 %v55
    %v195 = vunpack.c.l.b16 %v56
    %v196 = vunpack.c.l.b16 %v57
    %v197 = vunpack.c.l.b16 %v58
    %v198 = vunpack.c.l.b16 %v59
    %v199 = vunpack.c.l.b16 %v60
    %v200 = vunpack.c.l.b16 %v61
    %v201 = vunpack.c.l.b16 %v62
    %v202 = vunpack.c.l.b16 %v63
    %v203 = vunpack.c.l.b16 %v64
    %v204 = vunpack.c.l.b16 %v65
    %v205 = vunpack.c.l.b16 %v66
    %v206 = vunpack.c.l.b16 %v67
    %v207 = vunpack.c.l.b16 %v68
    %v208 = vunpack.c.l.b16 %v69
    %v209 = vunpack.c.l.b16 %v70
    %v210 = vunpack.c.l.b16 %v71
    %v211 = vunpack.c.l.b16 %v72
    %v212 = vunpack.c.l.b16 %v73
    %v213 = vunpack.c.l.b16 %v74
    %v214 = vunpack.c.l.b16 %v75
    %v215 = vunpack.c.l.b16 %v76
    %v216 = vunpack.c.l.b16 %v77
    %v217 = vunpack.c.l.b16 %v78
    %v218 = vunpack.c.l.b16 %v79
    %v219 = vunpack.c.l.b16 %v80
    %v220 = vunpack.c.l.b16 %v81
    %v221 = vunpack.c.l.b16 %v82
    %v222 = vunpack.c.l.b16 %v83
    %v223 = vunpack.c.l.b16 %v84
    %v224 = vunpack.c.l.b16 %v85
    %v225 = vunpack.c.l.b16 %v86
    %v226 = vunpack.c.l.b16 %v87
    %v227 = vunpack.c.l.b16 %v88
    %v228 = vunpack.c.l.b16 %v89
    %v229 = vunpack.c.l.b16 %v90
    %v230 = vunpack.c.l.b16 %v91
    %v231 = vunpack.c.l.b16 %v92
    %v232 = vunpack.c.l.b16 %v93
    %v233 = vunpack.c.l.b16 %v94
    %v234 = vunpack.c.l.b16 %v95
    %v235 = vunpack.c.l.b16 %v96
    %v236 = vunpack.c.l.b16 %v97
    %v237 = vunpack.c.l.b16 %v98
    %v238 = vunpack.c.l.b16 %v99
    %v239 = vunpack.c.l.b16 %v100
    %v240 = vunpack.c.l.b16 %v101
    %v241 = vunpack.c.l.b16 %v102
    %v242 = vunpack.c.l.b16 %v103
    %v243 = vpack.c.b16 %v180, %v179
    %v244 = vpack.c.b16 %v182, %v181
    %v245 = vpack.c.b16 %v184, %v183
    %v246 = vpack.c.b16 %v186, %v185
    %v247 = vpack.c.b16 %v188, %v187
    %v248 = vpack.c.b16 %v190, %v189
    %v249 = vpack.c.b16 %v192, %v191
    %v250 = vpack.c.b16 %v194, %v193
    %v251 = vpack.c.b16 %v196, %v195
    %v252 = vpack.c.b16 %v198, %v197
    %v253 = vpack.c.b16 %v200, %v199
    %v254 = vpack.c.b16 %v202, %v201
    %v255 = vpack.c.b16 %v204, %v203
    %v256 = vpack.c.b16 %v206, %v205
    %v257 = vpack.c.b16 %v208, %v207
    %v258 = vpack.c.b16 %v210, %v209
    %v259 = vpack.c.b16 %v212, %v211
    %v260 = vpack.c.b16 %v214, %v213
    %v261 = vpack.c.b16 %v216, %v215
    %v262 = vpack.c.b16 %v218, %v217
    %v263 = vpack.c.b16 %v220, %v219
    %v264 = vpack.c.b16 %v222, %v221
    %v265 = vpack.c.b16 %v224, %v223
    %v266 = vpack.c.b16 %v226, %v225
    %v267 = vpack.c.b16 %v228, %v227
    %v268 = vpack.c.b16 %v230, %v229
    %v269 = vpack.c.b16 %v232, %v231
    %v270 = vpack.c.b16 %v234, %v233
    %v271 = vpack.c.b16 %v236, %v235
    %v272 = vpack.c.b16 %v238, %v237
    %v273 = vpack.c.b16 %v240, %v239
    %v274 = vpack.c.b16 %v242, %v241
    %v279 = vunpack.c.l.b16 %v104
    %v280 = vunpack.c.l.b16 %v105
    %v281 = vunpack.c.l.b16 %v106
    %v282 = vunpack.c.l.b16 %v107
    %v283 = vpack.c.b16 %v280, %v279
    %v284 = vpack.c.b16 %v282, %v281
    %vm287 = vcmask 261120
    %v289 = vsel %vm287, %v243, 0
    %v292 = vsel %vm287, %v244, 0
    %v295 = vsel %vm287, %v245, 0
    %v298 = vsel %vm287, %v246, 0
    %v301 = vsel %vm287, %v247, 0
    %v304 = vsel %vm287, %v248, 0
    %v307 = vsel %vm287, %v249, 0
    %v310 = vsel %vm287, %v250, 0
    %v313 = vsel %vm287, %v251, 0
    %v316 = vsel %vm287, %v252, 0
    %v319 = vsel %vm287, %v253, 0
    %v322 = vsel %vm287, %v254, 0
    %v325 = vsel %vm287, %v255, 0
    %v328 = vsel %vm287, %v256, 0
    %v331 = vsel %vm287, %v257, 0
    %v334 = vsel %vm287, %v258, 0
    %v337 = vsel %vm287, %v259, 0
    %v340 = vsel %vm287, %v260, 0
    %v343 = vsel %vm287, %v261, 0
    %v346 = vsel %vm287, %v262, 0
    %v349 = vsel %vm287, %v263, 0
    %v352 = vsel %vm287, %v264, 0
    %v355 = vsel %vm287, %v265, 0
    %v358 = vsel %vm287, %v266, 0
    %v361 = vsel %vm287, %v267, 0
    %v364 = vsel %vm287, %v268, 0
    %v367 = vsel %vm287, %v269, 0
    %v370 = vsel %vm287, %v270, 0
    %v373 = vsel %vm287, %v271, 0
    %v376 = vsel %vm287, %v272, 0
    %v379 = vsel %vm287, %v273, 0
    %v382 = vsel %vm287, %v274, 0
    %384 = vmatprep.subr.bf16.mxu0 0
    %385 = vmatpush1.bf16.msra.mxu0 0
    %386 = vmatprep.subr.bf16.mxu0 0
    %387 = vmatpush1.bf16.msra.mxu0 0
    %388 = vmatprep.subr.bf16.mxu0 0
    %389 = vmatpush1.bf16.msra.mxu0 0
    %390 = vmatprep.subr.bf16.mxu0 0
    %391 = vmatpush1.bf16.msra.mxu0 0
    %392 = vmatprep.subr.bf16.mxu0 0
    %393 = vmatpush1.bf16.msra.mxu0 0
    %394 = vmatprep.subr.bf16.mxu0 0
    %395 = vmatpush1.bf16.msra.mxu0 0
    %396 = vmatprep.subr.bf16.mxu0 0
    %397 = vmatpush1.bf16.msra.mxu0 %v284
    %398 = vmatprep.subr.bf16.mxu0 0
    %399 = vmatpush1.bf16.msra.mxu0 %v283
    %400 = vmatprep.subr.bf16.mxu0 0
    %401 = vmatpush2.bf16.msra.mxu0 0
    %402 = vmatprep.subr.bf16.mxu0 0
    %403 = vmatpush2.bf16.msra.mxu0 0
    %404 = vmatprep.subr.bf16.mxu0 0
    %405 = vmatpush2.bf16.msra.mxu0 0
    %406 = vmatprep.subr.bf16.mxu0 0
    %407 = vmatpush2.bf16.msra.mxu0 0
    %408 = vmatprep.subr.bf16.mxu0 0
    %409 = vmatpush2.bf16.msra.mxu0 0
    %410 = vmatprep.subr.bf16.mxu0 0
    %411 = vmatpush2.bf16.msra.mxu0 0
    %412 = vmatprep.subr.bf16.mxu0 0
    %413 = vmatpush2.bf16.msra.mxu0 0
    %414 = vmatprep.subr.bf16.mxu0 0
    %415 = vmatpush2.bf16.msra.mxu0 0
    %416 = vmatprep.mubr.bf16.mxu0 0
    %417 = vmatmul.mubr.bf16.gmra.mxu0 %v289
    %v418 = vpop.f32.mrf.mxu0
    %v419 = vadd.f32 %v113, %v418
    %v420 = vpop.f32.mrf.mxu0
    %v421 = vpop.f32.mrf.mxu0
    %v422 = vadd.f32 %v113, %v421
    %v423 = vpop.f32.mrf.mxu0
    %424 = vmatprep.mubr.bf16.mxu0 0
    %425 = vmatmul.mubr.bf16.gmra.mxu0 %v292
    %v426 = vpop.f32.mrf.mxu0
    %v427 = vadd.f32 %v113, %v426
    %v428 = vpop.f32.mrf.mxu0
    %v429 = vpop.f32.mrf.mxu0
    %v430 = vadd.f32 %v113, %v429
    %v431 = vpop.f32.mrf.mxu0
    %432 = vmatprep.mubr.bf16.mxu0 0
    %433 = vmatmul.mubr.bf16.gmra.mxu0 %v295
    %v434 = vpop.f32.mrf.mxu0
    %v435 = vadd.f32 %v113, %v434
    %v436 = vpop.f32.mrf.mxu0
    %v437 = vpop.f32.mrf.mxu0
    %v438 = vadd.f32 %v113, %v437
    %v439 = vpop.f32.mrf.mxu0
    %440 = vmatprep.mubr.bf16.mxu0 0
    %441 = vmatmul.mubr.bf16.gmra.mxu0 %v298
    %v442 = vpop.f32.mrf.mxu0
    %v443 = vadd.f32 %v113, %v442
    %v444 = vpop.f32.mrf.mxu0
    %v445 = vpop.f32.mrf.mxu0
    %v446 = vadd.f32 %v113, %v445
    %v447 = vpop.f32.mrf.mxu0
    %448 = vmatprep.mubr.bf16.mxu0 0
    %449 = vmatmul.mubr.bf16.gmra.mxu0 %v301
    %v450 = vpop.f32.mrf.mxu0
    %v451 = vadd.f32 %v113, %v450
    %v452 = vpop.f32.mrf.mxu0
    %v453 = vpop.f32.mrf.mxu0
    %v454 = vadd.f32 %v113, %v453
    %v455 = vpop.f32.mrf.mxu0
    %456 = vmatprep.mubr.bf16.mxu0 0
    %457 = vmatmul.mubr.bf16.gmra.mxu0 %v304
    %v458 = vpop.f32.mrf.mxu0
    %v459 = vadd.f32 %v113, %v458
    %v460 = vpop.f32.mrf.mxu0
    %v461 = vpop.f32.mrf.mxu0
    %v462 = vadd.f32 %v113, %v461
    %v463 = vpop.f32.mrf.mxu0
    %464 = vmatprep.mubr.bf16.mxu0 0
    %465 = vmatmul.mubr.bf16.gmra.mxu0 %v307
    %v466 = vpop.f32.mrf.mxu0
    %v467 = vadd.f32 %v113, %v466
    %v468 = vpop.f32.mrf.mxu0
    %v469 = vpop.f32.mrf.mxu0
    %v470 = vadd.f32 %v113, %v469
    %v471 = vpop.f32.mrf.mxu0
    %472 = vmatprep.mubr.bf16.mxu0 0
    %473 = vmatmul.mubr.bf16.gmra.mxu0 %v310
    %v474 = vpop.f32.mrf.mxu0
    %v475 = vadd.f32 %v113, %v474
    %v476 = vpop.f32.mrf.mxu0
    %v477 = vpop.f32.mrf.mxu0
    %v478 = vadd.f32 %v113, %v477
    %v479 = vpop.f32.mrf.mxu0
    %480 = vmatprep.mubr.bf16.mxu0 0
    %481 = vmatmul.mubr.bf16.gmra.mxu0 %v313
    %v482 = vpop.f32.mrf.mxu0
    %v483 = vadd.f32 %v113, %v482
    %v484 = vpop.f32.mrf.mxu0
    %v485 = vpop.f32.mrf.mxu0
    %v486 = vadd.f32 %v113, %v485
    %v487 = vpop.f32.mrf.mxu0
    %488 = vmatprep.mubr.bf16.mxu0 0
    %489 = vmatmul.mubr.bf16.gmra.mxu0 %v316
    %v490 = vpop.f32.mrf.mxu0
    %v491 = vadd.f32 %v113, %v490
    %v492 = vpop.f32.mrf.mxu0
    %v493 = vpop.f32.mrf.mxu0
    %v494 = vadd.f32 %v113, %v493
    %v495 = vpop.f32.mrf.mxu0
    %496 = vmatprep.mubr.bf16.mxu0 0
    %497 = vmatmul.mubr.bf16.gmra.mxu0 %v319
    %v498 = vpop.f32.mrf.mxu0
    %v499 = vadd.f32 %v113, %v498
    %v500 = vpop.f32.mrf.mxu0
    %v501 = vpop.f32.mrf.mxu0
    %v502 = vadd.f32 %v113, %v501
    %v503 = vpop.f32.mrf.mxu0
    %504 = vmatprep.mubr.bf16.mxu0 0
    %505 = vmatmul.mubr.bf16.gmra.mxu0 %v322
    %v506 = vpop.f32.mrf.mxu0
    %v507 = vadd.f32 %v113, %v506
    %v508 = vpop.f32.mrf.mxu0
    %v509 = vpop.f32.mrf.mxu0
    %v510 = vadd.f32 %v113, %v509
    %v511 = vpop.f32.mrf.mxu0
    %512 = vmatprep.mubr.bf16.mxu0 0
    %513 = vmatmul.mubr.bf16.gmra.mxu0 %v325
    %v514 = vpop.f32.mrf.mxu0
    %v515 = vadd.f32 %v113, %v514
    %v516 = vpop.f32.mrf.mxu0
    %v517 = vpop.f32.mrf.mxu0
    %v518 = vadd.f32 %v113, %v517
    %v519 = vpop.f32.mrf.mxu0
    %520 = vmatprep.mubr.bf16.mxu0 0
    %521 = vmatmul.mubr.bf16.gmra.mxu0 %v328
    %v522 = vpop.f32.mrf.mxu0
    %v523 = vadd.f32 %v113, %v522
    %v524 = vpop.f32.mrf.mxu0
    %v525 = vpop.f32.mrf.mxu0
    %v526 = vadd.f32 %v113, %v525
    %v527 = vpop.f32.mrf.mxu0
    %528 = vmatprep.mubr.bf16.mxu0 0
    %529 = vmatmul.mubr.bf16.gmra.mxu0 %v331
    %v530 = vpop.f32.mrf.mxu0
    %v531 = vadd.f32 %v113, %v530
    %v532 = vpop.f32.mrf.mxu0
    %v533 = vpop.f32.mrf.mxu0
    %v534 = vadd.f32 %v113, %v533
    %v535 = vpop.f32.mrf.mxu0
    %536 = vmatprep.mubr.bf16.mxu0 0
    %537 = vmatmul.mubr.bf16.gmra.mxu0 %v334
    %v538 = vpop.f32.mrf.mxu0
    %v539 = vadd.f32 %v113, %v538
    %v540 = vpop.f32.mrf.mxu0
    %v541 = vpop.f32.mrf.mxu0
    %v542 = vadd.f32 %v113, %v541
    %v543 = vpop.f32.mrf.mxu0
    %544 = vmatprep.mubr.bf16.mxu0 0
    %545 = vmatmul.mubr.bf16.gmra.mxu0 %v337
    %v546 = vpop.f32.mrf.mxu0
    %v547 = vadd.f32 %v113, %v546
    %v548 = vpop.f32.mrf.mxu0
    %v549 = vpop.f32.mrf.mxu0
    %v550 = vadd.f32 %v113, %v549
    %v551 = vpop.f32.mrf.mxu0
    %552 = vmatprep.mubr.bf16.mxu0 0
    %553 = vmatmul.mubr.bf16.gmra.mxu0 %v340
    %v554 = vpop.f32.mrf.mxu0
    %v555 = vadd.f32 %v113, %v554
    %v556 = vpop.f32.mrf.mxu0
    %v557 = vpop.f32.mrf.mxu0
    %v558 = vadd.f32 %v113, %v557
    %v559 = vpop.f32.mrf.mxu0
    %560 = vmatprep.mubr.bf16.mxu0 0
    %561 = vmatmul.mubr.bf16.gmra.mxu0 %v343
    %v562 = vpop.f32.mrf.mxu0
    %v563 = vadd.f32 %v113, %v562
    %v564 = vpop.f32.mrf.mxu0
    %v565 = vpop.f32.mrf.mxu0
    %v566 = vadd.f32 %v113, %v565
    %v567 = vpop.f32.mrf.mxu0
    %568 = vmatprep.mubr.bf16.mxu0 0
    %569 = vmatmul.mubr.bf16.gmra.mxu0 %v346
    %v570 = vpop.f32.mrf.mxu0
    %v571 = vadd.f32 %v113, %v570
    %v572 = vpop.f32.mrf.mxu0
    %v573 = vpop.f32.mrf.mxu0
    %v574 = vadd.f32 %v113, %v573
    %v575 = vpop.f32.mrf.mxu0
    %576 = vmatprep.mubr.bf16.mxu0 0
    %577 = vmatmul.mubr.bf16.gmra.mxu0 %v349
    %v578 = vpop.f32.mrf.mxu0
    %v579 = vadd.f32 %v113, %v578
    %v580 = vpop.f32.mrf.mxu0
    %v581 = vpop.f32.mrf.mxu0
    %v582 = vadd.f32 %v113, %v581
    %v583 = vpop.f32.mrf.mxu0
    %584 = vmatprep.mubr.bf16.mxu0 0
    %585 = vmatmul.mubr.bf16.gmra.mxu0 %v352
    %v586 = vpop.f32.mrf.mxu0
    %v587 = vadd.f32 %v113, %v586
    %v588 = vpop.f32.mrf.mxu0
    %v589 = vpop.f32.mrf.mxu0
    %v590 = vadd.f32 %v113, %v589
    %v591 = vpop.f32.mrf.mxu0
    %592 = vmatprep.mubr.bf16.mxu0 0
    %593 = vmatmul.mubr.bf16.gmra.mxu0 %v355
    %v594 = vpop.f32.mrf.mxu0
    %v595 = vadd.f32 %v113, %v594
    %v596 = vpop.f32.mrf.mxu0
    %v597 = vpop.f32.mrf.mxu0
    %v598 = vadd.f32 %v113, %v597
    %v599 = vpop.f32.mrf.mxu0
    %600 = vmatprep.mubr.bf16.mxu0 0
    %601 = vmatmul.mubr.bf16.gmra.mxu0 %v358
    %v602 = vpop.f32.mrf.mxu0
    %v603 = vadd.f32 %v113, %v602
    %v604 = vpop.f32.mrf.mxu0
    %v605 = vpop.f32.mrf.mxu0
    %v606 = vadd.f32 %v113, %v605
    %v607 = vpop.f32.mrf.mxu0
    %608 = vmatprep.mubr.bf16.mxu0 0
    %609 = vmatmul.mubr.bf16.gmra.mxu0 %v361
    %v610 = vpop.f32.mrf.mxu0
    %v611 = vadd.f32 %v113, %v610
    %v612 = vpop.f32.mrf.mxu0
    %v613 = vpop.f32.mrf.mxu0
    %v614 = vadd.f32 %v113, %v613
    %v615 = vpop.f32.mrf.mxu0
    %616 = vmatprep.mubr.bf16.mxu0 0
    %617 = vmatmul.mubr.bf16.gmra.mxu0 %v364
    %v618 = vpop.f32.mrf.mxu0
    %v619 = vadd.f32 %v113, %v618
    %v620 = vpop.f32.mrf.mxu0
    %v621 = vpop.f32.mrf.mxu0
    %v622 = vadd.f32 %v113, %v621
    %v623 = vpop.f32.mrf.mxu0
    %624 = vmatprep.mubr.bf16.mxu0 0
    %625 = vmatmul.mubr.bf16.gmra.mxu0 %v367
    %v626 = vpop.f32.mrf.mxu0
    %v627 = vadd.f32 %v113, %v626
    %v628 = vpop.f32.mrf.mxu0
    %v629 = vpop.f32.mrf.mxu0
    %v630 = vadd.f32 %v113, %v629
    %v631 = vpop.f32.mrf.mxu0
    %632 = vmatprep.mubr.bf16.mxu0 0
    %633 = vmatmul.mubr.bf16.gmra.mxu0 %v370
    %v634 = vpop.f32.mrf.mxu0
    %v635 = vadd.f32 %v113, %v634
    %v636 = vpop.f32.mrf.mxu0
    %v637 = vpop.f32.mrf.mxu0
    %v638 = vadd.f32 %v113, %v637
    %v639 = vpop.f32.mrf.mxu0
    %640 = vmatprep.mubr.bf16.mxu0 0
    %641 = vmatmul.mubr.bf16.gmra.mxu0 %v373
    %v642 = vpop.f32.mrf.mxu0
    %v643 = vadd.f32 %v113, %v642
    %v644 = vpop.f32.mrf.mxu0
    %v645 = vpop.f32.mrf.mxu0
    %v646 = vadd.f32 %v113, %v645
    %v647 = vpop.f32.mrf.mxu0
    %648 = vmatprep.mubr.bf16.mxu0 0
    %649 = vmatmul.mubr.bf16.gmra.mxu0 %v376
    %v650 = vpop.f32.mrf.mxu0
    %v651 = vadd.f32 %v113, %v650
    %v652 = vpop.f32.mrf.mxu0
    %v653 = vpop.f32.mrf.mxu0
    %v654 = vadd.f32 %v113, %v653
    %v655 = vpop.f32.mrf.mxu0
    %656 = vmatprep.mubr.bf16.mxu0 0
    %657 = vmatmul.mubr.bf16.gmra.mxu0 %v379
    %v658 = vpop.f32.mrf.mxu0
    %v659 = vadd.f32 %v113, %v658
    %v660 = vpop.f32.mrf.mxu0
    %v661 = vpop.f32.mrf.mxu0
    %v662 = vadd.f32 %v113, %v661
    %v663 = vpop.f32.mrf.mxu0
    %664 = vmatprep.mubr.bf16.mxu0 0
    %665 = vmatmul.mubr.bf16.gmra.mxu0 %v382
    %v666 = vpop.f32.mrf.mxu0
    %v667 = vadd.f32 %v113, %v666
    %v668 = vpop.f32.mrf.mxu0
    %v669 = vpop.f32.mrf.mxu0
    %v670 = vadd.f32 %v113, %v669
    %v671 = vpop.f32.mrf.mxu0
    %672 = vdwg.mxu0
    %v673 = vmax.f32 %v419, 0.0
    %v674 = vmax.f32 %v422, 0.0
    %v675 = vmax.f32 %v427, 0.0
    %v676 = vmax.f32 %v430, 0.0
    %v677 = vmax.f32 %v435, 0.0
    %v678 = vmax.f32 %v438, 0.0
    %v679 = vmax.f32 %v443, 0.0
    %v680 = vmax.f32 %v446, 0.0
    %v681 = vmax.f32 %v451, 0.0
    %v682 = vmax.f32 %v454, 0.0
    %v683 = vmax.f32 %v459, 0.0
    %v684 = vmax.f32 %v462, 0.0
    %v685 = vmax.f32 %v467, 0.0
    %v686 = vmax.f32 %v470, 0.0
    %v687 = vmax.f32 %v475, 0.0
    %v688 = vmax.f32 %v478, 0.0
    %v689 = vmax.f32 %v483, 0.0
    %v690 = vmax.f32 %v486, 0.0
    %v691 = vmax.f32 %v491, 0.0
    %v692 = vmax.f32 %v494, 0.0
    %v693 = vmax.f32 %v499, 0.0
    %v694 = vmax.f32 %v502, 0.0
    %v695 = vmax.f32 %v507, 0.0
    %v696 = vmax.f32 %v510, 0.0
    %v697 = vmax.f32 %v515, 0.0
    %v698 = vmax.f32 %v518, 0.0
    %v699 = vmax.f32 %v523, 0.0
    %v700 = vmax.f32 %v526, 0.0
    %v701 = vmax.f32 %v531, 0.0
    %v702 = vmax.f32 %v534, 0.0
    %v703 = vmax.f32 %v539, 0.0
    %v704 = vmax.f32 %v542, 0.0
    %v705 = vmax.f32 %v547, 0.0
    %v706 = vmax.f32 %v550, 0.0
    %v707 = vmax.f32 %v555, 0.0
    %v708 = vmax.f32 %v558, 0.0
    %v709 = vmax.f32 %v563, 0.0
    %v710 = vmax.f32 %v566, 0.0
    %v711 = vmax.f32 %v571, 0.0
    %v712 = vmax.f32 %v574, 0.0
    %v713 = vmax.f32 %v579, 0.0
    %v714 = vmax.f32 %v582, 0.0
    %v715 = vmax.f32 %v587, 0.0
    %v716 = vmax.f32 %v590, 0.0
    %v717 = vmax.f32 %v595, 0.0
    %v718 = vmax.f32 %v598, 0.0
    %v719 = vmax.f32 %v603, 0.0
    %v720 = vmax.f32 %v606, 0.0
    %v721 = vmax.f32 %v611, 0.0
    %v722 = vmax.f32 %v614, 0.0
    %v723 = vmax.f32 %v619, 0.0
    %v724 = vmax.f32 %v622, 0.0
    %v725 = vmax.f32 %v627, 0.0
    %v726 = vmax.f32 %v630, 0.0
    %v727 = vmax.f32 %v635, 0.0
    %v728 = vmax.f32 %v638, 0.0
    %v729 = vmax.f32 %v643, 0.0
    %v730 = vmax.f32 %v646, 0.0
    %v731 = vmax.f32 %v651, 0.0
    %v732 = vmax.f32 %v654, 0.0
    %v733 = vmax.f32 %v659, 0.0
    %v734 = vmax.f32 %v662, 0.0
    %v735 = vmax.f32 %v667, 0.0
    %v736 = vmax.f32 %v670, 0.0
    %v737 = vpack.c.bf16 %v674, %v673
    %v738 = vpack.c.bf16 %v676, %v675
    %v739 = vpack.c.bf16 %v678, %v677
    %v740 = vpack.c.bf16 %v680, %v679
    %v741 = vpack.c.bf16 %v682, %v681
    %v742 = vpack.c.bf16 %v684, %v683
    %v743 = vpack.c.bf16 %v686, %v685
    %v744 = vpack.c.bf16 %v688, %v687
    %v745 = vpack.c.bf16 %v690, %v689
    %v746 = vpack.c.bf16 %v692, %v691
    %v747 = vpack.c.bf16 %v694, %v693
    %v748 = vpack.c.bf16 %v696, %v695
    %v749 = vpack.c.bf16 %v698, %v697
    %v750 = vpack.c.bf16 %v700, %v699
    %v751 = vpack.c.bf16 %v702, %v701
    %v752 = vpack.c.bf16 %v704, %v703
    %v753 = vpack.c.bf16 %v706, %v705
    %v754 = vpack.c.bf16 %v708, %v707
    %v755 = vpack.c.bf16 %v710, %v709
    %v756 = vpack.c.bf16 %v712, %v711
    %v757 = vpack.c.bf16 %v714, %v713
    %v758 = vpack.c.bf16 %v716, %v715
    %v759 = vpack.c.bf16 %v718, %v717
    %v760 = vpack.c.bf16 %v720, %v719
    %v761 = vpack.c.bf16 %v722, %v721
    %v762 = vpack.c.bf16 %v724, %v723
    %v763 = vpack.c.bf16 %v726, %v725
    %v764 = vpack.c.bf16 %v728, %v727
    %v765 = vpack.c.bf16 %v730, %v729
    %v766 = vpack.c.bf16 %v732, %v731
    %v767 = vpack.c.bf16 %v734, %v733
    %v768 = vpack.c.bf16 %v736, %v735
    %v769 = vld [vmem:[%s4] sm:$0xf]
    %v770 = vld [vmem:[%s4 + $0x4] sm:$0xf]
    %v771 = vld [vmem:[%s4 + $0x8] sm:$0xf]
    %v772 = vld [vmem:[%s4 + $0xc] sm:$0xf]
    %v773 = vld [vmem:[%s4 + $0x10] sm:$0xf]
    %v774 = vld [vmem:[%s4 + $0x14] sm:$0xf]
    %v775 = vld [vmem:[%s4 + $0x18] sm:$0xf]
    %v776 = vld [vmem:[%s4 + $0x1c] sm:$0xf]
    %v777 = vld [vmem:[%s4 + $0x20] sm:$0xf]
    %v778 = vld [vmem:[%s4 + $0x24] sm:$0xf]
    %v779 = vld [vmem:[%s4 + $0x28] sm:$0xf]
    %v780 = vld [vmem:[%s4 + $0x2c] sm:$0xf]
    %v781 = vld [vmem:[%s4 + $0x30] sm:$0xf]
    %v782 = vld [vmem:[%s4 + $0x34] sm:$0xf]
    %v783 = vld [vmem:[%s4 + $0x38] sm:$0xf]
    %v784 = vld [vmem:[%s4 + $0x3c] sm:$0xf]
    %v785 = vld [vmem:[%s5] sm:$0x1]
    %v787 = vlaneseq
    %v788 = vshrl.u32 %v787, 7
    %v789 = vsub.s32 0, %v788
    %v790 = vrot.slane %v785, %v789
    %v808 = vunpack.c.l.b16 %v769
    %v809 = vunpack.c.l.b16 %v770
    %v810 = vunpack.c.l.b16 %v771
    %v811 = vunpack.c.l.b16 %v772
    %v812 = vunpack.c.l.b16 %v773
    %v813 = vunpack.c.l.b16 %v774
    %v814 = vunpack.c.l.b16 %v775
    %v815 = vunpack.c.l.b16 %v776
    %v816 = vunpack.c.l.b16 %v777
    %v817 = vunpack.c.l.b16 %v778
    %v818 = vunpack.c.l.b16 %v779
    %v819 = vunpack.c.l.b16 %v780
    %v820 = vunpack.c.l.b16 %v781
    %v821 = vunpack.c.l.b16 %v782
    %v822 = vunpack.c.l.b16 %v783
    %v823 = vunpack.c.l.b16 %v784
    %v824 = vpack.c.b16 %v809, %v808
    %v825 = vpack.c.b16 %v811, %v810
    %v826 = vpack.c.b16 %v813, %v812
    %v827 = vpack.c.b16 %v815, %v814
    %v828 = vpack.c.b16 %v817, %v816
    %v829 = vpack.c.b16 %v819, %v818
    %v830 = vpack.c.b16 %v821, %v820
    %v831 = vpack.c.b16 %v823, %v822
    %840 = vmatprep.subr.bf16.mxu0 0
    %841 = vmatpush1.bf16.msra.mxu0 %v831
    %842 = vmatprep.subr.bf16.mxu0 0
    %843 = vmatpush1.bf16.msra.mxu0 %v830
    %844 = vmatprep.subr.bf16.mxu0 0
    %845 = vmatpush1.bf16.msra.mxu0 %v829
    %846 = vmatprep.subr.bf16.mxu0 0
    %847 = vmatpush1.bf16.msra.mxu0 %v828
    %848 = vmatprep.subr.bf16.mxu0 0
    %849 = vmatpush1.bf16.msra.mxu0 %v827
    %850 = vmatprep.subr.bf16.mxu0 0
    %851 = vmatpush1.bf16.msra.mxu0 %v826
    %852 = vmatprep.subr.bf16.mxu0 0
    %853 = vmatpush1.bf16.msra.mxu0 %v825
    %854 = vmatprep.subr.bf16.mxu0 0
    %855 = vmatpush1.bf16.msra.mxu0 %v824
    %856 = vmatprep.subr.bf16.mxu0 0
    %857 = vmatpush2.bf16.msra.mxu0 0
    %858 = vmatprep.subr.bf16.mxu0 0
    %859 = vmatpush2.bf16.msra.mxu0 0
    %860 = vmatprep.subr.bf16.mxu0 0
    %861 = vmatpush2.bf16.msra.mxu0 0
    %862 = vmatprep.subr.bf16.mxu0 0
    %863 = vmatpush2.bf16.msra.mxu0 0
    %864 = vmatprep.subr.bf16.mxu0 0
    %865 = vmatpush2.bf16.msra.mxu0 0
    %866 = vmatprep.subr.bf16.mxu0 0
    %867 = vmatpush2.bf16.msra.mxu0 0
    %868 = vmatprep.subr.bf16.mxu0 0
    %869 = vmatpush2.bf16.msra.mxu0 0
    %870 = vmatprep.subr.bf16.mxu0 0
    %871 = vmatpush2.bf16.msra.mxu0 0
    %872 = vmatprep.mubr.bf16.mxu0 0
    %873 = vmatmul.mubr.bf16.gmra.mxu0 %v737
    %v874 = vpop.f32.mrf.mxu0
    %v875 = vadd.f32 %v790, %v874
    %v876 = vpop.f32.mrf.mxu0
    %v877 = vpop.f32.mrf.mxu0
    %v878 = vadd.f32 %v790, %v877
    %v879 = vpop.f32.mrf.mxu0
    %880 = vmatprep.mubr.bf16.mxu0 0
    %881 = vmatmul.mubr.bf16.gmra.mxu0 %v738
    %v882 = vpop.f32.mrf.mxu0
    %v883 = vadd.f32 %v790, %v882
    %v884 = vpop.f32.mrf.mxu0
    %v885 = vpop.f32.mrf.mxu0
    %v886 = vadd.f32 %v790, %v885
    %v887 = vpop.f32.mrf.mxu0
    %888 = vmatprep.mubr.bf16.mxu0 0
    %889 = vmatmul.mubr.bf16.gmra.mxu0 %v739
    %v890 = vpop.f32.mrf.mxu0
    %v891 = vadd.f32 %v790, %v890
    %v892 = vpop.f32.mrf.mxu0
    %v893 = vpop.f32.mrf.mxu0
    %v894 = vadd.f32 %v790, %v893
    %v895 = vpop.f32.mrf.mxu0
    %896 = vmatprep.mubr.bf16.mxu0 0
    %897 = vmatmul.mubr.bf16.gmra.mxu0 %v740
    %v898 = vpop.f32.mrf.mxu0
    %v899 = vadd.f32 %v790, %v898
    %v900 = vpop.f32.mrf.mxu0
    %v901 = vpop.f32.mrf.mxu0
    %v902 = vadd.f32 %v790, %v901
    %v903 = vpop.f32.mrf.mxu0
    %904 = vmatprep.mubr.bf16.mxu0 0
    %905 = vmatmul.mubr.bf16.gmra.mxu0 %v741
    %v906 = vpop.f32.mrf.mxu0
    %v907 = vadd.f32 %v790, %v906
    %v908 = vpop.f32.mrf.mxu0
    %v909 = vpop.f32.mrf.mxu0
    %v910 = vadd.f32 %v790, %v909
    %v911 = vpop.f32.mrf.mxu0
    %912 = vmatprep.mubr.bf16.mxu0 0
    %913 = vmatmul.mubr.bf16.gmra.mxu0 %v742
    %v914 = vpop.f32.mrf.mxu0
    %v915 = vadd.f32 %v790, %v914
    %v916 = vpop.f32.mrf.mxu0
    %v917 = vpop.f32.mrf.mxu0
    %v918 = vadd.f32 %v790, %v917
    %v919 = vpop.f32.mrf.mxu0
    %920 = vmatprep.mubr.bf16.mxu0 0
    %921 = vmatmul.mubr.bf16.gmra.mxu0 %v743
    %v922 = vpop.f32.mrf.mxu0
    %v923 = vadd.f32 %v790, %v922
    %v924 = vpop.f32.mrf.mxu0
    %v925 = vpop.f32.mrf.mxu0
    %v926 = vadd.f32 %v790, %v925
    %v927 = vpop.f32.mrf.mxu0
    %928 = vmatprep.mubr.bf16.mxu0 0
    %929 = vmatmul.mubr.bf16.gmra.mxu0 %v744
    %v930 = vpop.f32.mrf.mxu0
    %v931 = vadd.f32 %v790, %v930
    %v932 = vpop.f32.mrf.mxu0
    %v933 = vpop.f32.mrf.mxu0
    %v934 = vadd.f32 %v790, %v933
    %v935 = vpop.f32.mrf.mxu0
    %936 = vmatprep.mubr.bf16.mxu0 0
    %937 = vmatmul.mubr.bf16.gmra.mxu0 %v745
    %v938 = vpop.f32.mrf.mxu0
    %v939 = vadd.f32 %v790, %v938
    %v940 = vpop.f32.mrf.mxu0
    %v941 = vpop.f32.mrf.mxu0
    %v942 = vadd.f32 %v790, %v941
    %v943 = vpop.f32.mrf.mxu0
    %944 = vmatprep.mubr.bf16.mxu0 0
    %945 = vmatmul.mubr.bf16.gmra.mxu0 %v746
    %v946 = vpop.f32.mrf.mxu0
    %v947 = vadd.f32 %v790, %v946
    %v948 = vpop.f32.mrf.mxu0
    %v949 = vpop.f32.mrf.mxu0
    %v950 = vadd.f32 %v790, %v949
    %v951 = vpop.f32.mrf.mxu0
    %952 = vmatprep.mubr.bf16.mxu0 0
    %953 = vmatmul.mubr.bf16.gmra.mxu0 %v747
    %v954 = vpop.f32.mrf.mxu0
    %v955 = vadd.f32 %v790, %v954
    %v956 = vpop.f32.mrf.mxu0
    %v957 = vpop.f32.mrf.mxu0
    %v958 = vadd.f32 %v790, %v957
    %v959 = vpop.f32.mrf.mxu0
    %960 = vmatprep.mubr.bf16.mxu0 0
    %961 = vmatmul.mubr.bf16.gmra.mxu0 %v748
    %v962 = vpop.f32.mrf.mxu0
    %v963 = vadd.f32 %v790, %v962
    %v964 = vpop.f32.mrf.mxu0
    %v965 = vpop.f32.mrf.mxu0
    %v966 = vadd.f32 %v790, %v965
    %v967 = vpop.f32.mrf.mxu0
    %968 = vmatprep.mubr.bf16.mxu0 0
    %969 = vmatmul.mubr.bf16.gmra.mxu0 %v749
    %v970 = vpop.f32.mrf.mxu0
    %v971 = vadd.f32 %v790, %v970
    %v972 = vpop.f32.mrf.mxu0
    %v973 = vpop.f32.mrf.mxu0
    %v974 = vadd.f32 %v790, %v973
    %v975 = vpop.f32.mrf.mxu0
    %976 = vmatprep.mubr.bf16.mxu0 0
    %977 = vmatmul.mubr.bf16.gmra.mxu0 %v750
    %v978 = vpop.f32.mrf.mxu0
    %v979 = vadd.f32 %v790, %v978
    %v980 = vpop.f32.mrf.mxu0
    %v981 = vpop.f32.mrf.mxu0
    %v982 = vadd.f32 %v790, %v981
    %v983 = vpop.f32.mrf.mxu0
    %984 = vmatprep.mubr.bf16.mxu0 0
    %985 = vmatmul.mubr.bf16.gmra.mxu0 %v751
    %v986 = vpop.f32.mrf.mxu0
    %v987 = vadd.f32 %v790, %v986
    %v988 = vpop.f32.mrf.mxu0
    %v989 = vpop.f32.mrf.mxu0
    %v990 = vadd.f32 %v790, %v989
    %v991 = vpop.f32.mrf.mxu0
    %992 = vmatprep.mubr.bf16.mxu0 0
    %993 = vmatmul.mubr.bf16.gmra.mxu0 %v752
    %v994 = vpop.f32.mrf.mxu0
    %v995 = vadd.f32 %v790, %v994
    %v996 = vpop.f32.mrf.mxu0
    %v997 = vpop.f32.mrf.mxu0
    %v998 = vadd.f32 %v790, %v997
    %v999 = vpop.f32.mrf.mxu0
    %1000 = vmatprep.mubr.bf16.mxu0 0
    %1001 = vmatmul.mubr.bf16.gmra.mxu0 %v753
    %v1002 = vpop.f32.mrf.mxu0
    %v1003 = vadd.f32 %v790, %v1002
    %v1004 = vpop.f32.mrf.mxu0
    %v1005 = vpop.f32.mrf.mxu0
    %v1006 = vadd.f32 %v790, %v1005
    %v1007 = vpop.f32.mrf.mxu0
    %1008 = vmatprep.mubr.bf16.mxu0 0
    %1009 = vmatmul.mubr.bf16.gmra.mxu0 %v754
    %v1010 = vpop.f32.mrf.mxu0
    %v1011 = vadd.f32 %v790, %v1010
    %v1012 = vpop.f32.mrf.mxu0
    %v1013 = vpop.f32.mrf.mxu0
    %v1014 = vadd.f32 %v790, %v1013
    %v1015 = vpop.f32.mrf.mxu0
    %1016 = vmatprep.mubr.bf16.mxu0 0
    %1017 = vmatmul.mubr.bf16.gmra.mxu0 %v755
    %v1018 = vpop.f32.mrf.mxu0
    %v1019 = vadd.f32 %v790, %v1018
    %v1020 = vpop.f32.mrf.mxu0
    %v1021 = vpop.f32.mrf.mxu0
    %v1022 = vadd.f32 %v790, %v1021
    %v1023 = vpop.f32.mrf.mxu0
    %1024 = vmatprep.mubr.bf16.mxu0 0
    %1025 = vmatmul.mubr.bf16.gmra.mxu0 %v756
    %v1026 = vpop.f32.mrf.mxu0
    %v1027 = vadd.f32 %v790, %v1026
    %v1028 = vpop.f32.mrf.mxu0
    %v1029 = vpop.f32.mrf.mxu0
    %v1030 = vadd.f32 %v790, %v1029
    %v1031 = vpop.f32.mrf.mxu0
    %1032 = vmatprep.mubr.bf16.mxu0 0
    %1033 = vmatmul.mubr.bf16.gmra.mxu0 %v757
    %v1034 = vpop.f32.mrf.mxu0
    %v1035 = vadd.f32 %v790, %v1034
    %v1036 = vpop.f32.mrf.mxu0
    %v1037 = vpop.f32.mrf.mxu0
    %v1038 = vadd.f32 %v790, %v1037
    %v1039 = vpop.f32.mrf.mxu0
    %1040 = vmatprep.mubr.bf16.mxu0 0
    %1041 = vmatmul.mubr.bf16.gmra.mxu0 %v758
    %v1042 = vpop.f32.mrf.mxu0
    %v1043 = vadd.f32 %v790, %v1042
    %v1044 = vpop.f32.mrf.mxu0
    %v1045 = vpop.f32.mrf.mxu0
    %v1046 = vadd.f32 %v790, %v1045
    %v1047 = vpop.f32.mrf.mxu0
    %1048 = vmatprep.mubr.bf16.mxu0 0
    %1049 = vmatmul.mubr.bf16.gmra.mxu0 %v759
    %v1050 = vpop.f32.mrf.mxu0
    %v1051 = vadd.f32 %v790, %v1050
    %v1052 = vpop.f32.mrf.mxu0
    %v1053 = vpop.f32.mrf.mxu0
    %v1054 = vadd.f32 %v790, %v1053
    %v1055 = vpop.f32.mrf.mxu0
    %1056 = vmatprep.mubr.bf16.mxu0 0
    %1057 = vmatmul.mubr.bf16.gmra.mxu0 %v760
    %v1058 = vpop.f32.mrf.mxu0
    %v1059 = vadd.f32 %v790, %v1058
    %v1060 = vpop.f32.mrf.mxu0
    %v1061 = vpop.f32.mrf.mxu0
    %v1062 = vadd.f32 %v790, %v1061
    %v1063 = vpop.f32.mrf.mxu0
    %1064 = vmatprep.mubr.bf16.mxu0 0
    %1065 = vmatmul.mubr.bf16.gmra.mxu0 %v761
    %v1066 = vpop.f32.mrf.mxu0
    %v1067 = vadd.f32 %v790, %v1066
    %v1068 = vpop.f32.mrf.mxu0
    %v1069 = vpop.f32.mrf.mxu0
    %v1070 = vadd.f32 %v790, %v1069
    %v1071 = vpop.f32.mrf.mxu0
    %1072 = vmatprep.mubr.bf16.mxu0 0
    %1073 = vmatmul.mubr.bf16.gmra.mxu0 %v762
    %v1074 = vpop.f32.mrf.mxu0
    %v1075 = vadd.f32 %v790, %v1074
    %v1076 = vpop.f32.mrf.mxu0
    %v1077 = vpop.f32.mrf.mxu0
    %v1078 = vadd.f32 %v790, %v1077
    %v1079 = vpop.f32.mrf.mxu0
    %1080 = vmatprep.mubr.bf16.mxu0 0
    %1081 = vmatmul.mubr.bf16.gmra.mxu0 %v763
    %v1082 = vpop.f32.mrf.mxu0
    %v1083 = vadd.f32 %v790, %v1082
    %v1084 = vpop.f32.mrf.mxu0
    %v1085 = vpop.f32.mrf.mxu0
    %v1086 = vadd.f32 %v790, %v1085
    %v1087 = vpop.f32.mrf.mxu0
    %1088 = vmatprep.mubr.bf16.mxu0 0
    %1089 = vmatmul.mubr.bf16.gmra.mxu0 %v764
    %v1090 = vpop.f32.mrf.mxu0
    %v1091 = vadd.f32 %v790, %v1090
    %v1092 = vpop.f32.mrf.mxu0
    %v1093 = vpop.f32.mrf.mxu0
    %v1094 = vadd.f32 %v790, %v1093
    %v1095 = vpop.f32.mrf.mxu0
    %1096 = vmatprep.mubr.bf16.mxu0 0
    %1097 = vmatmul.mubr.bf16.gmra.mxu0 %v765
    %v1098 = vpop.f32.mrf.mxu0
    %v1099 = vadd.f32 %v790, %v1098
    %v1100 = vpop.f32.mrf.mxu0
    %v1101 = vpop.f32.mrf.mxu0
    %v1102 = vadd.f32 %v790, %v1101
    %v1103 = vpop.f32.mrf.mxu0
    %1104 = vmatprep.mubr.bf16.mxu0 0
    %1105 = vmatmul.mubr.bf16.gmra.mxu0 %v766
    %v1106 = vpop.f32.mrf.mxu0
    %v1107 = vadd.f32 %v790, %v1106
    %v1108 = vpop.f32.mrf.mxu0
    %v1109 = vpop.f32.mrf.mxu0
    %v1110 = vadd.f32 %v790, %v1109
    %v1111 = vpop.f32.mrf.mxu0
    %1112 = vmatprep.mubr.bf16.mxu0 0
    %1113 = vmatmul.mubr.bf16.gmra.mxu0 %v767
    %v1114 = vpop.f32.mrf.mxu0
    %v1115 = vadd.f32 %v790, %v1114
    %v1116 = vpop.f32.mrf.mxu0
    %v1117 = vpop.f32.mrf.mxu0
    %v1118 = vadd.f32 %v790, %v1117
    %v1119 = vpop.f32.mrf.mxu0
    %1120 = vmatprep.mubr.bf16.mxu0 0
    %1121 = vmatmul.mubr.bf16.gmra.mxu0 %v768
    %v1122 = vpop.f32.mrf.mxu0
    %v1123 = vadd.f32 %v790, %v1122
    %v1124 = vpop.f32.mrf.mxu0
    %v1125 = vpop.f32.mrf.mxu0
    %v1126 = vadd.f32 %v790, %v1125
    %v1127 = vpop.f32.mrf.mxu0
    %1128 = vdwg.mxu0
    %s1129 = sld [smem:[#allocation2]]
    %v1130 = vstv %s1129
    %v1131 = vmul.f32 %v1130, %v875
    %v1132 = vmul.f32 %v1130, %v878
    %v1133 = vmul.f32 %v1130, %v883
    %v1134 = vmul.f32 %v1130, %v886
    %v1135 = vmul.f32 %v1130, %v891
    %v1136 = vmul.f32 %v1130, %v894
    %v1137 = vmul.f32 %v1130, %v899
    %v1138 = vmul.f32 %v1130, %v902
    %v1139 = vmul.f32 %v1130, %v907
    %v1140 = vmul.f32 %v1130, %v910
    %v1141 = vmul.f32 %v1130, %v915
    %v1142 = vmul.f32 %v1130, %v918
    %v1143 = vmul.f32 %v1130, %v923
    %v1144 = vmul.f32 %v1130, %v926
    %v1145 = vmul.f32 %v1130, %v931
    %v1146 = vmul.f32 %v1130, %v934
    %v1147 = vmul.f32 %v1130, %v939
    %v1148 = vmul.f32 %v1130, %v942
    %v1149 = vmul.f32 %v1130, %v947
    %v1150 = vmul.f32 %v1130, %v950
    %v1151 = vmul.f32 %v1130, %v955
    %v1152 = vmul.f32 %v1130, %v958
    %v1153 = vmul.f32 %v1130, %v963
    %v1154 = vmul.f32 %v1130, %v966
    %v1155 = vmul.f32 %v1130, %v971
    %v1156 = vmul.f32 %v1130, %v974
    %v1157 = vmul.f32 %v1130, %v979
    %v1158 = vmul.f32 %v1130, %v982
    %v1159 = vmul.f32 %v1130, %v987
    %v1160 = vmul.f32 %v1130, %v990
    %v1161 = vmul.f32 %v1130, %v995
    %v1162 = vmul.f32 %v1130, %v998
    %v1163 = vmul.f32 %v1130, %v1003
    %v1164 = vmul.f32 %v1130, %v1006
    %v1165 = vmul.f32 %v1130, %v1011
    %v1166 = vmul.f32 %v1130, %v1014
    %v1167 = vmul.f32 %v1130, %v1019
    %v1168 = vmul.f32 %v1130, %v1022
    %v1169 = vmul.f32 %v1130, %v1027
    %v1170 = vmul.f32 %v1130, %v1030
    %v1171 = vmul.f32 %v1130, %v1035
    %v1172 = vmul.f32 %v1130, %v1038
    %v1173 = vmul.f32 %v1130, %v1043
    %v1174 = vmul.f32 %v1130, %v1046
    %v1175 = vmul.f32 %v1130, %v1051
    %v1176 = vmul.f32 %v1130, %v1054
    %v1177 = vmul.f32 %v1130, %v1059
    %v1178 = vmul.f32 %v1130, %v1062
    %v1179 = vmul.f32 %v1130, %v1067
    %v1180 = vmul.f32 %v1130, %v1070
    %v1181 = vmul.f32 %v1130, %v1075
    %v1182 = vmul.f32 %v1130, %v1078
    %v1183 = vmul.f32 %v1130, %v1083
    %v1184 = vmul.f32 %v1130, %v1086
    %v1185 = vmul.f32 %v1130, %v1091
    %v1186 = vmul.f32 %v1130, %v1094
    %v1187 = vmul.f32 %v1130, %v1099
    %v1188 = vmul.f32 %v1130, %v1102
    %v1189 = vmul.f32 %v1130, %v1107
    %v1190 = vmul.f32 %v1130, %v1110
    %v1191 = vmul.f32 %v1130, %v1115
    %v1192 = vmul.f32 %v1130, %v1118
    %v1193 = vmul.f32 %v1130, %v1123
    %v1194 = vmul.f32 %v1130, %v1126
    %v1195 = vld [vmem:[%s6] sm:$0xff]
    %v1196 = vld [vmem:[%s6 + $0x8] sm:$0xff]
    %v1197 = vld [vmem:[%s6 + $0x10] sm:$0xff]
    %v1198 = vld [vmem:[%s6 + $0x18] sm:$0xff]
    %v1199 = vld [vmem:[%s6 + $0x20] sm:$0xff]
    %v1200 = vld [vmem:[%s6 + $0x28] sm:$0xff]
    %v1201 = vld [vmem:[%s6 + $0x30] sm:$0xff]
    %v1202 = vld [vmem:[%s6 + $0x38] sm:$0xff]
    %v1203 = vld [vmem:[%s6 + $0x40] sm:$0xff]
    %v1204 = vld [vmem:[%s6 + $0x48] sm:$0xff]
    %v1205 = vld [vmem:[%s6 + $0x50] sm:$0xff]
    %v1206 = vld [vmem:[%s6 + $0x58] sm:$0xff]
    %v1207 = vld [vmem:[%s6 + $0x60] sm:$0xff]
    %v1208 = vld [vmem:[%s6 + $0x68] sm:$0xff]
    %v1209 = vld [vmem:[%s6 + $0x70] sm:$0xff]
    %v1210 = vld [vmem:[%s6 + $0x78] sm:$0xff]
    %v1211 = vld [vmem:[%s6 + $0x80] sm:$0xff]
    %v1212 = vld [vmem:[%s6 + $0x88] sm:$0xff]
    %v1213 = vld [vmem:[%s6 + $0x90] sm:$0xff]
    %v1214 = vld [vmem:[%s6 + $0x98] sm:$0xff]
    %v1215 = vld [vmem:[%s6 + $0xa0] sm:$0xff]
    %v1216 = vld [vmem:[%s6 + $0xa8] sm:$0xff]
    %v1217 = vld [vmem:[%s6 + $0xb0] sm:$0xff]
    %v1218 = vld [vmem:[%s6 + $0xb8] sm:$0xff]
    %v1219 = vld [vmem:[%s6 + $0xc0] sm:$0xff]
    %v1220 = vld [vmem:[%s6 + $0xc8] sm:$0xff]
    %v1221 = vld [vmem:[%s6 + $0xd0] sm:$0xff]
    %v1222 = vld [vmem:[%s6 + $0xd8] sm:$0xff]
    %v1223 = vld [vmem:[%s6 + $0xe0] sm:$0xff]
    %v1224 = vld [vmem:[%s6 + $0xe8] sm:$0xff]
    %v1225 = vld [vmem:[%s6 + $0xf0] sm:$0xff]
    %v1226 = vld [vmem:[%s6 + $0xf8] sm:$0xff]
    %v1227 = vld [vmem:[%s6 + $0x100] sm:$0xff]
    %v1228 = vld [vmem:[%s6 + $0x108] sm:$0xff]
    %v1229 = vld [vmem:[%s6 + $0x110] sm:$0xff]
    %v1230 = vld [vmem:[%s6 + $0x118] sm:$0xff]
    %v1231 = vld [vmem:[%s6 + $0x120] sm:$0xff]
    %v1232 = vld [vmem:[%s6 + $0x128] sm:$0xff]
    %v1233 = vld [vmem:[%s6 + $0x130] sm:$0xff]
    %v1234 = vld [vmem:[%s6 + $0x138] sm:$0xff]
    %v1235 = vld [vmem:[%s6 + $0x140] sm:$0xff]
    %v1236 = vld [vmem:[%s6 + $0x148] sm:$0xff]
    %v1237 = vld [vmem:[%s6 + $0x150] sm:$0xff]
    %v1238 = vld [vmem:[%s6 + $0x158] sm:$0xff]
    %v1239 = vld [vmem:[%s6 + $0x160] sm:$0xff]
    %v1240 = vld [vmem:[%s6 + $0x168] sm:$0xff]
    %v1241 = vld [vmem:[%s6 + $0x170] sm:$0xff]
    %v1242 = vld [vmem:[%s6 + $0x178] sm:$0xff]
    %v1243 = vld [vmem:[%s6 + $0x180] sm:$0xff]
    %v1244 = vld [vmem:[%s6 + $0x188] sm:$0xff]
    %v1245 = vld [vmem:[%s6 + $0x190] sm:$0xff]
    %v1246 = vld [vmem:[%s6 + $0x198] sm:$0xff]
    %v1247 = vld [vmem:[%s6 + $0x1a0] sm:$0xff]
    %v1248 = vld [vmem:[%s6 + $0x1a8] sm:$0xff]
    %v1249 = vld [vmem:[%s6 + $0x1b0] sm:$0xff]
    %v1250 = vld [vmem:[%s6 + $0x1b8] sm:$0xff]
    %v1251 = vld [vmem:[%s6 + $0x1c0] sm:$0xff]
    %v1252 = vld [vmem:[%s6 + $0x1c8] sm:$0xff]
    %v1253 = vld [vmem:[%s6 + $0x1d0] sm:$0xff]
    %v1254 = vld [vmem:[%s6 + $0x1d8] sm:$0xff]
    %v1255 = vld [vmem:[%s6 + $0x1e0] sm:$0xff]
    %v1256 = vld [vmem:[%s6 + $0x1e8] sm:$0xff]
    %v1257 = vld [vmem:[%s6 + $0x1f0] sm:$0xff]
    %v1258 = vld [vmem:[%s6 + $0x1f8] sm:$0xff]
    %v1259 = vld [vmem:[%s6 + $0x200] sm:$0xff]
    %v1260 = vld [vmem:[%s6 + $0x208] sm:$0xff]
    %v1261 = vld [vmem:[%s6 + $0x210] sm:$0xff]
    %v1262 = vld [vmem:[%s6 + $0x218] sm:$0xff]
    %v1263 = vld [vmem:[%s6 + $0x220] sm:$0xff]
    %v1264 = vld [vmem:[%s6 + $0x228] sm:$0xff]
    %v1265 = vld [vmem:[%s6 + $0x230] sm:$0xff]
    %v1266 = vld [vmem:[%s6 + $0x238] sm:$0xff]
    %v1267 = vld [vmem:[%s6 + $0x240] sm:$0xff]
    %v1268 = vld [vmem:[%s6 + $0x248] sm:$0xff]
    %v1269 = vld [vmem:[%s6 + $0x250] sm:$0xff]
    %v1270 = vld [vmem:[%s6 + $0x258] sm:$0xff]
    %v1271 = vld [vmem:[%s6 + $0x260] sm:$0xff]
    %v1272 = vld [vmem:[%s6 + $0x268] sm:$0xff]
    %v1273 = vld [vmem:[%s6 + $0x270] sm:$0xff]
    %v1274 = vld [vmem:[%s6 + $0x278] sm:$0xff]
    %v1275 = vld [vmem:[%s6 + $0x280] sm:$0xff]
    %v1276 = vld [vmem:[%s6 + $0x288] sm:$0xff]
    %v1277 = vld [vmem:[%s6 + $0x290] sm:$0xff]
    %v1278 = vld [vmem:[%s6 + $0x298] sm:$0xff]
    %v1279 = vld [vmem:[%s6 + $0x2a0] sm:$0xff]
    %v1280 = vld [vmem:[%s6 + $0x2a8] sm:$0xff]
    %v1281 = vld [vmem:[%s6 + $0x2b0] sm:$0xff]
    %v1282 = vld [vmem:[%s6 + $0x2b8] sm:$0xff]
    %v1283 = vld [vmem:[%s6 + $0x2c0] sm:$0xff]
    %v1284 = vld [vmem:[%s6 + $0x2c8] sm:$0xff]
    %v1285 = vld [vmem:[%s6 + $0x2d0] sm:$0xff]
    %v1286 = vld [vmem:[%s6 + $0x2d8] sm:$0xff]
    %v1287 = vld [vmem:[%s6 + $0x2e0] sm:$0xff]
    %v1288 = vld [vmem:[%s6 + $0x2e8] sm:$0xff]
    %v1289 = vld [vmem:[%s6 + $0x2f0] sm:$0xff]
    %v1290 = vld [vmem:[%s6 + $0x2f8] sm:$0xff]
    %v1291 = vld [vmem:[%s6 + $0x300] sm:$0xff]
    %v1292 = vld [vmem:[%s6 + $0x308] sm:$0xff]
    %v1293 = vld [vmem:[%s6 + $0x310] sm:$0xff]
    %v1294 = vld [vmem:[%s6 + $0x318] sm:$0xff]
    %v1295 = vld [vmem:[%s6 + $0x320] sm:$0xff]
    %v1296 = vld [vmem:[%s6 + $0x328] sm:$0xff]
    %v1297 = vld [vmem:[%s6 + $0x330] sm:$0xff]
    %v1298 = vld [vmem:[%s6 + $0x338] sm:$0xff]
    %v1299 = vld [vmem:[%s6 + $0x340] sm:$0xff]
    %v1300 = vld [vmem:[%s6 + $0x348] sm:$0xff]
    %v1301 = vld [vmem:[%s6 + $0x350] sm:$0xff]
    %v1302 = vld [vmem:[%s6 + $0x358] sm:$0xff]
    %v1303 = vld [vmem:[%s6 + $0x360] sm:$0xff]
    %v1304 = vld [vmem:[%s6 + $0x368] sm:$0xff]
    %v1305 = vld [vmem:[%s6 + $0x370] sm:$0xff]
    %v1306 = vld [vmem:[%s6 + $0x378] sm:$0xff]
    %v1307 = vld [vmem:[%s6 + $0x380] sm:$0xff]
    %v1308 = vld [vmem:[%s6 + $0x388] sm:$0xff]
    %v1309 = vld [vmem:[%s6 + $0x390] sm:$0xff]
    %v1310 = vld [vmem:[%s6 + $0x398] sm:$0xff]
    %v1311 = vld [vmem:[%s6 + $0x3a0] sm:$0xff]
    %v1312 = vld [vmem:[%s6 + $0x3a8] sm:$0xff]
    %v1313 = vld [vmem:[%s6 + $0x3b0] sm:$0xff]
    %v1314 = vld [vmem:[%s6 + $0x3b8] sm:$0xff]
    %v1315 = vld [vmem:[%s6 + $0x3c0] sm:$0xff]
    %v1316 = vld [vmem:[%s6 + $0x3c8] sm:$0xff]
    %v1317 = vld [vmem:[%s6 + $0x3d0] sm:$0xff]
    %v1318 = vld [vmem:[%s6 + $0x3d8] sm:$0xff]
    %v1319 = vld [vmem:[%s6 + $0x3e0] sm:$0xff]
    %v1320 = vld [vmem:[%s6 + $0x3e8] sm:$0xff]
    %v1321 = vld [vmem:[%s6 + $0x3f0] sm:$0xff]
    %v1322 = vld [vmem:[%s6 + $0x3f8] sm:$0xff]
    %v1323 = vpack.c.bf16 %v878, %v875
    %v1324 = vpack.c.bf16 %v886, %v883
    %v1325 = vpack.c.bf16 %v894, %v891
    %v1326 = vpack.c.bf16 %v902, %v899
    %v1327 = vpack.c.bf16 %v910, %v907
    %v1328 = vpack.c.bf16 %v918, %v915
    %v1329 = vpack.c.bf16 %v926, %v923
    %v1330 = vpack.c.bf16 %v934, %v931
    %v1331 = vpack.c.bf16 %v942, %v939
    %v1332 = vpack.c.bf16 %v950, %v947
    %v1333 = vpack.c.bf16 %v958, %v955
    %v1334 = vpack.c.bf16 %v966, %v963
    %v1335 = vpack.c.bf16 %v974, %v971
    %v1336 = vpack.c.bf16 %v982, %v979
    %v1337 = vpack.c.bf16 %v990, %v987
    %v1338 = vpack.c.bf16 %v998, %v995
    %v1339 = vpack.c.bf16 %v1006, %v1003
    %v1340 = vpack.c.bf16 %v1014, %v1011
    %v1341 = vpack.c.bf16 %v1022, %v1019
    %v1342 = vpack.c.bf16 %v1030, %v1027
    %v1343 = vpack.c.bf16 %v1038, %v1035
    %v1344 = vpack.c.bf16 %v1046, %v1043
    %v1345 = vpack.c.bf16 %v1054, %v1051
    %v1346 = vpack.c.bf16 %v1062, %v1059
    %v1347 = vpack.c.bf16 %v1070, %v1067
    %v1348 = vpack.c.bf16 %v1078, %v1075
    %v1349 = vpack.c.bf16 %v1086, %v1083
    %v1350 = vpack.c.bf16 %v1094, %v1091
    %v1351 = vpack.c.bf16 %v1102, %v1099
    %v1352 = vpack.c.bf16 %v1110, %v1107
    %v1353 = vpack.c.bf16 %v1118, %v1115
    %v1354 = vpack.c.bf16 %v1126, %v1123
    %v1483 = vunpack.c.l.b16 %v1195
    %v1484 = vunpack.c.h.b16 %v1195
    %v1485 = vunpack.c.l.b16 %v1196
    %v1486 = vunpack.c.h.b16 %v1196
    %v1487 = vunpack.c.l.b16 %v1197
    %v1488 = vunpack.c.h.b16 %v1197
    %v1489 = vunpack.c.l.b16 %v1198
    %v1490 = vunpack.c.h.b16 %v1198
    %v1491 = vunpack.c.l.b16 %v1199
    %v1492 = vunpack.c.h.b16 %v1199
    %v1493 = vunpack.c.l.b16 %v1200
    %v1494 = vunpack.c.h.b16 %v1200
    %v1495 = vunpack.c.l.b16 %v1201
    %v1496 = vunpack.c.h.b16 %v1201
    %v1497 = vunpack.c.l.b16 %v1202
    %v1498 = vunpack.c.h.b16 %v1202
    %v1499 = vunpack.c.l.b16 %v1203
    %v1500 = vunpack.c.h.b16 %v1203
    %v1501 = vunpack.c.l.b16 %v1204
    %v1502 = vunpack.c.h.b16 %v1204
    %v1503 = vunpack.c.l.b16 %v1205
    %v1504 = vunpack.c.h.b16 %v1205
    %v1505 = vunpack.c.l.b16 %v1206
    %v1506 = vunpack.c.h.b16 %v1206
    %v1507 = vunpack.c.l.b16 %v1207
    %v1508 = vunpack.c.h.b16 %v1207
    %v1509 = vunpack.c.l.b16 %v1208
    %v1510 = vunpack.c.h.b16 %v1208
    %v1511 = vunpack.c.l.b16 %v1209
    %v1512 = vunpack.c.h.b16 %v1209
    %v1513 = vunpack.c.l.b16 %v1210
    %v1514 = vunpack.c.h.b16 %v1210
    %v1515 = vunpack.c.l.b16 %v1211
    %v1516 = vunpack.c.h.b16 %v1211
    %v1517 = vunpack.c.l.b16 %v1212
    %v1518 = vunpack.c.h.b16 %v1212
    %v1519 = vunpack.c.l.b16 %v1213
    %v1520 = vunpack.c.h.b16 %v1213
    %v1521 = vunpack.c.l.b16 %v1214
    %v1522 = vunpack.c.h.b16 %v1214
    %v1523 = vunpack.c.l.b16 %v1215
    %v1524 = vunpack.c.h.b16 %v1215
    %v1525 = vunpack.c.l.b16 %v1216
    %v1526 = vunpack.c.h.b16 %v1216
    %v1527 = vunpack.c.l.b16 %v1217
    %v1528 = vunpack.c.h.b16 %v1217
    %v1529 = vunpack.c.l.b16 %v1218
    %v1530 = vunpack.c.h.b16 %v1218
    %v1531 = vunpack.c.l.b16 %v1219
    %v1532 = vunpack.c.h.b16 %v1219
    %v1533 = vunpack.c.l.b16 %v1220
    %v1534 = vunpack.c.h.b16 %v1220
    %v1535 = vunpack.c.l.b16 %v1221
    %v1536 = vunpack.c.h.b16 %v1221
    %v1537 = vunpack.c.l.b16 %v1222
    %v1538 = vunpack.c.h.b16 %v1222
    %v1539 = vunpack.c.l.b16 %v1223
    %v1540 = vunpack.c.h.b16 %v1223
    %v1541 = vunpack.c.l.b16 %v1224
    %v1542 = vunpack.c.h.b16 %v1224
    %v1543 = vunpack.c.l.b16 %v1225
    %v1544 = vunpack.c.h.b16 %v1225
    %v1545 = vunpack.c.l.b16 %v1226
    %v1546 = vunpack.c.h.b16 %v1226
    %v1547 = vunpack.c.l.b16 %v1227
    %v1548 = vunpack.c.h.b16 %v1227
    %v1549 = vunpack.c.l.b16 %v1228
    %v1550 = vunpack.c.h.b16 %v1228
    %v1551 = vunpack.c.l.b16 %v1229
    %v1552 = vunpack.c.h.b16 %v1229
    %v1553 = vunpack.c.l.b16 %v1230
    %v1554 = vunpack.c.h.b16 %v1230
    %v1555 = vunpack.c.l.b16 %v1231
    %v1556 = vunpack.c.h.b16 %v1231
    %v1557 = vunpack.c.l.b16 %v1232
    %v1558 = vunpack.c.h.b16 %v1232
    %v1559 = vunpack.c.l.b16 %v1233
    %v1560 = vunpack.c.h.b16 %v1233
    %v1561 = vunpack.c.l.b16 %v1234
    %v1562 = vunpack.c.h.b16 %v1234
    %v1563 = vunpack.c.l.b16 %v1235
    %v1564 = vunpack.c.h.b16 %v1235
    %v1565 = vunpack.c.l.b16 %v1236
    %v1566 = vunpack.c.h.b16 %v1236
    %v1567 = vunpack.c.l.b16 %v1237
    %v1568 = vunpack.c.h.b16 %v1237
    %v1569 = vunpack.c.l.b16 %v1238
    %v1570 = vunpack.c.h.b16 %v1238
    %v1571 = vunpack.c.l.b16 %v1239
    %v1572 = vunpack.c.h.b16 %v1239
    %v1573 = vunpack.c.l.b16 %v1240
    %v1574 = vunpack.c.h.b16 %v1240
    %v1575 = vunpack.c.l.b16 %v1241
    %v1576 = vunpack.c.h.b16 %v1241
    %v1577 = vunpack.c.l.b16 %v1242
    %v1578 = vunpack.c.h.b16 %v1242
    %v1579 = vunpack.c.l.b16 %v1243
    %v1580 = vunpack.c.h.b16 %v1243
    %v1581 = vunpack.c.l.b16 %v1244
    %v1582 = vunpack.c.h.b16 %v1244
    %v1583 = vunpack.c.l.b16 %v1245
    %v1584 = vunpack.c.h.b16 %v1245
    %v1585 = vunpack.c.l.b16 %v1246
    %v1586 = vunpack.c.h.b16 %v1246
    %v1587 = vunpack.c.l.b16 %v1247
    %v1588 = vunpack.c.h.b16 %v1247
    %v1589 = vunpack.c.l.b16 %v1248
    %v1590 = vunpack.c.h.b16 %v1248
    %v1591 = vunpack.c.l.b16 %v1249
    %v1592 = vunpack.c.h.b16 %v1249
    %v1593 = vunpack.c.l.b16 %v1250
    %v1594 = vunpack.c.h.b16 %v1250
    %v1595 = vunpack.c.l.b16 %v1251
    %v1596 = vunpack.c.h.b16 %v1251
    %v1597 = vunpack.c.l.b16 %v1252
    %v1598 = vunpack.c.h.b16 %v1252
    %v1599 = vunpack.c.l.b16 %v1253
    %v1600 = vunpack.c.h.b16 %v1253
    %v1601 = vunpack.c.l.b16 %v1254
    %v1602 = vunpack.c.h.b16 %v1254
    %v1603 = vunpack.c.l.b16 %v1255
    %v1604 = vunpack.c.h.b16 %v1255
    %v1605 = vunpack.c.l.b16 %v1256
    %v1606 = vunpack.c.h.b16 %v1256
    %v1607 = vunpack.c.l.b16 %v1257
    %v1608 = vunpack.c.h.b16 %v1257
    %v1609 = vunpack.c.l.b16 %v1258
    %v1610 = vunpack.c.h.b16 %v1258
    %v1611 = vunpack.c.l.b16 %v1259
    %v1612 = vunpack.c.h.b16 %v1259
    %v1613 = vunpack.c.l.b16 %v1260
    %v1614 = vunpack.c.h.b16 %v1260
    %v1615 = vunpack.c.l.b16 %v1261
    %v1616 = vunpack.c.h.b16 %v1261
    %v1617 = vunpack.c.l.b16 %v1262
    %v1618 = vunpack.c.h.b16 %v1262
    %v1619 = vunpack.c.l.b16 %v1263
    %v1620 = vunpack.c.h.b16 %v1263
    %v1621 = vunpack.c.l.b16 %v1264
    %v1622 = vunpack.c.h.b16 %v1264
    %v1623 = vunpack.c.l.b16 %v1265
    %v1624 = vunpack.c.h.b16 %v1265
    %v1625 = vunpack.c.l.b16 %v1266
    %v1626 = vunpack.c.h.b16 %v1266
    %v1627 = vunpack.c.l.b16 %v1267
    %v1628 = vunpack.c.h.b16 %v1267
    %v1629 = vunpack.c.l.b16 %v1268
    %v1630 = vunpack.c.h.b16 %v1268
    %v1631 = vunpack.c.l.b16 %v1269
    %v1632 = vunpack.c.h.b16 %v1269
    %v1633 = vunpack.c.l.b16 %v1270
    %v1634 = vunpack.c.h.b16 %v1270
    %v1635 = vunpack.c.l.b16 %v1271
    %v1636 = vunpack.c.h.b16 %v1271
    %v1637 = vunpack.c.l.b16 %v1272
    %v1638 = vunpack.c.h.b16 %v1272
    %v1639 = vunpack.c.l.b16 %v1273
    %v1640 = vunpack.c.h.b16 %v1273
    %v1641 = vunpack.c.l.b16 %v1274
    %v1642 = vunpack.c.h.b16 %v1274
    %v1643 = vunpack.c.l.b16 %v1275
    %v1644 = vunpack.c.h.b16 %v1275
    %v1645 = vunpack.c.l.b16 %v1276
    %v1646 = vunpack.c.h.b16 %v1276
    %v1647 = vunpack.c.l.b16 %v1277
    %v1648 = vunpack.c.h.b16 %v1277
    %v1649 = vunpack.c.l.b16 %v1278
    %v1650 = vunpack.c.h.b16 %v1278
    %v1651 = vunpack.c.l.b16 %v1279
    %v1652 = vunpack.c.h.b16 %v1279
    %v1653 = vunpack.c.l.b16 %v1280
    %v1654 = vunpack.c.h.b16 %v1280
    %v1655 = vunpack.c.l.b16 %v1281
    %v1656 = vunpack.c.h.b16 %v1281
    %v1657 = vunpack.c.l.b16 %v1282
    %v1658 = vunpack.c.h.b16 %v1282
    %v1659 = vunpack.c.l.b16 %v1283
    %v1660 = vunpack.c.h.b16 %v1283
    %v1661 = vunpack.c.l.b16 %v1284
    %v1662 = vunpack.c.h.b16 %v1284
    %v1663 = vunpack.c.l.b16 %v1285
    %v1664 = vunpack.c.h.b16 %v1285
    %v1665 = vunpack.c.l.b16 %v1286
    %v1666 = vunpack.c.h.b16 %v1286
    %v1667 = vunpack.c.l.b16 %v1287
    %v1668 = vunpack.c.h.b16 %v1287
    %v1669 = vunpack.c.l.b16 %v1288
    %v1670 = vunpack.c.h.b16 %v1288
    %v1671 = vunpack.c.l.b16 %v1289
    %v1672 = vunpack.c.h.b16 %v1289
    %v1673 = vunpack.c.l.b16 %v1290
    %v1674 = vunpack.c.h.b16 %v1290
    %v1675 = vunpack.c.l.b16 %v1291
    %v1676 = vunpack.c.h.b16 %v1291
    %v1677 = vunpack.c.l.b16 %v1292
    %v1678 = vunpack.c.h.b16 %v1292
    %v1679 = vunpack.c.l.b16 %v1293
    %v1680 = vunpack.c.h.b16 %v1293
    %v1681 = vunpack.c.l.b16 %v1294
    %v1682 = vunpack.c.h.b16 %v1294
    %v1683 = vunpack.c.l.b16 %v1295
    %v1684 = vunpack.c.h.b16 %v1295
    %v1685 = vunpack.c.l.b16 %v1296
    %v1686 = vunpack.c.h.b16 %v1296
    %v1687 = vunpack.c.l.b16 %v1297
    %v1688 = vunpack.c.h.b16 %v1297
    %v1689 = vunpack.c.l.b16 %v1298
    %v1690 = vunpack.c.h.b16 %v1298
    %v1691 = vunpack.c.l.b16 %v1299
    %v1692 = vunpack.c.h.b16 %v1299
    %v1693 = vunpack.c.l.b16 %v1300
    %v1694 = vunpack.c.h.b16 %v1300
    %v1695 = vunpack.c.l.b16 %v1301
    %v1696 = vunpack.c.h.b16 %v1301
    %v1697 = vunpack.c.l.b16 %v1302
    %v1698 = vunpack.c.h.b16 %v1302
    %v1699 = vunpack.c.l.b16 %v1303
    %v1700 = vunpack.c.h.b16 %v1303
    %v1701 = vunpack.c.l.b16 %v1304
    %v1702 = vunpack.c.h.b16 %v1304
    %v1703 = vunpack.c.l.b16 %v1305
    %v1704 = vunpack.c.h.b16 %v1305
    %v1705 = vunpack.c.l.b16 %v1306
    %v1706 = vunpack.c.h.b16 %v1306
    %v1707 = vunpack.c.l.b16 %v1307
    %v1708 = vunpack.c.h.b16 %v1307
    %v1709 = vunpack.c.l.b16 %v1308
    %v1710 = vunpack.c.h.b16 %v1308
    %v1711 = vunpack.c.l.b16 %v1309
    %v1712 = vunpack.c.h.b16 %v1309
    %v1713 = vunpack.c.l.b16 %v1310
    %v1714 = vunpack.c.h.b16 %v1310
    %v1715 = vunpack.c.l.b16 %v1311
    %v1716 = vunpack.c.h.b16 %v1311
    %v1717 = vunpack.c.l.b16 %v1312
    %v1718 = vunpack.c.h.b16 %v1312
    %v1719 = vunpack.c.l.b16 %v1313
    %v1720 = vunpack.c.h.b16 %v1313
    %v1721 = vunpack.c.l.b16 %v1314
    %v1722 = vunpack.c.h.b16 %v1314
    %v1723 = vunpack.c.l.b16 %v1315
    %v1724 = vunpack.c.h.b16 %v1315
    %v1725 = vunpack.c.l.b16 %v1316
    %v1726 = vunpack.c.h.b16 %v1316
    %v1727 = vunpack.c.l.b16 %v1317
    %v1728 = vunpack.c.h.b16 %v1317
    %v1729 = vunpack.c.l.b16 %v1318
    %v1730 = vunpack.c.h.b16 %v1318
    %v1731 = vunpack.c.l.b16 %v1319
    %v1732 = vunpack.c.h.b16 %v1319
    %v1733 = vunpack.c.l.b16 %v1320
    %v1734 = vunpack.c.h.b16 %v1320
    %v1735 = vunpack.c.l.b16 %v1321
    %v1736 = vunpack.c.h.b16 %v1321
    %v1737 = vunpack.c.l.b16 %v1322
    %v1738 = vunpack.c.h.b16 %v1322
    %v1739 = vpack.c.b16 %v1487, %v1483
    %v1740 = vpack.c.b16 %v1488, %v1484
    %v1741 = vpack.c.b16 %v1489, %v1485
    %v1742 = vpack.c.b16 %v1490, %v1486
    %v1743 = vpack.c.b16 %v1495, %v1491
    %v1744 = vpack.c.b16 %v1496, %v1492
    %v1745 = vpack.c.b16 %v1497, %v1493
    %v1746 = vpack.c.b16 %v1498, %v1494
    %v1747 = vpack.c.b16 %v1503, %v1499
    %v1748 = vpack.c.b16 %v1504, %v1500
    %v1749 = vpack.c.b16 %v1505, %v1501
    %v1750 = vpack.c.b16 %v1506, %v1502
    %v1751 = vpack.c.b16 %v1511, %v1507
    %v1752 = vpack.c.b16 %v1512, %v1508
    %v1753 = vpack.c.b16 %v1513, %v1509
    %v1754 = vpack.c.b16 %v1514, %v1510
    %v1755 = vpack.c.b16 %v1519, %v1515
    %v1756 = vpack.c.b16 %v1520, %v1516
    %v1757 = vpack.c.b16 %v1521, %v1517
    %v1758 = vpack.c.b16 %v1522, %v1518
    %v1759 = vpack.c.b16 %v1527, %v1523
    %v1760 = vpack.c.b16 %v1528, %v1524
    %v1761 = vpack.c.b16 %v1529, %v1525
    %v1762 = vpack.c.b16 %v1530, %v1526
    %v1763 = vpack.c.b16 %v1535, %v1531
    %v1764 = vpack.c.b16 %v1536, %v1532
    %v1765 = vpack.c.b16 %v1537, %v1533
    %v1766 = vpack.c.b16 %v1538, %v1534
    %v1767 = vpack.c.b16 %v1543, %v1539
    %v1768 = vpack.c.b16 %v1544, %v1540
    %v1769 = vpack.c.b16 %v1545, %v1541
    %v1770 = vpack.c.b16 %v1546, %v1542
    %v1771 = vpack.c.b16 %v1551, %v1547
    %v1772 = vpack.c.b16 %v1552, %v1548
    %v1773 = vpack.c.b16 %v1553, %v1549
    %v1774 = vpack.c.b16 %v1554, %v1550
    %v1775 = vpack.c.b16 %v1559, %v1555
    %v1776 = vpack.c.b16 %v1560, %v1556
    %v1777 = vpack.c.b16 %v1561, %v1557
    %v1778 = vpack.c.b16 %v1562, %v1558
    %v1779 = vpack.c.b16 %v1567, %v1563
    %v1780 = vpack.c.b16 %v1568, %v1564
    %v1781 = vpack.c.b16 %v1569, %v1565
    %v1782 = vpack.c.b16 %v1570, %v1566
    %v1783 = vpack.c.b16 %v1575, %v1571
    %v1784 = vpack.c.b16 %v1576, %v1572
    %v1785 = vpack.c.b16 %v1577, %v1573
    %v1786 = vpack.c.b16 %v1578, %v1574
    %v1787 = vpack.c.b16 %v1583, %v1579
    %v1788 = vpack.c.b16 %v1584, %v1580
    %v1789 = vpack.c.b16 %v1585, %v1581
    %v1790 = vpack.c.b16 %v1586, %v1582
    %v1791 = vpack.c.b16 %v1591, %v1587
    %v1792 = vpack.c.b16 %v1592, %v1588
    %v1793 = vpack.c.b16 %v1593, %v1589
    %v1794 = vpack.c.b16 %v1594, %v1590
    %v1795 = vpack.c.b16 %v1599, %v1595
    %v1796 = vpack.c.b16 %v1600, %v1596
    %v1797 = vpack.c.b16 %v1601, %v1597
    %v1798 = vpack.c.b16 %v1602, %v1598
    %v1799 = vpack.c.b16 %v1607, %v1603
    %v1800 = vpack.c.b16 %v1608, %v1604
    %v1801 = vpack.c.b16 %v1609, %v1605
    %v1802 = vpack.c.b16 %v1610, %v1606
    %v1803 = vpack.c.b16 %v1615, %v1611
    %v1804 = vpack.c.b16 %v1616, %v1612
    %v1805 = vpack.c.b16 %v1617, %v1613
    %v1806 = vpack.c.b16 %v1618, %v1614
    %v1807 = vpack.c.b16 %v1623, %v1619
    %v1808 = vpack.c.b16 %v1624, %v1620
    %v1809 = vpack.c.b16 %v1625, %v1621
    %v1810 = vpack.c.b16 %v1626, %v1622
    %v1811 = vpack.c.b16 %v1631, %v1627
    %v1812 = vpack.c.b16 %v1632, %v1628
    %v1813 = vpack.c.b16 %v1633, %v1629
    %v1814 = vpack.c.b16 %v1634, %v1630
    %v1815 = vpack.c.b16 %v1639, %v1635
    %v1816 = vpack.c.b16 %v1640, %v1636
    %v1817 = vpack.c.b16 %v1641, %v1637
    %v1818 = vpack.c.b16 %v1642, %v1638
    %v1819 = vpack.c.b16 %v1647, %v1643
    %v1820 = vpack.c.b16 %v1648, %v1644
    %v1821 = vpack.c.b16 %v1649, %v1645
    %v1822 = vpack.c.b16 %v1650, %v1646
    %v1823 = vpack.c.b16 %v1655, %v1651
    %v1824 = vpack.c.b16 %v1656, %v1652
    %v1825 = vpack.c.b16 %v1657, %v1653
    %v1826 = vpack.c.b16 %v1658, %v1654
    %v1827 = vpack.c.b16 %v1663, %v1659
    %v1828 = vpack.c.b16 %v1664, %v1660
    %v1829 = vpack.c.b16 %v1665, %v1661
    %v1830 = vpack.c.b16 %v1666, %v1662
    %v1831 = vpack.c.b16 %v1671, %v1667
    %v1832 = vpack.c.b16 %v1672, %v1668
    %v1833 = vpack.c.b16 %v1673, %v1669
    %v1834 = vpack.c.b16 %v1674, %v1670
    %v1835 = vpack.c.b16 %v1679, %v1675
    %v1836 = vpack.c.b16 %v1680, %v1676
    %v1837 = vpack.c.b16 %v1681, %v1677
    %v1838 = vpack.c.b16 %v1682, %v1678
    %v1839 = vpack.c.b16 %v1687, %v1683
    %v1840 = vpack.c.b16 %v1688, %v1684
    %v1841 = vpack.c.b16 %v1689, %v1685
    %v1842 = vpack.c.b16 %v1690, %v1686
    %v1843 = vpack.c.b16 %v1695, %v1691
    %v1844 = vpack.c.b16 %v1696, %v1692
    %v1845 = vpack.c.b16 %v1697, %v1693
    %v1846 = vpack.c.b16 %v1698, %v1694
    %v1847 = vpack.c.b16 %v1703, %v1699
    %v1848 = vpack.c.b16 %v1704, %v1700
    %v1849 = vpack.c.b16 %v1705, %v1701
    %v1850 = vpack.c.b16 %v1706, %v1702
    %v1851 = vpack.c.b16 %v1711, %v1707
    %v1852 = vpack.c.b16 %v1712, %v1708
    %v1853 = vpack.c.b16 %v1713, %v1709
    %v1854 = vpack.c.b16 %v1714, %v1710
    %v1855 = vpack.c.b16 %v1719, %v1715
    %v1856 = vpack.c.b16 %v1720, %v1716
    %v1857 = vpack.c.b16 %v1721, %v1717
    %v1858 = vpack.c.b16 %v1722, %v1718
    %v1859 = vpack.c.b16 %v1727, %v1723
    %v1860 = vpack.c.b16 %v1728, %v1724
    %v1861 = vpack.c.b16 %v1729, %v1725
    %v1862 = vpack.c.b16 %v1730, %v1726
    %v1863 = vpack.c.b16 %v1735, %v1731
    %v1864 = vpack.c.b16 %v1736, %v1732
    %v1865 = vpack.c.b16 %v1737, %v1733
    %v1866 = vpack.c.b16 %v1738, %v1734
    %1995 = vmatprep.subr.bf16.mxu0 0
    %1996 = vmatpush1.bf16.msra.mxu0 %v1330
    %1997 = vmatprep.subr.bf16.mxu0 0
    %1998 = vmatpush1.bf16.msra.mxu0 %v1329
    %1999 = vmatprep.subr.bf16.mxu0 0
    %2000 = vmatpush1.bf16.msra.mxu0 %v1328
    %2001 = vmatprep.subr.bf16.mxu0 0
    %2002 = vmatpush1.bf16.msra.mxu0 %v1327
    %2003 = vmatprep.subr.bf16.mxu0 0
    %2004 = vmatpush1.bf16.msra.mxu0 %v1326
    %2005 = vmatprep.subr.bf16.mxu0 0
    %2006 = vmatpush1.bf16.msra.mxu0 %v1325
    %2007 = vmatprep.subr.bf16.mxu0 0
    %2008 = vmatpush1.bf16.msra.mxu0 %v1324
    %2009 = vmatprep.subr.bf16.mxu0 0
    %2010 = vmatpush1.bf16.msra.mxu0 %v1323
    %2011 = vmatprep.subr.bf16.mxu0 0
    %2012 = vmatpush2.bf16.msra.mxu0 %v1338
    %2013 = vmatprep.subr.bf16.mxu0 0
    %2014 = vmatpush2.bf16.msra.mxu0 %v1337
    %2015 = vmatprep.subr.bf16.mxu0 0
    %2016 = vmatpush2.bf16.msra.mxu0 %v1336
    %2017 = vmatprep.subr.bf16.mxu0 0
    %2018 = vmatpush2.bf16.msra.mxu0 %v1335
    %2019 = vmatprep.subr.bf16.mxu0 0
    %2020 = vmatpush2.bf16.msra.mxu0 %v1334
    %2021 = vmatprep.subr.bf16.mxu0 0
    %2022 = vmatpush2.bf16.msra.mxu0 %v1333
    %2023 = vmatprep.subr.bf16.mxu0 0
    %2024 = vmatpush2.bf16.msra.mxu0 %v1332
    %2025 = vmatprep.subr.bf16.mxu0 0
    %2026 = vmatpush2.bf16.msra.mxu0 %v1331
    %2027 = vmatprep.mubr.bf16.mxu0 %v1740
    %2028 = vmatmul.mubr.bf16.gmra.mxu0 %v1739
    %v2029 = vpop.f32.mrf.mxu0
    %v2030 = vadd.f32 0.0, %v2029
    %v2031 = vpop.f32.mrf.mxu0
    %v2032 = vpop.f32.mrf.mxu0
    %v2033 = vadd.f32 0.0, %v2032
    %v2034 = vpop.f32.mrf.mxu0
    %2035 = vmatprep.mubr.bf16.mxu0 %v1744
    %2036 = vmatmul.mubr.bf16.gmra.mxu0 %v1743
    %v2037 = vpop.f32.mrf.mxu0
    %v2038 = vadd.f32 0.0, %v2037
    %v2039 = vpop.f32.mrf.mxu0
    %v2040 = vpop.f32.mrf.mxu0
    %v2041 = vadd.f32 0.0, %v2040
    %v2042 = vpop.f32.mrf.mxu0
    %2043 = vmatprep.mubr.bf16.mxu0 %v1748
    %2044 = vmatmul.mubr.bf16.gmra.mxu0 %v1747
    %v2045 = vpop.f32.mrf.mxu0
    %v2046 = vadd.f32 0.0, %v2045
    %v2047 = vpop.f32.mrf.mxu0
    %v2048 = vpop.f32.mrf.mxu0
    %v2049 = vadd.f32 0.0, %v2048
    %v2050 = vpop.f32.mrf.mxu0
    %2051 = vmatprep.mubr.bf16.mxu0 %v1752
    %2052 = vmatmul.mubr.bf16.gmra.mxu0 %v1751
    %v2053 = vpop.f32.mrf.mxu0
    %v2054 = vadd.f32 0.0, %v2053
    %v2055 = vpop.f32.mrf.mxu0
    %v2056 = vpop.f32.mrf.mxu0
    %v2057 = vadd.f32 0.0, %v2056
    %v2058 = vpop.f32.mrf.mxu0
    %2059 = vmatprep.mubr.bf16.mxu0 %v1756
    %2060 = vmatmul.mubr.bf16.gmra.mxu0 %v1755
    %v2061 = vpop.f32.mrf.mxu0
    %v2062 = vadd.f32 0.0, %v2061
    %v2063 = vpop.f32.mrf.mxu0
    %v2064 = vpop.f32.mrf.mxu0
    %v2065 = vadd.f32 0.0, %v2064
    %v2066 = vpop.f32.mrf.mxu0
    %2067 = vmatprep.mubr.bf16.mxu0 %v1760
    %2068 = vmatmul.mubr.bf16.gmra.mxu0 %v1759
    %v2069 = vpop.f32.mrf.mxu0
    %v2070 = vadd.f32 0.0, %v2069
    %v2071 = vpop.f32.mrf.mxu0
    %v2072 = vpop.f32.mrf.mxu0
    %v2073 = vadd.f32 0.0, %v2072
    %v2074 = vpop.f32.mrf.mxu0
    %2075 = vmatprep.mubr.bf16.mxu0 %v1764
    %2076 = vmatmul.mubr.bf16.gmra.mxu0 %v1763
    %v2077 = vpop.f32.mrf.mxu0
    %v2078 = vadd.f32 0.0, %v2077
    %v2079 = vpop.f32.mrf.mxu0
    %v2080 = vpop.f32.mrf.mxu0
    %v2081 = vadd.f32 0.0, %v2080
    %v2082 = vpop.f32.mrf.mxu0
    %2083 = vmatprep.mubr.bf16.mxu0 %v1768
    %2084 = vmatmul.mubr.bf16.gmra.mxu0 %v1767
    %v2085 = vpop.f32.mrf.mxu0
    %v2086 = vadd.f32 0.0, %v2085
    %v2087 = vpop.f32.mrf.mxu0
    %v2088 = vpop.f32.mrf.mxu0
    %v2089 = vadd.f32 0.0, %v2088
    %v2090 = vpop.f32.mrf.mxu0
    %2091 = vmatprep.mubr.bf16.mxu0 %v1772
    %2092 = vmatmul.mubr.bf16.gmra.mxu0 %v1771
    %v2093 = vpop.f32.mrf.mxu0
    %v2094 = vadd.f32 0.0, %v2093
    %v2095 = vpop.f32.mrf.mxu0
    %v2096 = vpop.f32.mrf.mxu0
    %v2097 = vadd.f32 0.0, %v2096
    %v2098 = vpop.f32.mrf.mxu0
    %2099 = vmatprep.mubr.bf16.mxu0 %v1776
    %2100 = vmatmul.mubr.bf16.gmra.mxu0 %v1775
    %v2101 = vpop.f32.mrf.mxu0
    %v2102 = vadd.f32 0.0, %v2101
    %v2103 = vpop.f32.mrf.mxu0
    %v2104 = vpop.f32.mrf.mxu0
    %v2105 = vadd.f32 0.0, %v2104
    %v2106 = vpop.f32.mrf.mxu0
    %2107 = vmatprep.mubr.bf16.mxu0 %v1780
    %2108 = vmatmul.mubr.bf16.gmra.mxu0 %v1779
    %v2109 = vpop.f32.mrf.mxu0
    %v2110 = vadd.f32 0.0, %v2109
    %v2111 = vpop.f32.mrf.mxu0
    %v2112 = vpop.f32.mrf.mxu0
    %v2113 = vadd.f32 0.0, %v2112
    %v2114 = vpop.f32.mrf.mxu0
    %2115 = vmatprep.mubr.bf16.mxu0 %v1784
    %2116 = vmatmul.mubr.bf16.gmra.mxu0 %v1783
    %v2117 = vpop.f32.mrf.mxu0
    %v2118 = vadd.f32 0.0, %v2117
    %v2119 = vpop.f32.mrf.mxu0
    %v2120 = vpop.f32.mrf.mxu0
    %v2121 = vadd.f32 0.0, %v2120
    %v2122 = vpop.f32.mrf.mxu0
    %2123 = vmatprep.mubr.bf16.mxu0 %v1788
    %2124 = vmatmul.mubr.bf16.gmra.mxu0 %v1787
    %v2125 = vpop.f32.mrf.mxu0
    %v2126 = vadd.f32 0.0, %v2125
    %v2127 = vpop.f32.mrf.mxu0
    %v2128 = vpop.f32.mrf.mxu0
    %v2129 = vadd.f32 0.0, %v2128
    %v2130 = vpop.f32.mrf.mxu0
    %2131 = vmatprep.mubr.bf16.mxu0 %v1792
    %2132 = vmatmul.mubr.bf16.gmra.mxu0 %v1791
    %v2133 = vpop.f32.mrf.mxu0
    %v2134 = vadd.f32 0.0, %v2133
    %v2135 = vpop.f32.mrf.mxu0
    %v2136 = vpop.f32.mrf.mxu0
    %v2137 = vadd.f32 0.0, %v2136
    %v2138 = vpop.f32.mrf.mxu0
    %2139 = vmatprep.mubr.bf16.mxu0 %v1796
    %2140 = vmatmul.mubr.bf16.gmra.mxu0 %v1795
    %v2141 = vpop.f32.mrf.mxu0
    %v2142 = vadd.f32 0.0, %v2141
    %v2143 = vpop.f32.mrf.mxu0
    %v2144 = vpop.f32.mrf.mxu0
    %v2145 = vadd.f32 0.0, %v2144
    %v2146 = vpop.f32.mrf.mxu0
    %2147 = vmatprep.mubr.bf16.mxu0 %v1800
    %2148 = vmatmul.mubr.bf16.gmra.mxu0 %v1799
    %v2149 = vpop.f32.mrf.mxu0
    %v2150 = vadd.f32 0.0, %v2149
    %v2151 = vpop.f32.mrf.mxu0
    %v2152 = vpop.f32.mrf.mxu0
    %v2153 = vadd.f32 0.0, %v2152
    %v2154 = vpop.f32.mrf.mxu0
    %2155 = vmatprep.mubr.bf16.mxu0 %v1804
    %2156 = vmatmul.mubr.bf16.gmra.mxu0 %v1803
    %v2157 = vpop.f32.mrf.mxu0
    %v2158 = vadd.f32 0.0, %v2157
    %v2159 = vpop.f32.mrf.mxu0
    %v2160 = vpop.f32.mrf.mxu0
    %v2161 = vadd.f32 0.0, %v2160
    %v2162 = vpop.f32.mrf.mxu0
    %2163 = vmatprep.mubr.bf16.mxu0 %v1808
    %2164 = vmatmul.mubr.bf16.gmra.mxu0 %v1807
    %v2165 = vpop.f32.mrf.mxu0
    %v2166 = vadd.f32 0.0, %v2165
    %v2167 = vpop.f32.mrf.mxu0
    %v2168 = vpop.f32.mrf.mxu0
    %v2169 = vadd.f32 0.0, %v2168
    %v2170 = vpop.f32.mrf.mxu0
    %2171 = vmatprep.mubr.bf16.mxu0 %v1812
    %2172 = vmatmul.mubr.bf16.gmra.mxu0 %v1811
    %v2173 = vpop.f32.mrf.mxu0
    %v2174 = vadd.f32 0.0, %v2173
    %v2175 = vpop.f32.mrf.mxu0
    %v2176 = vpop.f32.mrf.mxu0
    %v2177 = vadd.f32 0.0, %v2176
    %v2178 = vpop.f32.mrf.mxu0
    %2179 = vmatprep.mubr.bf16.mxu0 %v1816
    %2180 = vmatmul.mubr.bf16.gmra.mxu0 %v1815
    %v2181 = vpop.f32.mrf.mxu0
    %v2182 = vadd.f32 0.0, %v2181
    %v2183 = vpop.f32.mrf.mxu0
    %v2184 = vpop.f32.mrf.mxu0
    %v2185 = vadd.f32 0.0, %v2184
    %v2186 = vpop.f32.mrf.mxu0
    %2187 = vmatprep.mubr.bf16.mxu0 %v1820
    %2188 = vmatmul.mubr.bf16.gmra.mxu0 %v1819
    %v2189 = vpop.f32.mrf.mxu0
    %v2190 = vadd.f32 0.0, %v2189
    %v2191 = vpop.f32.mrf.mxu0
    %v2192 = vpop.f32.mrf.mxu0
    %v2193 = vadd.f32 0.0, %v2192
    %v2194 = vpop.f32.mrf.mxu0
    %2195 = vmatprep.mubr.bf16.mxu0 %v1824
    %2196 = vmatmul.mubr.bf16.gmra.mxu0 %v1823
    %v2197 = vpop.f32.mrf.mxu0
    %v2198 = vadd.f32 0.0, %v2197
    %v2199 = vpop.f32.mrf.mxu0
    %v2200 = vpop.f32.mrf.mxu0
    %v2201 = vadd.f32 0.0, %v2200
    %v2202 = vpop.f32.mrf.mxu0
    %2203 = vmatprep.mubr.bf16.mxu0 %v1828
    %2204 = vmatmul.mubr.bf16.gmra.mxu0 %v1827
    %v2205 = vpop.f32.mrf.mxu0
    %v2206 = vadd.f32 0.0, %v2205
    %v2207 = vpop.f32.mrf.mxu0
    %v2208 = vpop.f32.mrf.mxu0
    %v2209 = vadd.f32 0.0, %v2208
    %v2210 = vpop.f32.mrf.mxu0
    %2211 = vmatprep.mubr.bf16.mxu0 %v1832
    %2212 = vmatmul.mubr.bf16.gmra.mxu0 %v1831
    %v2213 = vpop.f32.mrf.mxu0
    %v2214 = vadd.f32 0.0, %v2213
    %v2215 = vpop.f32.mrf.mxu0
    %v2216 = vpop.f32.mrf.mxu0
    %v2217 = vadd.f32 0.0, %v2216
    %v2218 = vpop.f32.mrf.mxu0
    %2219 = vmatprep.mubr.bf16.mxu0 %v1836
    %2220 = vmatmul.mubr.bf16.gmra.mxu0 %v1835
    %v2221 = vpop.f32.mrf.mxu0
    %v2222 = vadd.f32 0.0, %v2221
    %v2223 = vpop.f32.mrf.mxu0
    %v2224 = vpop.f32.mrf.mxu0
    %v2225 = vadd.f32 0.0, %v2224
    %v2226 = vpop.f32.mrf.mxu0
    %2227 = vmatprep.mubr.bf16.mxu0 %v1840
    %2228 = vmatmul.mubr.bf16.gmra.mxu0 %v1839
    %v2229 = vpop.f32.mrf.mxu0
    %v2230 = vadd.f32 0.0, %v2229
    %v2231 = vpop.f32.mrf.mxu0
    %v2232 = vpop.f32.mrf.mxu0
    %v2233 = vadd.f32 0.0, %v2232
    %v2234 = vpop.f32.mrf.mxu0
    %2235 = vmatprep.mubr.bf16.mxu0 %v1844
    %2236 = vmatmul.mubr.bf16.gmra.mxu0 %v1843
    %v2237 = vpop.f32.mrf.mxu0
    %v2238 = vadd.f32 0.0, %v2237
    %v2239 = vpop.f32.mrf.mxu0
    %v2240 = vpop.f32.mrf.mxu0
    %v2241 = vadd.f32 0.0, %v2240
    %v2242 = vpop.f32.mrf.mxu0
    %2243 = vmatprep.mubr.bf16.mxu0 %v1848
    %2244 = vmatmul.mubr.bf16.gmra.mxu0 %v1847
    %v2245 = vpop.f32.mrf.mxu0
    %v2246 = vadd.f32 0.0, %v2245
    %v2247 = vpop.f32.mrf.mxu0
    %v2248 = vpop.f32.mrf.mxu0
    %v2249 = vadd.f32 0.0, %v2248
    %v2250 = vpop.f32.mrf.mxu0
    %2251 = vmatprep.mubr.bf16.mxu0 %v1852
    %2252 = vmatmul.mubr.bf16.gmra.mxu0 %v1851
    %v2253 = vpop.f32.mrf.mxu0
    %v2254 = vadd.f32 0.0, %v2253
    %v2255 = vpop.f32.mrf.mxu0
    %v2256 = vpop.f32.mrf.mxu0
    %v2257 = vadd.f32 0.0, %v2256
    %v2258 = vpop.f32.mrf.mxu0
    %2259 = vmatprep.mubr.bf16.mxu0 %v1856
    %2260 = vmatmul.mubr.bf16.gmra.mxu0 %v1855
    %v2261 = vpop.f32.mrf.mxu0
    %v2262 = vadd.f32 0.0, %v2261
    %v2263 = vpop.f32.mrf.mxu0
    %v2264 = vpop.f32.mrf.mxu0
    %v2265 = vadd.f32 0.0, %v2264
    %v2266 = vpop.f32.mrf.mxu0
    %2267 = vmatprep.mubr.bf16.mxu0 %v1860
    %2268 = vmatmul.mubr.bf16.gmra.mxu0 %v1859
    %v2269 = vpop.f32.mrf.mxu0
    %v2270 = vadd.f32 0.0, %v2269
    %v2271 = vpop.f32.mrf.mxu0
    %v2272 = vpop.f32.mrf.mxu0
    %v2273 = vadd.f32 0.0, %v2272
    %v2274 = vpop.f32.mrf.mxu0
    %2275 = vmatprep.mubr.bf16.mxu0 %v1864
    %2276 = vmatmul.mubr.bf16.gmra.mxu0 %v1863
    %v2277 = vpop.f32.mrf.mxu0
    %v2278 = vadd.f32 0.0, %v2277
    %v2279 = vpop.f32.mrf.mxu0
    %v2280 = vpop.f32.mrf.mxu0
    %v2281 = vadd.f32 0.0, %v2280
    %v2282 = vpop.f32.mrf.mxu0
    %2283 = vdwg.mxu0
    %2284 = vmatprep.subr.bf16.mxu0 0
    %2285 = vmatpush1.bf16.msra.mxu0 %v1346
    %2286 = vmatprep.subr.bf16.mxu0 0
    %2287 = vmatpush1.bf16.msra.mxu0 %v1345
    %2288 = vmatprep.subr.bf16.mxu0 0
    %2289 = vmatpush1.bf16.msra.mxu0 %v1344
    %2290 = vmatprep.subr.bf16.mxu0 0
    %2291 = vmatpush1.bf16.msra.mxu0 %v1343
    %2292 = vmatprep.subr.bf16.mxu0 0
    %2293 = vmatpush1.bf16.msra.mxu0 %v1342
    %2294 = vmatprep.subr.bf16.mxu0 0
    %2295 = vmatpush1.bf16.msra.mxu0 %v1341
    %2296 = vmatprep.subr.bf16.mxu0 0
    %2297 = vmatpush1.bf16.msra.mxu0 %v1340
    %2298 = vmatprep.subr.bf16.mxu0 0
    %2299 = vmatpush1.bf16.msra.mxu0 %v1339
    %2300 = vmatprep.subr.bf16.mxu0 0
    %2301 = vmatpush2.bf16.msra.mxu0 %v1354
    %2302 = vmatprep.subr.bf16.mxu0 0
    %2303 = vmatpush2.bf16.msra.mxu0 %v1353
    %2304 = vmatprep.subr.bf16.mxu0 0
    %2305 = vmatpush2.bf16.msra.mxu0 %v1352
    %2306 = vmatprep.subr.bf16.mxu0 0
    %2307 = vmatpush2.bf16.msra.mxu0 %v1351
    %2308 = vmatprep.subr.bf16.mxu0 0
    %2309 = vmatpush2.bf16.msra.mxu0 %v1350
    %2310 = vmatprep.subr.bf16.mxu0 0
    %2311 = vmatpush2.bf16.msra.mxu0 %v1349
    %2312 = vmatprep.subr.bf16.mxu0 0
    %2313 = vmatpush2.bf16.msra.mxu0 %v1348
    %2314 = vmatprep.subr.bf16.mxu0 0
    %2315 = vmatpush2.bf16.msra.mxu0 %v1347
    %2316 = vmatprep.mubr.bf16.mxu0 %v1742
    %2317 = vmatmul.mubr.bf16.gmra.mxu0 %v1741
    %v2318 = vpop.f32.mrf.mxu0
    %v2319 = vadd.f32 %v2030, %v2318
    %v2320 = vpop.f32.mrf.mxu0
    %v2321 = vpop.f32.mrf.mxu0
    %v2322 = vadd.f32 %v2033, %v2321
    %v2323 = vpop.f32.mrf.mxu0
    %2324 = vmatprep.mubr.bf16.mxu0 %v1746
    %2325 = vmatmul.mubr.bf16.gmra.mxu0 %v1745
    %v2326 = vpop.f32.mrf.mxu0
    %v2327 = vadd.f32 %v2038, %v2326
    %v2328 = vpop.f32.mrf.mxu0
    %v2329 = vpop.f32.mrf.mxu0
    %v2330 = vadd.f32 %v2041, %v2329
    %v2331 = vpop.f32.mrf.mxu0
    %2332 = vmatprep.mubr.bf16.mxu0 %v1750
    %2333 = vmatmul.mubr.bf16.gmra.mxu0 %v1749
    %v2334 = vpop.f32.mrf.mxu0
    %v2335 = vadd.f32 %v2046, %v2334
    %v2336 = vpop.f32.mrf.mxu0
    %v2337 = vpop.f32.mrf.mxu0
    %v2338 = vadd.f32 %v2049, %v2337
    %v2339 = vpop.f32.mrf.mxu0
    %2340 = vmatprep.mubr.bf16.mxu0 %v1754
    %2341 = vmatmul.mubr.bf16.gmra.mxu0 %v1753
    %v2342 = vpop.f32.mrf.mxu0
    %v2343 = vadd.f32 %v2054, %v2342
    %v2344 = vpop.f32.mrf.mxu0
    %v2345 = vpop.f32.mrf.mxu0
    %v2346 = vadd.f32 %v2057, %v2345
    %v2347 = vpop.f32.mrf.mxu0
    %2348 = vmatprep.mubr.bf16.mxu0 %v1758
    %2349 = vmatmul.mubr.bf16.gmra.mxu0 %v1757
    %v2350 = vpop.f32.mrf.mxu0
    %v2351 = vadd.f32 %v2062, %v2350
    %v2352 = vpop.f32.mrf.mxu0
    %v2353 = vpop.f32.mrf.mxu0
    %v2354 = vadd.f32 %v2065, %v2353
    %v2355 = vpop.f32.mrf.mxu0
    %2356 = vmatprep.mubr.bf16.mxu0 %v1762
    %2357 = vmatmul.mubr.bf16.gmra.mxu0 %v1761
    %v2358 = vpop.f32.mrf.mxu0
    %v2359 = vadd.f32 %v2070, %v2358
    %v2360 = vpop.f32.mrf.mxu0
    %v2361 = vpop.f32.mrf.mxu0
    %v2362 = vadd.f32 %v2073, %v2361
    %v2363 = vpop.f32.mrf.mxu0
    %2364 = vmatprep.mubr.bf16.mxu0 %v1766
    %2365 = vmatmul.mubr.bf16.gmra.mxu0 %v1765
    %v2366 = vpop.f32.mrf.mxu0
    %v2367 = vadd.f32 %v2078, %v2366
    %v2368 = vpop.f32.mrf.mxu0
    %v2369 = vpop.f32.mrf.mxu0
    %v2370 = vadd.f32 %v2081, %v2369
    %v2371 = vpop.f32.mrf.mxu0
    %2372 = vmatprep.mubr.bf16.mxu0 %v1770
    %2373 = vmatmul.mubr.bf16.gmra.mxu0 %v1769
    %v2374 = vpop.f32.mrf.mxu0
    %v2375 = vadd.f32 %v2086, %v2374
    %v2376 = vpop.f32.mrf.mxu0
    %v2377 = vpop.f32.mrf.mxu0
    %v2378 = vadd.f32 %v2089, %v2377
    %v2379 = vpop.f32.mrf.mxu0
    %2380 = vmatprep.mubr.bf16.mxu0 %v1774
    %2381 = vmatmul.mubr.bf16.gmra.mxu0 %v1773
    %v2382 = vpop.f32.mrf.mxu0
    %v2383 = vadd.f32 %v2094, %v2382
    %v2384 = vpop.f32.mrf.mxu0
    %v2385 = vpop.f32.mrf.mxu0
    %v2386 = vadd.f32 %v2097, %v2385
    %v2387 = vpop.f32.mrf.mxu0
    %2388 = vmatprep.mubr.bf16.mxu0 %v1778
    %2389 = vmatmul.mubr.bf16.gmra.mxu0 %v1777
    %v2390 = vpop.f32.mrf.mxu0
    %v2391 = vadd.f32 %v2102, %v2390
    %v2392 = vpop.f32.mrf.mxu0
    %v2393 = vpop.f32.mrf.mxu0
    %v2394 = vadd.f32 %v2105, %v2393
    %v2395 = vpop.f32.mrf.mxu0
    %2396 = vmatprep.mubr.bf16.mxu0 %v1782
    %2397 = vmatmul.mubr.bf16.gmra.mxu0 %v1781
    %v2398 = vpop.f32.mrf.mxu0
    %v2399 = vadd.f32 %v2110, %v2398
    %v2400 = vpop.f32.mrf.mxu0
    %v2401 = vpop.f32.mrf.mxu0
    %v2402 = vadd.f32 %v2113, %v2401
    %v2403 = vpop.f32.mrf.mxu0
    %2404 = vmatprep.mubr.bf16.mxu0 %v1786
    %2405 = vmatmul.mubr.bf16.gmra.mxu0 %v1785
    %v2406 = vpop.f32.mrf.mxu0
    %v2407 = vadd.f32 %v2118, %v2406
    %v2408 = vpop.f32.mrf.mxu0
    %v2409 = vpop.f32.mrf.mxu0
    %v2410 = vadd.f32 %v2121, %v2409
    %v2411 = vpop.f32.mrf.mxu0
    %2412 = vmatprep.mubr.bf16.mxu0 %v1790
    %2413 = vmatmul.mubr.bf16.gmra.mxu0 %v1789
    %v2414 = vpop.f32.mrf.mxu0
    %v2415 = vadd.f32 %v2126, %v2414
    %v2416 = vpop.f32.mrf.mxu0
    %v2417 = vpop.f32.mrf.mxu0
    %v2418 = vadd.f32 %v2129, %v2417
    %v2419 = vpop.f32.mrf.mxu0
    %2420 = vmatprep.mubr.bf16.mxu0 %v1794
    %2421 = vmatmul.mubr.bf16.gmra.mxu0 %v1793
    %v2422 = vpop.f32.mrf.mxu0
    %v2423 = vadd.f32 %v2134, %v2422
    %v2424 = vpop.f32.mrf.mxu0
    %v2425 = vpop.f32.mrf.mxu0
    %v2426 = vadd.f32 %v2137, %v2425
    %v2427 = vpop.f32.mrf.mxu0
    %2428 = vmatprep.mubr.bf16.mxu0 %v1798
    %2429 = vmatmul.mubr.bf16.gmra.mxu0 %v1797
    %v2430 = vpop.f32.mrf.mxu0
    %v2431 = vadd.f32 %v2142, %v2430
    %v2432 = vpop.f32.mrf.mxu0
    %v2433 = vpop.f32.mrf.mxu0
    %v2434 = vadd.f32 %v2145, %v2433
    %v2435 = vpop.f32.mrf.mxu0
    %2436 = vmatprep.mubr.bf16.mxu0 %v1802
    %2437 = vmatmul.mubr.bf16.gmra.mxu0 %v1801
    %v2438 = vpop.f32.mrf.mxu0
    %v2439 = vadd.f32 %v2150, %v2438
    %v2440 = vpop.f32.mrf.mxu0
    %v2441 = vpop.f32.mrf.mxu0
    %v2442 = vadd.f32 %v2153, %v2441
    %v2443 = vpop.f32.mrf.mxu0
    %2444 = vmatprep.mubr.bf16.mxu0 %v1806
    %2445 = vmatmul.mubr.bf16.gmra.mxu0 %v1805
    %v2446 = vpop.f32.mrf.mxu0
    %v2447 = vadd.f32 %v2158, %v2446
    %v2448 = vpop.f32.mrf.mxu0
    %v2449 = vpop.f32.mrf.mxu0
    %v2450 = vadd.f32 %v2161, %v2449
    %v2451 = vpop.f32.mrf.mxu0
    %2452 = vmatprep.mubr.bf16.mxu0 %v1810
    %2453 = vmatmul.mubr.bf16.gmra.mxu0 %v1809
    %v2454 = vpop.f32.mrf.mxu0
    %v2455 = vadd.f32 %v2166, %v2454
    %v2456 = vpop.f32.mrf.mxu0
    %v2457 = vpop.f32.mrf.mxu0
    %v2458 = vadd.f32 %v2169, %v2457
    %v2459 = vpop.f32.mrf.mxu0
    %2460 = vmatprep.mubr.bf16.mxu0 %v1814
    %2461 = vmatmul.mubr.bf16.gmra.mxu0 %v1813
    %v2462 = vpop.f32.mrf.mxu0
    %v2463 = vadd.f32 %v2174, %v2462
    %v2464 = vpop.f32.mrf.mxu0
    %v2465 = vpop.f32.mrf.mxu0
    %v2466 = vadd.f32 %v2177, %v2465
    %v2467 = vpop.f32.mrf.mxu0
    %2468 = vmatprep.mubr.bf16.mxu0 %v1818
    %2469 = vmatmul.mubr.bf16.gmra.mxu0 %v1817
    %v2470 = vpop.f32.mrf.mxu0
    %v2471 = vadd.f32 %v2182, %v2470
    %v2472 = vpop.f32.mrf.mxu0
    %v2473 = vpop.f32.mrf.mxu0
    %v2474 = vadd.f32 %v2185, %v2473
    %v2475 = vpop.f32.mrf.mxu0
    %2476 = vmatprep.mubr.bf16.mxu0 %v1822
    %2477 = vmatmul.mubr.bf16.gmra.mxu0 %v1821
    %v2478 = vpop.f32.mrf.mxu0
    %v2479 = vadd.f32 %v2190, %v2478
    %v2480 = vpop.f32.mrf.mxu0
    %v2481 = vpop.f32.mrf.mxu0
    %v2482 = vadd.f32 %v2193, %v2481
    %v2483 = vpop.f32.mrf.mxu0
    %2484 = vmatprep.mubr.bf16.mxu0 %v1826
    %2485 = vmatmul.mubr.bf16.gmra.mxu0 %v1825
    %v2486 = vpop.f32.mrf.mxu0
    %v2487 = vadd.f32 %v2198, %v2486
    %v2488 = vpop.f32.mrf.mxu0
    %v2489 = vpop.f32.mrf.mxu0
    %v2490 = vadd.f32 %v2201, %v2489
    %v2491 = vpop.f32.mrf.mxu0
    %2492 = vmatprep.mubr.bf16.mxu0 %v1830
    %2493 = vmatmul.mubr.bf16.gmra.mxu0 %v1829
    %v2494 = vpop.f32.mrf.mxu0
    %v2495 = vadd.f32 %v2206, %v2494
    %v2496 = vpop.f32.mrf.mxu0
    %v2497 = vpop.f32.mrf.mxu0
    %v2498 = vadd.f32 %v2209, %v2497
    %v2499 = vpop.f32.mrf.mxu0
    %2500 = vmatprep.mubr.bf16.mxu0 %v1834
    %2501 = vmatmul.mubr.bf16.gmra.mxu0 %v1833
    %v2502 = vpop.f32.mrf.mxu0
    %v2503 = vadd.f32 %v2214, %v2502
    %v2504 = vpop.f32.mrf.mxu0
    %v2505 = vpop.f32.mrf.mxu0
    %v2506 = vadd.f32 %v2217, %v2505
    %v2507 = vpop.f32.mrf.mxu0
    %2508 = vmatprep.mubr.bf16.mxu0 %v1838
    %2509 = vmatmul.mubr.bf16.gmra.mxu0 %v1837
    %v2510 = vpop.f32.mrf.mxu0
    %v2511 = vadd.f32 %v2222, %v2510
    %v2512 = vpop.f32.mrf.mxu0
    %v2513 = vpop.f32.mrf.mxu0
    %v2514 = vadd.f32 %v2225, %v2513
    %v2515 = vpop.f32.mrf.mxu0
    %2516 = vmatprep.mubr.bf16.mxu0 %v1842
    %2517 = vmatmul.mubr.bf16.gmra.mxu0 %v1841
    %v2518 = vpop.f32.mrf.mxu0
    %v2519 = vadd.f32 %v2230, %v2518
    %v2520 = vpop.f32.mrf.mxu0
    %v2521 = vpop.f32.mrf.mxu0
    %v2522 = vadd.f32 %v2233, %v2521
    %v2523 = vpop.f32.mrf.mxu0
    %2524 = vmatprep.mubr.bf16.mxu0 %v1846
    %2525 = vmatmul.mubr.bf16.gmra.mxu0 %v1845
    %v2526 = vpop.f32.mrf.mxu0
    %v2527 = vadd.f32 %v2238, %v2526
    %v2528 = vpop.f32.mrf.mxu0
    %v2529 = vpop.f32.mrf.mxu0
    %v2530 = vadd.f32 %v2241, %v2529
    %v2531 = vpop.f32.mrf.mxu0
    %2532 = vmatprep.mubr.bf16.mxu0 %v1850
    %2533 = vmatmul.mubr.bf16.gmra.mxu0 %v1849
    %v2534 = vpop.f32.mrf.mxu0
    %v2535 = vadd.f32 %v2246, %v2534
    %v2536 = vpop.f32.mrf.mxu0
    %v2537 = vpop.f32.mrf.mxu0
    %v2538 = vadd.f32 %v2249, %v2537
    %v2539 = vpop.f32.mrf.mxu0
    %2540 = vmatprep.mubr.bf16.mxu0 %v1854
    %2541 = vmatmul.mubr.bf16.gmra.mxu0 %v1853
    %v2542 = vpop.f32.mrf.mxu0
    %v2543 = vadd.f32 %v2254, %v2542
    %v2544 = vpop.f32.mrf.mxu0
    %v2545 = vpop.f32.mrf.mxu0
    %v2546 = vadd.f32 %v2257, %v2545
    %v2547 = vpop.f32.mrf.mxu0
    %2548 = vmatprep.mubr.bf16.mxu0 %v1858
    %2549 = vmatmul.mubr.bf16.gmra.mxu0 %v1857
    %v2550 = vpop.f32.mrf.mxu0
    %v2551 = vadd.f32 %v2262, %v2550
    %v2552 = vpop.f32.mrf.mxu0
    %v2553 = vpop.f32.mrf.mxu0
    %v2554 = vadd.f32 %v2265, %v2553
    %v2555 = vpop.f32.mrf.mxu0
    %2556 = vmatprep.mubr.bf16.mxu0 %v1862
    %2557 = vmatmul.mubr.bf16.gmra.mxu0 %v1861
    %v2558 = vpop.f32.mrf.mxu0
    %v2559 = vadd.f32 %v2270, %v2558
    %v2560 = vpop.f32.mrf.mxu0
    %v2561 = vpop.f32.mrf.mxu0
    %v2562 = vadd.f32 %v2273, %v2561
    %v2563 = vpop.f32.mrf.mxu0
    %2564 = vmatprep.mubr.bf16.mxu0 %v1866
    %2565 = vmatmul.mubr.bf16.gmra.mxu0 %v1865
    %v2566 = vpop.f32.mrf.mxu0
    %v2567 = vadd.f32 %v2278, %v2566
    %v2568 = vpop.f32.mrf.mxu0
    %v2569 = vpop.f32.mrf.mxu0
    %v2570 = vadd.f32 %v2281, %v2569
    %v2571 = vpop.f32.mrf.mxu0
    %2572 = vdwg.mxu0
    %s2573 = sld [smem:[#allocation2 + $0x1]]
    %v2574 = vstv %s2573
    %v2575 = vmul.f32 %v2574, %v2319
    %v2576 = vmul.f32 %v2574, %v2322
    %v2577 = vmul.f32 %v2574, %v2327
    %v2578 = vmul.f32 %v2574, %v2330
    %v2579 = vmul.f32 %v2574, %v2335
    %v2580 = vmul.f32 %v2574, %v2338
    %v2581 = vmul.f32 %v2574, %v2343
    %v2582 = vmul.f32 %v2574, %v2346
    %v2583 = vmul.f32 %v2574, %v2351
    %v2584 = vmul.f32 %v2574, %v2354
    %v2585 = vmul.f32 %v2574, %v2359
    %v2586 = vmul.f32 %v2574, %v2362
    %v2587 = vmul.f32 %v2574, %v2367
    %v2588 = vmul.f32 %v2574, %v2370
    %v2589 = vmul.f32 %v2574, %v2375
    %v2590 = vmul.f32 %v2574, %v2378
    %v2591 = vmul.f32 %v2574, %v2383
    %v2592 = vmul.f32 %v2574, %v2386
    %v2593 = vmul.f32 %v2574, %v2391
    %v2594 = vmul.f32 %v2574, %v2394
    %v2595 = vmul.f32 %v2574, %v2399
    %v2596 = vmul.f32 %v2574, %v2402
    %v2597 = vmul.f32 %v2574, %v2407
    %v2598 = vmul.f32 %v2574, %v2410
    %v2599 = vmul.f32 %v2574, %v2415
    %v2600 = vmul.f32 %v2574, %v2418
    %v2601 = vmul.f32 %v2574, %v2423
    %v2602 = vmul.f32 %v2574, %v2426
    %v2603 = vmul.f32 %v2574, %v2431
    %v2604 = vmul.f32 %v2574, %v2434
    %v2605 = vmul.f32 %v2574, %v2439
    %v2606 = vmul.f32 %v2574, %v2442
    %v2607 = vmul.f32 %v2574, %v2447
    %v2608 = vmul.f32 %v2574, %v2450
    %v2609 = vmul.f32 %v2574, %v2455
    %v2610 = vmul.f32 %v2574, %v2458
    %v2611 = vmul.f32 %v2574, %v2463
    %v2612 = vmul.f32 %v2574, %v2466
    %v2613 = vmul.f32 %v2574, %v2471
    %v2614 = vmul.f32 %v2574, %v2474
    %v2615 = vmul.f32 %v2574, %v2479
    %v2616 = vmul.f32 %v2574, %v2482
    %v2617 = vmul.f32 %v2574, %v2487
    %v2618 = vmul.f32 %v2574, %v2490
    %v2619 = vmul.f32 %v2574, %v2495
    %v2620 = vmul.f32 %v2574, %v2498
    %v2621 = vmul.f32 %v2574, %v2503
    %v2622 = vmul.f32 %v2574, %v2506
    %v2623 = vmul.f32 %v2574, %v2511
    %v2624 = vmul.f32 %v2574, %v2514
    %v2625 = vmul.f32 %v2574, %v2519
    %v2626 = vmul.f32 %v2574, %v2522
    %v2627 = vmul.f32 %v2574, %v2527
    %v2628 = vmul.f32 %v2574, %v2530
    %v2629 = vmul.f32 %v2574, %v2535
    %v2630 = vmul.f32 %v2574, %v2538
    %v2631 = vmul.f32 %v2574, %v2543
    %v2632 = vmul.f32 %v2574, %v2546
    %v2633 = vmul.f32 %v2574, %v2551
    %v2634 = vmul.f32 %v2574, %v2554
    %v2635 = vmul.f32 %v2574, %v2559
    %v2636 = vmul.f32 %v2574, %v2562
    %v2637 = vmul.f32 %v2574, %v2567
    %v2638 = vmul.f32 %v2574, %v2570
    %v2639 = vadd.f32 %v1131, %v2575
    %v2640 = vadd.f32 %v1132, %v2576
    %v2641 = vadd.f32 %v1133, %v2577
    %v2642 = vadd.f32 %v1134, %v2578
    %v2643 = vadd.f32 %v1135, %v2579
    %v2644 = vadd.f32 %v1136, %v2580
    %v2645 = vadd.f32 %v1137, %v2581
    %v2646 = vadd.f32 %v1138, %v2582
    %v2647 = vadd.f32 %v1139, %v2583
    %v2648 = vadd.f32 %v1140, %v2584
    %v2649 = vadd.f32 %v1141, %v2585
    %v2650 = vadd.f32 %v1142, %v2586
    %v2651 = vadd.f32 %v1143, %v2587
    %v2652 = vadd.f32 %v1144, %v2588
    %v2653 = vadd.f32 %v1145, %v2589
    %v2654 = vadd.f32 %v1146, %v2590
    %v2655 = vadd.f32 %v1147, %v2591
    %v2656 = vadd.f32 %v1148, %v2592
    %v2657 = vadd.f32 %v1149, %v2593
    %v2658 = vadd.f32 %v1150, %v2594
    %v2659 = vadd.f32 %v1151, %v2595
    %v2660 = vadd.f32 %v1152, %v2596
    %v2661 = vadd.f32 %v1153, %v2597
    %v2662 = vadd.f32 %v1154, %v2598
    %v2663 = vadd.f32 %v1155, %v2599
    %v2664 = vadd.f32 %v1156, %v2600
    %v2665 = vadd.f32 %v1157, %v2601
    %v2666 = vadd.f32 %v1158, %v2602
    %v2667 = vadd.f32 %v1159, %v2603
    %v2668 = vadd.f32 %v1160, %v2604
    %v2669 = vadd.f32 %v1161, %v2605
    %v2670 = vadd.f32 %v1162, %v2606
    %v2671 = vadd.f32 %v1163, %v2607
    %v2672 = vadd.f32 %v1164, %v2608
    %v2673 = vadd.f32 %v1165, %v2609
    %v2674 = vadd.f32 %v1166, %v2610
    %v2675 = vadd.f32 %v1167, %v2611
    %v2676 = vadd.f32 %v1168, %v2612
    %v2677 = vadd.f32 %v1169, %v2613
    %v2678 = vadd.f32 %v1170, %v2614
    %v2679 = vadd.f32 %v1171, %v2615
    %v2680 = vadd.f32 %v1172, %v2616
    %v2681 = vadd.f32 %v1173, %v2617
    %v2682 = vadd.f32 %v1174, %v2618
    %v2683 = vadd.f32 %v1175, %v2619
    %v2684 = vadd.f32 %v1176, %v2620
    %v2685 = vadd.f32 %v1177, %v2621
    %v2686 = vadd.f32 %v1178, %v2622
    %v2687 = vadd.f32 %v1179, %v2623
    %v2688 = vadd.f32 %v1180, %v2624
    %v2689 = vadd.f32 %v1181, %v2625
    %v2690 = vadd.f32 %v1182, %v2626
    %v2691 = vadd.f32 %v1183, %v2627
    %v2692 = vadd.f32 %v1184, %v2628
    %v2693 = vadd.f32 %v1185, %v2629
    %v2694 = vadd.f32 %v1186, %v2630
    %v2695 = vadd.f32 %v1187, %v2631
    %v2696 = vadd.f32 %v1188, %v2632
    %v2697 = vadd.f32 %v1189, %v2633
    %v2698 = vadd.f32 %v1190, %v2634
    %v2699 = vadd.f32 %v1191, %v2635
    %v2700 = vadd.f32 %v1192, %v2636
    %v2701 = vadd.f32 %v1193, %v2637
    %v2702 = vadd.f32 %v1194, %v2638
    %v2703 = vpack.c.bf16 %v2322, %v2319
    %v2704 = vpack.c.bf16 %v2330, %v2327
    %v2705 = vpack.c.bf16 %v2338, %v2335
    %v2706 = vpack.c.bf16 %v2346, %v2343
    %v2707 = vpack.c.bf16 %v2354, %v2351
    %v2708 = vpack.c.bf16 %v2362, %v2359
    %v2709 = vpack.c.bf16 %v2370, %v2367
    %v2710 = vpack.c.bf16 %v2378, %v2375
    %v2711 = vpack.c.bf16 %v2386, %v2383
    %v2712 = vpack.c.bf16 %v2394, %v2391
    %v2713 = vpack.c.bf16 %v2402, %v2399
    %v2714 = vpack.c.bf16 %v2410, %v2407
    %v2715 = vpack.c.bf16 %v2418, %v2415
    %v2716 = vpack.c.bf16 %v2426, %v2423
    %v2717 = vpack.c.bf16 %v2434, %v2431
    %v2718 = vpack.c.bf16 %v2442, %v2439
    %v2719 = vpack.c.bf16 %v2450, %v2447
    %v2720 = vpack.c.bf16 %v2458, %v2455
    %v2721 = vpack.c.bf16 %v2466, %v2463
    %v2722 = vpack.c.bf16 %v2474, %v2471
    %v2723 = vpack.c.bf16 %v2482, %v2479
    %v2724 = vpack.c.bf16 %v2490, %v2487
    %v2725 = vpack.c.bf16 %v2498, %v2495
    %v2726 = vpack.c.bf16 %v2506, %v2503
    %v2727 = vpack.c.bf16 %v2514, %v2511
    %v2728 = vpack.c.bf16 %v2522, %v2519
    %v2729 = vpack.c.bf16 %v2530, %v2527
    %v2730 = vpack.c.bf16 %v2538, %v2535
    %v2731 = vpack.c.bf16 %v2546, %v2543
    %v2732 = vpack.c.bf16 %v2554, %v2551
    %v2733 = vpack.c.bf16 %v2562, %v2559
    %v2734 = vpack.c.bf16 %v2570, %v2567
    %2735 = vmatprep.subr.bf16.mxu0 0
    %2736 = vmatpush1.bf16.msra.mxu0 %v2710
    %2737 = vmatprep.subr.bf16.mxu0 0
    %2738 = vmatpush1.bf16.msra.mxu0 %v2709
    %2739 = vmatprep.subr.bf16.mxu0 0
    %2740 = vmatpush1.bf16.msra.mxu0 %v2708
    %2741 = vmatprep.subr.bf16.mxu0 0
    %2742 = vmatpush1.bf16.msra.mxu0 %v2707
    %2743 = vmatprep.subr.bf16.mxu0 0
    %2744 = vmatpush1.bf16.msra.mxu0 %v2706
    %2745 = vmatprep.subr.bf16.mxu0 0
    %2746 = vmatpush1.bf16.msra.mxu0 %v2705
    %2747 = vmatprep.subr.bf16.mxu0 0
    %2748 = vmatpush1.bf16.msra.mxu0 %v2704
    %2749 = vmatprep.subr.bf16.mxu0 0
    %2750 = vmatpush1.bf16.msra.mxu0 %v2703
    %2751 = vmatprep.subr.bf16.mxu0 0
    %2752 = vmatpush2.bf16.msra.mxu0 %v2718
    %2753 = vmatprep.subr.bf16.mxu0 0
    %2754 = vmatpush2.bf16.msra.mxu0 %v2717
    %2755 = vmatprep.subr.bf16.mxu0 0
    %2756 = vmatpush2.bf16.msra.mxu0 %v2716
    %2757 = vmatprep.subr.bf16.mxu0 0
    %2758 = vmatpush2.bf16.msra.mxu0 %v2715
    %2759 = vmatprep.subr.bf16.mxu0 0
    %2760 = vmatpush2.bf16.msra.mxu0 %v2714
    %2761 = vmatprep.subr.bf16.mxu0 0
    %2762 = vmatpush2.bf16.msra.mxu0 %v2713
    %2763 = vmatprep.subr.bf16.mxu0 0
    %2764 = vmatpush2.bf16.msra.mxu0 %v2712
    %2765 = vmatprep.subr.bf16.mxu0 0
    %2766 = vmatpush2.bf16.msra.mxu0 %v2711
    %2767 = vmatprep.mubr.bf16.mxu0 %v1740
    %2768 = vmatmul.mubr.bf16.gmra.mxu0 %v1739
    %v2769 = vpop.f32.mrf.mxu0
    %v2770 = vadd.f32 0.0, %v2769
    %v2771 = vpop.f32.mrf.mxu0
    %v2772 = vpop.f32.mrf.mxu0
    %v2773 = vadd.f32 0.0, %v2772
    %v2774 = vpop.f32.mrf.mxu0
    %2775 = vmatprep.mubr.bf16.mxu0 %v1744
    %2776 = vmatmul.mubr.bf16.gmra.mxu0 %v1743
    %v2777 = vpop.f32.mrf.mxu0
    %v2778 = vadd.f32 0.0, %v2777
    %v2779 = vpop.f32.mrf.mxu0
    %v2780 = vpop.f32.mrf.mxu0
    %v2781 = vadd.f32 0.0, %v2780
    %v2782 = vpop.f32.mrf.mxu0
    %2783 = vmatprep.mubr.bf16.mxu0 %v1748
    %2784 = vmatmul.mubr.bf16.gmra.mxu0 %v1747
    %v2785 = vpop.f32.mrf.mxu0
    %v2786 = vadd.f32 0.0, %v2785
    %v2787 = vpop.f32.mrf.mxu0
    %v2788 = vpop.f32.mrf.mxu0
    %v2789 = vadd.f32 0.0, %v2788
    %v2790 = vpop.f32.mrf.mxu0
    %2791 = vmatprep.mubr.bf16.mxu0 %v1752
    %2792 = vmatmul.mubr.bf16.gmra.mxu0 %v1751
    %v2793 = vpop.f32.mrf.mxu0
    %v2794 = vadd.f32 0.0, %v2793
    %v2795 = vpop.f32.mrf.mxu0
    %v2796 = vpop.f32.mrf.mxu0
    %v2797 = vadd.f32 0.0, %v2796
    %v2798 = vpop.f32.mrf.mxu0
    %2799 = vmatprep.mubr.bf16.mxu0 %v1756
    %2800 = vmatmul.mubr.bf16.gmra.mxu0 %v1755
    %v2801 = vpop.f32.mrf.mxu0
    %v2802 = vadd.f32 0.0, %v2801
    %v2803 = vpop.f32.mrf.mxu0
    %v2804 = vpop.f32.mrf.mxu0
    %v2805 = vadd.f32 0.0, %v2804
    %v2806 = vpop.f32.mrf.mxu0
    %2807 = vmatprep.mubr.bf16.mxu0 %v1760
    %2808 = vmatmul.mubr.bf16.gmra.mxu0 %v1759
    %v2809 = vpop.f32.mrf.mxu0
    %v2810 = vadd.f32 0.0, %v2809
    %v2811 = vpop.f32.mrf.mxu0
    %v2812 = vpop.f32.mrf.mxu0
    %v2813 = vadd.f32 0.0, %v2812
    %v2814 = vpop.f32.mrf.mxu0
    %2815 = vmatprep.mubr.bf16.mxu0 %v1764
    %2816 = vmatmul.mubr.bf16.gmra.mxu0 %v1763
    %v2817 = vpop.f32.mrf.mxu0
    %v2818 = vadd.f32 0.0, %v2817
    %v2819 = vpop.f32.mrf.mxu0
    %v2820 = vpop.f32.mrf.mxu0
    %v2821 = vadd.f32 0.0, %v2820
    %v2822 = vpop.f32.mrf.mxu0
    %2823 = vmatprep.mubr.bf16.mxu0 %v1768
    %2824 = vmatmul.mubr.bf16.gmra.mxu0 %v1767
    %v2825 = vpop.f32.mrf.mxu0
    %v2826 = vadd.f32 0.0, %v2825
    %v2827 = vpop.f32.mrf.mxu0
    %v2828 = vpop.f32.mrf.mxu0
    %v2829 = vadd.f32 0.0, %v2828
    %v2830 = vpop.f32.mrf.mxu0
    %2831 = vmatprep.mubr.bf16.mxu0 %v1772
    %2832 = vmatmul.mubr.bf16.gmra.mxu0 %v1771
    %v2833 = vpop.f32.mrf.mxu0
    %v2834 = vadd.f32 0.0, %v2833
    %v2835 = vpop.f32.mrf.mxu0
    %v2836 = vpop.f32.mrf.mxu0
    %v2837 = vadd.f32 0.0, %v2836
    %v2838 = vpop.f32.mrf.mxu0
    %2839 = vmatprep.mubr.bf16.mxu0 %v1776
    %2840 = vmatmul.mubr.bf16.gmra.mxu0 %v1775
    %v2841 = vpop.f32.mrf.mxu0
    %v2842 = vadd.f32 0.0, %v2841
    %v2843 = vpop.f32.mrf.mxu0
    %v2844 = vpop.f32.mrf.mxu0
    %v2845 = vadd.f32 0.0, %v2844
    %v2846 = vpop.f32.mrf.mxu0
    %2847 = vmatprep.mubr.bf16.mxu0 %v1780
    %2848 = vmatmul.mubr.bf16.gmra.mxu0 %v1779
    %v2849 = vpop.f32.mrf.mxu0
    %v2850 = vadd.f32 0.0, %v2849
    %v2851 = vpop.f32.mrf.mxu0
    %v2852 = vpop.f32.mrf.mxu0
    %v2853 = vadd.f32 0.0, %v2852
    %v2854 = vpop.f32.mrf.mxu0
    %2855 = vmatprep.mubr.bf16.mxu0 %v1784
    %2856 = vmatmul.mubr.bf16.gmra.mxu0 %v1783
    %v2857 = vpop.f32.mrf.mxu0
    %v2858 = vadd.f32 0.0, %v2857
    %v2859 = vpop.f32.mrf.mxu0
    %v2860 = vpop.f32.mrf.mxu0
    %v2861 = vadd.f32 0.0, %v2860
    %v2862 = vpop.f32.mrf.mxu0
    %2863 = vmatprep.mubr.bf16.mxu0 %v1788
    %2864 = vmatmul.mubr.bf16.gmra.mxu0 %v1787
    %v2865 = vpop.f32.mrf.mxu0
    %v2866 = vadd.f32 0.0, %v2865
    %v2867 = vpop.f32.mrf.mxu0
    %v2868 = vpop.f32.mrf.mxu0
    %v2869 = vadd.f32 0.0, %v2868
    %v2870 = vpop.f32.mrf.mxu0
    %2871 = vmatprep.mubr.bf16.mxu0 %v1792
    %2872 = vmatmul.mubr.bf16.gmra.mxu0 %v1791
    %v2873 = vpop.f32.mrf.mxu0
    %v2874 = vadd.f32 0.0, %v2873
    %v2875 = vpop.f32.mrf.mxu0
    %v2876 = vpop.f32.mrf.mxu0
    %v2877 = vadd.f32 0.0, %v2876
    %v2878 = vpop.f32.mrf.mxu0
    %2879 = vmatprep.mubr.bf16.mxu0 %v1796
    %2880 = vmatmul.mubr.bf16.gmra.mxu0 %v1795
    %v2881 = vpop.f32.mrf.mxu0
    %v2882 = vadd.f32 0.0, %v2881
    %v2883 = vpop.f32.mrf.mxu0
    %v2884 = vpop.f32.mrf.mxu0
    %v2885 = vadd.f32 0.0, %v2884
    %v2886 = vpop.f32.mrf.mxu0
    %2887 = vmatprep.mubr.bf16.mxu0 %v1800
    %2888 = vmatmul.mubr.bf16.gmra.mxu0 %v1799
    %v2889 = vpop.f32.mrf.mxu0
    %v2890 = vadd.f32 0.0, %v2889
    %v2891 = vpop.f32.mrf.mxu0
    %v2892 = vpop.f32.mrf.mxu0
    %v2893 = vadd.f32 0.0, %v2892
    %v2894 = vpop.f32.mrf.mxu0
    %2895 = vmatprep.mubr.bf16.mxu0 %v1804
    %2896 = vmatmul.mubr.bf16.gmra.mxu0 %v1803
    %v2897 = vpop.f32.mrf.mxu0
    %v2898 = vadd.f32 0.0, %v2897
    %v2899 = vpop.f32.mrf.mxu0
    %v2900 = vpop.f32.mrf.mxu0
    %v2901 = vadd.f32 0.0, %v2900
    %v2902 = vpop.f32.mrf.mxu0
    %2903 = vmatprep.mubr.bf16.mxu0 %v1808
    %2904 = vmatmul.mubr.bf16.gmra.mxu0 %v1807
    %v2905 = vpop.f32.mrf.mxu0
    %v2906 = vadd.f32 0.0, %v2905
    %v2907 = vpop.f32.mrf.mxu0
    %v2908 = vpop.f32.mrf.mxu0
    %v2909 = vadd.f32 0.0, %v2908
    %v2910 = vpop.f32.mrf.mxu0
    %2911 = vmatprep.mubr.bf16.mxu0 %v1812
    %2912 = vmatmul.mubr.bf16.gmra.mxu0 %v1811
    %v2913 = vpop.f32.mrf.mxu0
    %v2914 = vadd.f32 0.0, %v2913
    %v2915 = vpop.f32.mrf.mxu0
    %v2916 = vpop.f32.mrf.mxu0
    %v2917 = vadd.f32 0.0, %v2916
    %v2918 = vpop.f32.mrf.mxu0
    %2919 = vmatprep.mubr.bf16.mxu0 %v1816
    %2920 = vmatmul.mubr.bf16.gmra.mxu0 %v1815
    %v2921 = vpop.f32.mrf.mxu0
    %v2922 = vadd.f32 0.0, %v2921
    %v2923 = vpop.f32.mrf.mxu0
    %v2924 = vpop.f32.mrf.mxu0
    %v2925 = vadd.f32 0.0, %v2924
    %v2926 = vpop.f32.mrf.mxu0
    %2927 = vmatprep.mubr.bf16.mxu0 %v1820
    %2928 = vmatmul.mubr.bf16.gmra.mxu0 %v1819
    %v2929 = vpop.f32.mrf.mxu0
    %v2930 = vadd.f32 0.0, %v2929
    %v2931 = vpop.f32.mrf.mxu0
    %v2932 = vpop.f32.mrf.mxu0
    %v2933 = vadd.f32 0.0, %v2932
    %v2934 = vpop.f32.mrf.mxu0
    %2935 = vmatprep.mubr.bf16.mxu0 %v1824
    %2936 = vmatmul.mubr.bf16.gmra.mxu0 %v1823
    %v2937 = vpop.f32.mrf.mxu0
    %v2938 = vadd.f32 0.0, %v2937
    %v2939 = vpop.f32.mrf.mxu0
    %v2940 = vpop.f32.mrf.mxu0
    %v2941 = vadd.f32 0.0, %v2940
    %v2942 = vpop.f32.mrf.mxu0
    %2943 = vmatprep.mubr.bf16.mxu0 %v1828
    %2944 = vmatmul.mubr.bf16.gmra.mxu0 %v1827
    %v2945 = vpop.f32.mrf.mxu0
    %v2946 = vadd.f32 0.0, %v2945
    %v2947 = vpop.f32.mrf.mxu0
    %v2948 = vpop.f32.mrf.mxu0
    %v2949 = vadd.f32 0.0, %v2948
    %v2950 = vpop.f32.mrf.mxu0
    %2951 = vmatprep.mubr.bf16.mxu0 %v1832
    %2952 = vmatmul.mubr.bf16.gmra.mxu0 %v1831
    %v2953 = vpop.f32.mrf.mxu0
    %v2954 = vadd.f32 0.0, %v2953
    %v2955 = vpop.f32.mrf.mxu0
    %v2956 = vpop.f32.mrf.mxu0
    %v2957 = vadd.f32 0.0, %v2956
    %v2958 = vpop.f32.mrf.mxu0
    %2959 = vmatprep.mubr.bf16.mxu0 %v1836
    %2960 = vmatmul.mubr.bf16.gmra.mxu0 %v1835
    %v2961 = vpop.f32.mrf.mxu0
    %v2962 = vadd.f32 0.0, %v2961
    %v2963 = vpop.f32.mrf.mxu0
    %v2964 = vpop.f32.mrf.mxu0
    %v2965 = vadd.f32 0.0, %v2964
    %v2966 = vpop.f32.mrf.mxu0
    %2967 = vmatprep.mubr.bf16.mxu0 %v1840
    %2968 = vmatmul.mubr.bf16.gmra.mxu0 %v1839
    %v2969 = vpop.f32.mrf.mxu0
    %v2970 = vadd.f32 0.0, %v2969
    %v2971 = vpop.f32.mrf.mxu0
    %v2972 = vpop.f32.mrf.mxu0
    %v2973 = vadd.f32 0.0, %v2972
    %v2974 = vpop.f32.mrf.mxu0
    %2975 = vmatprep.mubr.bf16.mxu0 %v1844
    %2976 = vmatmul.mubr.bf16.gmra.mxu0 %v1843
    %v2977 = vpop.f32.mrf.mxu0
    %v2978 = vadd.f32 0.0, %v2977
    %v2979 = vpop.f32.mrf.mxu0
    %v2980 = vpop.f32.mrf.mxu0
    %v2981 = vadd.f32 0.0, %v2980
    %v2982 = vpop.f32.mrf.mxu0
    %2983 = vmatprep.mubr.bf16.mxu0 %v1848
    %2984 = vmatmul.mubr.bf16.gmra.mxu0 %v1847
    %v2985 = vpop.f32.mrf.mxu0
    %v2986 = vadd.f32 0.0, %v2985
    %v2987 = vpop.f32.mrf.mxu0
    %v2988 = vpop.f32.mrf.mxu0
    %v2989 = vadd.f32 0.0, %v2988
    %v2990 = vpop.f32.mrf.mxu0
    %2991 = vmatprep.mubr.bf16.mxu0 %v1852
    %2992 = vmatmul.mubr.bf16.gmra.mxu0 %v1851
    %v2993 = vpop.f32.mrf.mxu0
    %v2994 = vadd.f32 0.0, %v2993
    %v2995 = vpop.f32.mrf.mxu0
    %v2996 = vpop.f32.mrf.mxu0
    %v2997 = vadd.f32 0.0, %v2996
    %v2998 = vpop.f32.mrf.mxu0
    %2999 = vmatprep.mubr.bf16.mxu0 %v1856
    %3000 = vmatmul.mubr.bf16.gmra.mxu0 %v1855
    %v3001 = vpop.f32.mrf.mxu0
    %v3002 = vadd.f32 0.0, %v3001
    %v3003 = vpop.f32.mrf.mxu0
    %v3004 = vpop.f32.mrf.mxu0
    %v3005 = vadd.f32 0.0, %v3004
    %v3006 = vpop.f32.mrf.mxu0
    %3007 = vmatprep.mubr.bf16.mxu0 %v1860
    %3008 = vmatmul.mubr.bf16.gmra.mxu0 %v1859
    %v3009 = vpop.f32.mrf.mxu0
    %v3010 = vadd.f32 0.0, %v3009
    %v3011 = vpop.f32.mrf.mxu0
    %v3012 = vpop.f32.mrf.mxu0
    %v3013 = vadd.f32 0.0, %v3012
    %v3014 = vpop.f32.mrf.mxu0
    %3015 = vmatprep.mubr.bf16.mxu0 %v1864
    %3016 = vmatmul.mubr.bf16.gmra.mxu0 %v1863
    %v3017 = vpop.f32.mrf.mxu0
    %v3018 = vadd.f32 0.0, %v3017
    %v3019 = vpop.f32.mrf.mxu0
    %v3020 = vpop.f32.mrf.mxu0
    %v3021 = vadd.f32 0.0, %v3020
    %v3022 = vpop.f32.mrf.mxu0
    %3023 = vdwg.mxu0
    %3024 = vmatprep.subr.bf16.mxu0 0
    %3025 = vmatpush1.bf16.msra.mxu0 %v2726
    %3026 = vmatprep.subr.bf16.mxu0 0
    %3027 = vmatpush1.bf16.msra.mxu0 %v2725
    %3028 = vmatprep.subr.bf16.mxu0 0
    %3029 = vmatpush1.bf16.msra.mxu0 %v2724
    %3030 = vmatprep.subr.bf16.mxu0 0
    %3031 = vmatpush1.bf16.msra.mxu0 %v2723
    %3032 = vmatprep.subr.bf16.mxu0 0
    %3033 = vmatpush1.bf16.msra.mxu0 %v2722
    %3034 = vmatprep.subr.bf16.mxu0 0
    %3035 = vmatpush1.bf16.msra.mxu0 %v2721
    %3036 = vmatprep.subr.bf16.mxu0 0
    %3037 = vmatpush1.bf16.msra.mxu0 %v2720
    %3038 = vmatprep.subr.bf16.mxu0 0
    %3039 = vmatpush1.bf16.msra.mxu0 %v2719
    %3040 = vmatprep.subr.bf16.mxu0 0
    %3041 = vmatpush2.bf16.msra.mxu0 %v2734
    %3042 = vmatprep.subr.bf16.mxu0 0
    %3043 = vmatpush2.bf16.msra.mxu0 %v2733
    %3044 = vmatprep.subr.bf16.mxu0 0
    %3045 = vmatpush2.bf16.msra.mxu0 %v2732
    %3046 = vmatprep.subr.bf16.mxu0 0
    %3047 = vmatpush2.bf16.msra.mxu0 %v2731
    %3048 = vmatprep.subr.bf16.mxu0 0
    %3049 = vmatpush2.bf16.msra.mxu0 %v2730
    %3050 = vmatprep.subr.bf16.mxu0 0
    %3051 = vmatpush2.bf16.msra.mxu0 %v2729
    %3052 = vmatprep.subr.bf16.mxu0 0
    %3053 = vmatpush2.bf16.msra.mxu0 %v2728
    %3054 = vmatprep.subr.bf16.mxu0 0
    %3055 = vmatpush2.bf16.msra.mxu0 %v2727
    %3056 = vmatprep.mubr.bf16.mxu0 %v1742
    %3057 = vmatmul.mubr.bf16.gmra.mxu0 %v1741
    %v3058 = vpop.f32.mrf.mxu0
    %v3059 = vadd.f32 %v2770, %v3058
    %v3060 = vpop.f32.mrf.mxu0
    %v3061 = vpop.f32.mrf.mxu0
    %v3062 = vadd.f32 %v2773, %v3061
    %v3063 = vpop.f32.mrf.mxu0
    %3064 = vmatprep.mubr.bf16.mxu0 %v1746
    %3065 = vmatmul.mubr.bf16.gmra.mxu0 %v1745
    %v3066 = vpop.f32.mrf.mxu0
    %v3067 = vadd.f32 %v2778, %v3066
    %v3068 = vpop.f32.mrf.mxu0
    %v3069 = vpop.f32.mrf.mxu0
    %v3070 = vadd.f32 %v2781, %v3069
    %v3071 = vpop.f32.mrf.mxu0
    %3072 = vmatprep.mubr.bf16.mxu0 %v1750
    %3073 = vmatmul.mubr.bf16.gmra.mxu0 %v1749
    %v3074 = vpop.f32.mrf.mxu0
    %v3075 = vadd.f32 %v2786, %v3074
    %v3076 = vpop.f32.mrf.mxu0
    %v3077 = vpop.f32.mrf.mxu0
    %v3078 = vadd.f32 %v2789, %v3077
    %v3079 = vpop.f32.mrf.mxu0
    %3080 = vmatprep.mubr.bf16.mxu0 %v1754
    %3081 = vmatmul.mubr.bf16.gmra.mxu0 %v1753
    %v3082 = vpop.f32.mrf.mxu0
    %v3083 = vadd.f32 %v2794, %v3082
    %v3084 = vpop.f32.mrf.mxu0
    %v3085 = vpop.f32.mrf.mxu0
    %v3086 = vadd.f32 %v2797, %v3085
    %v3087 = vpop.f32.mrf.mxu0
    %3088 = vmatprep.mubr.bf16.mxu0 %v1758
    %3089 = vmatmul.mubr.bf16.gmra.mxu0 %v1757
    %v3090 = vpop.f32.mrf.mxu0
    %v3091 = vadd.f32 %v2802, %v3090
    %v3092 = vpop.f32.mrf.mxu0
    %v3093 = vpop.f32.mrf.mxu0
    %v3094 = vadd.f32 %v2805, %v3093
    %v3095 = vpop.f32.mrf.mxu0
    %3096 = vmatprep.mubr.bf16.mxu0 %v1762
    %3097 = vmatmul.mubr.bf16.gmra.mxu0 %v1761
    %v3098 = vpop.f32.mrf.mxu0
    %v3099 = vadd.f32 %v2810, %v3098
    %v3100 = vpop.f32.mrf.mxu0
    %v3101 = vpop.f32.mrf.mxu0
    %v3102 = vadd.f32 %v2813, %v3101
    %v3103 = vpop.f32.mrf.mxu0
    %3104 = vmatprep.mubr.bf16.mxu0 %v1766
    %3105 = vmatmul.mubr.bf16.gmra.mxu0 %v1765
    %v3106 = vpop.f32.mrf.mxu0
    %v3107 = vadd.f32 %v2818, %v3106
    %v3108 = vpop.f32.mrf.mxu0
    %v3109 = vpop.f32.mrf.mxu0
    %v3110 = vadd.f32 %v2821, %v3109
    %v3111 = vpop.f32.mrf.mxu0
    %3112 = vmatprep.mubr.bf16.mxu0 %v1770
    %3113 = vmatmul.mubr.bf16.gmra.mxu0 %v1769
    %v3114 = vpop.f32.mrf.mxu0
    %v3115 = vadd.f32 %v2826, %v3114
    %v3116 = vpop.f32.mrf.mxu0
    %v3117 = vpop.f32.mrf.mxu0
    %v3118 = vadd.f32 %v2829, %v3117
    %v3119 = vpop.f32.mrf.mxu0
    %3120 = vmatprep.mubr.bf16.mxu0 %v1774
    %3121 = vmatmul.mubr.bf16.gmra.mxu0 %v1773
    %v3122 = vpop.f32.mrf.mxu0
    %v3123 = vadd.f32 %v2834, %v3122
    %v3124 = vpop.f32.mrf.mxu0
    %v3125 = vpop.f32.mrf.mxu0
    %v3126 = vadd.f32 %v2837, %v3125
    %v3127 = vpop.f32.mrf.mxu0
    %3128 = vmatprep.mubr.bf16.mxu0 %v1778
    %3129 = vmatmul.mubr.bf16.gmra.mxu0 %v1777
    %v3130 = vpop.f32.mrf.mxu0
    %v3131 = vadd.f32 %v2842, %v3130
    %v3132 = vpop.f32.mrf.mxu0
    %v3133 = vpop.f32.mrf.mxu0
    %v3134 = vadd.f32 %v2845, %v3133
    %v3135 = vpop.f32.mrf.mxu0
    %3136 = vmatprep.mubr.bf16.mxu0 %v1782
    %3137 = vmatmul.mubr.bf16.gmra.mxu0 %v1781
    %v3138 = vpop.f32.mrf.mxu0
    %v3139 = vadd.f32 %v2850, %v3138
    %v3140 = vpop.f32.mrf.mxu0
    %v3141 = vpop.f32.mrf.mxu0
    %v3142 = vadd.f32 %v2853, %v3141
    %v3143 = vpop.f32.mrf.mxu0
    %3144 = vmatprep.mubr.bf16.mxu0 %v1786
    %3145 = vmatmul.mubr.bf16.gmra.mxu0 %v1785
    %v3146 = vpop.f32.mrf.mxu0
    %v3147 = vadd.f32 %v2858, %v3146
    %v3148 = vpop.f32.mrf.mxu0
    %v3149 = vpop.f32.mrf.mxu0
    %v3150 = vadd.f32 %v2861, %v3149
    %v3151 = vpop.f32.mrf.mxu0
    %3152 = vmatprep.mubr.bf16.mxu0 %v1790
    %3153 = vmatmul.mubr.bf16.gmra.mxu0 %v1789
    %v3154 = vpop.f32.mrf.mxu0
    %v3155 = vadd.f32 %v2866, %v3154
    %v3156 = vpop.f32.mrf.mxu0
    %v3157 = vpop.f32.mrf.mxu0
    %v3158 = vadd.f32 %v2869, %v3157
    %v3159 = vpop.f32.mrf.mxu0
    %3160 = vmatprep.mubr.bf16.mxu0 %v1794
    %3161 = vmatmul.mubr.bf16.gmra.mxu0 %v1793
    %v3162 = vpop.f32.mrf.mxu0
    %v3163 = vadd.f32 %v2874, %v3162
    %v3164 = vpop.f32.mrf.mxu0
    %v3165 = vpop.f32.mrf.mxu0
    %v3166 = vadd.f32 %v2877, %v3165
    %v3167 = vpop.f32.mrf.mxu0
    %3168 = vmatprep.mubr.bf16.mxu0 %v1798
    %3169 = vmatmul.mubr.bf16.gmra.mxu0 %v1797
    %v3170 = vpop.f32.mrf.mxu0
    %v3171 = vadd.f32 %v2882, %v3170
    %v3172 = vpop.f32.mrf.mxu0
    %v3173 = vpop.f32.mrf.mxu0
    %v3174 = vadd.f32 %v2885, %v3173
    %v3175 = vpop.f32.mrf.mxu0
    %3176 = vmatprep.mubr.bf16.mxu0 %v1802
    %3177 = vmatmul.mubr.bf16.gmra.mxu0 %v1801
    %v3178 = vpop.f32.mrf.mxu0
    %v3179 = vadd.f32 %v2890, %v3178
    %v3180 = vpop.f32.mrf.mxu0
    %v3181 = vpop.f32.mrf.mxu0
    %v3182 = vadd.f32 %v2893, %v3181
    %v3183 = vpop.f32.mrf.mxu0
    %3184 = vmatprep.mubr.bf16.mxu0 %v1806
    %3185 = vmatmul.mubr.bf16.gmra.mxu0 %v1805
    %v3186 = vpop.f32.mrf.mxu0
    %v3187 = vadd.f32 %v2898, %v3186
    %v3188 = vpop.f32.mrf.mxu0
    %v3189 = vpop.f32.mrf.mxu0
    %v3190 = vadd.f32 %v2901, %v3189
    %v3191 = vpop.f32.mrf.mxu0
    %3192 = vmatprep.mubr.bf16.mxu0 %v1810
    %3193 = vmatmul.mubr.bf16.gmra.mxu0 %v1809
    %v3194 = vpop.f32.mrf.mxu0
    %v3195 = vadd.f32 %v2906, %v3194
    %v3196 = vpop.f32.mrf.mxu0
    %v3197 = vpop.f32.mrf.mxu0
    %v3198 = vadd.f32 %v2909, %v3197
    %v3199 = vpop.f32.mrf.mxu0
    %3200 = vmatprep.mubr.bf16.mxu0 %v1814
    %3201 = vmatmul.mubr.bf16.gmra.mxu0 %v1813
    %v3202 = vpop.f32.mrf.mxu0
    %v3203 = vadd.f32 %v2914, %v3202
    %v3204 = vpop.f32.mrf.mxu0
    %v3205 = vpop.f32.mrf.mxu0
    %v3206 = vadd.f32 %v2917, %v3205
    %v3207 = vpop.f32.mrf.mxu0
    %3208 = vmatprep.mubr.bf16.mxu0 %v1818
    %3209 = vmatmul.mubr.bf16.gmra.mxu0 %v1817
    %v3210 = vpop.f32.mrf.mxu0
    %v3211 = vadd.f32 %v2922, %v3210
    %v3212 = vpop.f32.mrf.mxu0
    %v3213 = vpop.f32.mrf.mxu0
    %v3214 = vadd.f32 %v2925, %v3213
    %v3215 = vpop.f32.mrf.mxu0
    %3216 = vmatprep.mubr.bf16.mxu0 %v1822
    %3217 = vmatmul.mubr.bf16.gmra.mxu0 %v1821
    %v3218 = vpop.f32.mrf.mxu0
    %v3219 = vadd.f32 %v2930, %v3218
    %v3220 = vpop.f32.mrf.mxu0
    %v3221 = vpop.f32.mrf.mxu0
    %v3222 = vadd.f32 %v2933, %v3221
    %v3223 = vpop.f32.mrf.mxu0
    %3224 = vmatprep.mubr.bf16.mxu0 %v1826
    %3225 = vmatmul.mubr.bf16.gmra.mxu0 %v1825
    %v3226 = vpop.f32.mrf.mxu0
    %v3227 = vadd.f32 %v2938, %v3226
    %v3228 = vpop.f32.mrf.mxu0
    %v3229 = vpop.f32.mrf.mxu0
    %v3230 = vadd.f32 %v2941, %v3229
    %v3231 = vpop.f32.mrf.mxu0
    %3232 = vmatprep.mubr.bf16.mxu0 %v1830
    %3233 = vmatmul.mubr.bf16.gmra.mxu0 %v1829
    %v3234 = vpop.f32.mrf.mxu0
    %v3235 = vadd.f32 %v2946, %v3234
    %v3236 = vpop.f32.mrf.mxu0
    %v3237 = vpop.f32.mrf.mxu0
    %v3238 = vadd.f32 %v2949, %v3237
    %v3239 = vpop.f32.mrf.mxu0
    %3240 = vmatprep.mubr.bf16.mxu0 %v1834
    %3241 = vmatmul.mubr.bf16.gmra.mxu0 %v1833
    %v3242 = vpop.f32.mrf.mxu0
    %v3243 = vadd.f32 %v2954, %v3242
    %v3244 = vpop.f32.mrf.mxu0
    %v3245 = vpop.f32.mrf.mxu0
    %v3246 = vadd.f32 %v2957, %v3245
    %v3247 = vpop.f32.mrf.mxu0
    %3248 = vmatprep.mubr.bf16.mxu0 %v1838
    %3249 = vmatmul.mubr.bf16.gmra.mxu0 %v1837
    %v3250 = vpop.f32.mrf.mxu0
    %v3251 = vadd.f32 %v2962, %v3250
    %v3252 = vpop.f32.mrf.mxu0
    %v3253 = vpop.f32.mrf.mxu0
    %v3254 = vadd.f32 %v2965, %v3253
    %v3255 = vpop.f32.mrf.mxu0
    %3256 = vmatprep.mubr.bf16.mxu0 %v1842
    %3257 = vmatmul.mubr.bf16.gmra.mxu0 %v1841
    %v3258 = vpop.f32.mrf.mxu0
    %v3259 = vadd.f32 %v2970, %v3258
    %v3260 = vpop.f32.mrf.mxu0
    %v3261 = vpop.f32.mrf.mxu0
    %v3262 = vadd.f32 %v2973, %v3261
    %v3263 = vpop.f32.mrf.mxu0
    %3264 = vmatprep.mubr.bf16.mxu0 %v1846
    %3265 = vmatmul.mubr.bf16.gmra.mxu0 %v1845
    %v3266 = vpop.f32.mrf.mxu0
    %v3267 = vadd.f32 %v2978, %v3266
    %v3268 = vpop.f32.mrf.mxu0
    %v3269 = vpop.f32.mrf.mxu0
    %v3270 = vadd.f32 %v2981, %v3269
    %v3271 = vpop.f32.mrf.mxu0
    %3272 = vmatprep.mubr.bf16.mxu0 %v1850
    %3273 = vmatmul.mubr.bf16.gmra.mxu0 %v1849
    %v3274 = vpop.f32.mrf.mxu0
    %v3275 = vadd.f32 %v2986, %v3274
    %v3276 = vpop.f32.mrf.mxu0
    %v3277 = vpop.f32.mrf.mxu0
    %v3278 = vadd.f32 %v2989, %v3277
    %v3279 = vpop.f32.mrf.mxu0
    %3280 = vmatprep.mubr.bf16.mxu0 %v1854
    %3281 = vmatmul.mubr.bf16.gmra.mxu0 %v1853
    %v3282 = vpop.f32.mrf.mxu0
    %v3283 = vadd.f32 %v2994, %v3282
    %v3284 = vpop.f32.mrf.mxu0
    %v3285 = vpop.f32.mrf.mxu0
    %v3286 = vadd.f32 %v2997, %v3285
    %v3287 = vpop.f32.mrf.mxu0
    %3288 = vmatprep.mubr.bf16.mxu0 %v1858
    %3289 = vmatmul.mubr.bf16.gmra.mxu0 %v1857
    %v3290 = vpop.f32.mrf.mxu0
    %v3291 = vadd.f32 %v3002, %v3290
    %v3292 = vpop.f32.mrf.mxu0
    %v3293 = vpop.f32.mrf.mxu0
    %v3294 = vadd.f32 %v3005, %v3293
    %v3295 = vpop.f32.mrf.mxu0
    %3296 = vmatprep.mubr.bf16.mxu0 %v1862
    %3297 = vmatmul.mubr.bf16.gmra.mxu0 %v1861
    %v3298 = vpop.f32.mrf.mxu0
    %v3299 = vadd.f32 %v3010, %v3298
    %v3300 = vpop.f32.mrf.mxu0
    %v3301 = vpop.f32.mrf.mxu0
    %v3302 = vadd.f32 %v3013, %v3301
    %v3303 = vpop.f32.mrf.mxu0
    %3304 = vmatprep.mubr.bf16.mxu0 %v1866
    %3305 = vmatmul.mubr.bf16.gmra.mxu0 %v1865
    %v3306 = vpop.f32.mrf.mxu0
    %v3307 = vadd.f32 %v3018, %v3306
    %v3308 = vpop.f32.mrf.mxu0
    %v3309 = vpop.f32.mrf.mxu0
    %v3310 = vadd.f32 %v3021, %v3309
    %v3311 = vpop.f32.mrf.mxu0
    %3312 = vdwg.mxu0
    %s3313 = sld [smem:[#allocation2 + $0x2]]
    %v3314 = vstv %s3313
    %v3315 = vmul.f32 %v3314, %v3059
    %v3316 = vmul.f32 %v3314, %v3062
    %v3317 = vmul.f32 %v3314, %v3067
    %v3318 = vmul.f32 %v3314, %v3070
    %v3319 = vmul.f32 %v3314, %v3075
    %v3320 = vmul.f32 %v3314, %v3078
    %v3321 = vmul.f32 %v3314, %v3083
    %v3322 = vmul.f32 %v3314, %v3086
    %v3323 = vmul.f32 %v3314, %v3091
    %v3324 = vmul.f32 %v3314, %v3094
    %v3325 = vmul.f32 %v3314, %v3099
    %v3326 = vmul.f32 %v3314, %v3102
    %v3327 = vmul.f32 %v3314, %v3107
    %v3328 = vmul.f32 %v3314, %v3110
    %v3329 = vmul.f32 %v3314, %v3115
    %v3330 = vmul.f32 %v3314, %v3118
    %v3331 = vmul.f32 %v3314, %v3123
    %v3332 = vmul.f32 %v3314, %v3126
    %v3333 = vmul.f32 %v3314, %v3131
    %v3334 = vmul.f32 %v3314, %v3134
    %v3335 = vmul.f32 %v3314, %v3139
    %v3336 = vmul.f32 %v3314, %v3142
    %v3337 = vmul.f32 %v3314, %v3147
    %v3338 = vmul.f32 %v3314, %v3150
    %v3339 = vmul.f32 %v3314, %v3155
    %v3340 = vmul.f32 %v3314, %v3158
    %v3341 = vmul.f32 %v3314, %v3163
    %v3342 = vmul.f32 %v3314, %v3166
    %v3343 = vmul.f32 %v3314, %v3171
    %v3344 = vmul.f32 %v3314, %v3174
    %v3345 = vmul.f32 %v3314, %v3179
    %v3346 = vmul.f32 %v3314, %v3182
    %v3347 = vmul.f32 %v3314, %v3187
    %v3348 = vmul.f32 %v3314, %v3190
    %v3349 = vmul.f32 %v3314, %v3195
    %v3350 = vmul.f32 %v3314, %v3198
    %v3351 = vmul.f32 %v3314, %v3203
    %v3352 = vmul.f32 %v3314, %v3206
    %v3353 = vmul.f32 %v3314, %v3211
    %v3354 = vmul.f32 %v3314, %v3214
    %v3355 = vmul.f32 %v3314, %v3219
    %v3356 = vmul.f32 %v3314, %v3222
    %v3357 = vmul.f32 %v3314, %v3227
    %v3358 = vmul.f32 %v3314, %v3230
    %v3359 = vmul.f32 %v3314, %v3235
    %v3360 = vmul.f32 %v3314, %v3238
    %v3361 = vmul.f32 %v3314, %v3243
    %v3362 = vmul.f32 %v3314, %v3246
    %v3363 = vmul.f32 %v3314, %v3251
    %v3364 = vmul.f32 %v3314, %v3254
    %v3365 = vmul.f32 %v3314, %v3259
    %v3366 = vmul.f32 %v3314, %v3262
    %v3367 = vmul.f32 %v3314, %v3267
    %v3368 = vmul.f32 %v3314, %v3270
    %v3369 = vmul.f32 %v3314, %v3275
    %v3370 = vmul.f32 %v3314, %v3278
    %v3371 = vmul.f32 %v3314, %v3283
    %v3372 = vmul.f32 %v3314, %v3286
    %v3373 = vmul.f32 %v3314, %v3291
    %v3374 = vmul.f32 %v3314, %v3294
    %v3375 = vmul.f32 %v3314, %v3299
    %v3376 = vmul.f32 %v3314, %v3302
    %v3377 = vmul.f32 %v3314, %v3307
    %v3378 = vmul.f32 %v3314, %v3310
    %v3379 = vadd.f32 %v2639, %v3315
    %v3380 = vadd.f32 %v2640, %v3316
    %v3381 = vadd.f32 %v2641, %v3317
    %v3382 = vadd.f32 %v2642, %v3318
    %v3383 = vadd.f32 %v2643, %v3319
    %v3384 = vadd.f32 %v2644, %v3320
    %v3385 = vadd.f32 %v2645, %v3321
    %v3386 = vadd.f32 %v2646, %v3322
    %v3387 = vadd.f32 %v2647, %v3323
    %v3388 = vadd.f32 %v2648, %v3324
    %v3389 = vadd.f32 %v2649, %v3325
    %v3390 = vadd.f32 %v2650, %v3326
    %v3391 = vadd.f32 %v2651, %v3327
    %v3392 = vadd.f32 %v2652, %v3328
    %v3393 = vadd.f32 %v2653, %v3329
    %v3394 = vadd.f32 %v2654, %v3330
    %v3395 = vadd.f32 %v2655, %v3331
    %v3396 = vadd.f32 %v2656, %v3332
    %v3397 = vadd.f32 %v2657, %v3333
    %v3398 = vadd.f32 %v2658, %v3334
    %v3399 = vadd.f32 %v2659, %v3335
    %v3400 = vadd.f32 %v2660, %v3336
    %v3401 = vadd.f32 %v2661, %v3337
    %v3402 = vadd.f32 %v2662, %v3338
    %v3403 = vadd.f32 %v2663, %v3339
    %v3404 = vadd.f32 %v2664, %v3340
    %v3405 = vadd.f32 %v2665, %v3341
    %v3406 = vadd.f32 %v2666, %v3342
    %v3407 = vadd.f32 %v2667, %v3343
    %v3408 = vadd.f32 %v2668, %v3344
    %v3409 = vadd.f32 %v2669, %v3345
    %v3410 = vadd.f32 %v2670, %v3346
    %v3411 = vadd.f32 %v2671, %v3347
    %v3412 = vadd.f32 %v2672, %v3348
    %v3413 = vadd.f32 %v2673, %v3349
    %v3414 = vadd.f32 %v2674, %v3350
    %v3415 = vadd.f32 %v2675, %v3351
    %v3416 = vadd.f32 %v2676, %v3352
    %v3417 = vadd.f32 %v2677, %v3353
    %v3418 = vadd.f32 %v2678, %v3354
    %v3419 = vadd.f32 %v2679, %v3355
    %v3420 = vadd.f32 %v2680, %v3356
    %v3421 = vadd.f32 %v2681, %v3357
    %v3422 = vadd.f32 %v2682, %v3358
    %v3423 = vadd.f32 %v2683, %v3359
    %v3424 = vadd.f32 %v2684, %v3360
    %v3425 = vadd.f32 %v2685, %v3361
    %v3426 = vadd.f32 %v2686, %v3362
    %v3427 = vadd.f32 %v2687, %v3363
    %v3428 = vadd.f32 %v2688, %v3364
    %v3429 = vadd.f32 %v2689, %v3365
    %v3430 = vadd.f32 %v2690, %v3366
    %v3431 = vadd.f32 %v2691, %v3367
    %v3432 = vadd.f32 %v2692, %v3368
    %v3433 = vadd.f32 %v2693, %v3369
    %v3434 = vadd.f32 %v2694, %v3370
    %v3435 = vadd.f32 %v2695, %v3371
    %v3436 = vadd.f32 %v2696, %v3372
    %v3437 = vadd.f32 %v2697, %v3373
    %v3438 = vadd.f32 %v2698, %v3374
    %v3439 = vadd.f32 %v2699, %v3375
    %v3440 = vadd.f32 %v2700, %v3376
    %v3441 = vadd.f32 %v2701, %v3377
    %v3442 = vadd.f32 %v2702, %v3378
    %v3443 = vpack.c.bf16 %v3062, %v3059
    %v3444 = vpack.c.bf16 %v3070, %v3067
    %v3445 = vpack.c.bf16 %v3078, %v3075
    %v3446 = vpack.c.bf16 %v3086, %v3083
    %v3447 = vpack.c.bf16 %v3094, %v3091
    %v3448 = vpack.c.bf16 %v3102, %v3099
    %v3449 = vpack.c.bf16 %v3110, %v3107
    %v3450 = vpack.c.bf16 %v3118, %v3115
    %v3451 = vpack.c.bf16 %v3126, %v3123
    %v3452 = vpack.c.bf16 %v3134, %v3131
    %v3453 = vpack.c.bf16 %v3142, %v3139
    %v3454 = vpack.c.bf16 %v3150, %v3147
    %v3455 = vpack.c.bf16 %v3158, %v3155
    %v3456 = vpack.c.bf16 %v3166, %v3163
    %v3457 = vpack.c.bf16 %v3174, %v3171
    %v3458 = vpack.c.bf16 %v3182, %v3179
    %v3459 = vpack.c.bf16 %v3190, %v3187
    %v3460 = vpack.c.bf16 %v3198, %v3195
    %v3461 = vpack.c.bf16 %v3206, %v3203
    %v3462 = vpack.c.bf16 %v3214, %v3211
    %v3463 = vpack.c.bf16 %v3222, %v3219
    %v3464 = vpack.c.bf16 %v3230, %v3227
    %v3465 = vpack.c.bf16 %v3238, %v3235
    %v3466 = vpack.c.bf16 %v3246, %v3243
    %v3467 = vpack.c.bf16 %v3254, %v3251
    %v3468 = vpack.c.bf16 %v3262, %v3259
    %v3469 = vpack.c.bf16 %v3270, %v3267
    %v3470 = vpack.c.bf16 %v3278, %v3275
    %v3471 = vpack.c.bf16 %v3286, %v3283
    %v3472 = vpack.c.bf16 %v3294, %v3291
    %v3473 = vpack.c.bf16 %v3302, %v3299
    %v3474 = vpack.c.bf16 %v3310, %v3307
    %3475 = vmatprep.subr.bf16.mxu0 0
    %3476 = vmatpush1.bf16.msra.mxu0 %v3450
    %3477 = vmatprep.subr.bf16.mxu0 0
    %3478 = vmatpush1.bf16.msra.mxu0 %v3449
    %3479 = vmatprep.subr.bf16.mxu0 0
    %3480 = vmatpush1.bf16.msra.mxu0 %v3448
    %3481 = vmatprep.subr.bf16.mxu0 0
    %3482 = vmatpush1.bf16.msra.mxu0 %v3447
    %3483 = vmatprep.subr.bf16.mxu0 0
    %3484 = vmatpush1.bf16.msra.mxu0 %v3446
    %3485 = vmatprep.subr.bf16.mxu0 0
    %3486 = vmatpush1.bf16.msra.mxu0 %v3445
    %3487 = vmatprep.subr.bf16.mxu0 0
    %3488 = vmatpush1.bf16.msra.mxu0 %v3444
    %3489 = vmatprep.subr.bf16.mxu0 0
    %3490 = vmatpush1.bf16.msra.mxu0 %v3443
    %3491 = vmatprep.subr.bf16.mxu0 0
    %3492 = vmatpush2.bf16.msra.mxu0 %v3458
    %3493 = vmatprep.subr.bf16.mxu0 0
    %3494 = vmatpush2.bf16.msra.mxu0 %v3457
    %3495 = vmatprep.subr.bf16.mxu0 0
    %3496 = vmatpush2.bf16.msra.mxu0 %v3456
    %3497 = vmatprep.subr.bf16.mxu0 0
    %3498 = vmatpush2.bf16.msra.mxu0 %v3455
    %3499 = vmatprep.subr.bf16.mxu0 0
    %3500 = vmatpush2.bf16.msra.mxu0 %v3454
    %3501 = vmatprep.subr.bf16.mxu0 0
    %3502 = vmatpush2.bf16.msra.mxu0 %v3453
    %3503 = vmatprep.subr.bf16.mxu0 0
    %3504 = vmatpush2.bf16.msra.mxu0 %v3452
    %3505 = vmatprep.subr.bf16.mxu0 0
    %3506 = vmatpush2.bf16.msra.mxu0 %v3451
    %3507 = vmatprep.mubr.bf16.mxu0 %v1740
    %3508 = vmatmul.mubr.bf16.gmra.mxu0 %v1739
    %v3509 = vpop.f32.mrf.mxu0
    %v3510 = vadd.f32 0.0, %v3509
    %v3511 = vpop.f32.mrf.mxu0
    %v3512 = vpop.f32.mrf.mxu0
    %v3513 = vadd.f32 0.0, %v3512
    %v3514 = vpop.f32.mrf.mxu0
    %3515 = vmatprep.mubr.bf16.mxu0 %v1744
    %3516 = vmatmul.mubr.bf16.gmra.mxu0 %v1743
    %v3517 = vpop.f32.mrf.mxu0
    %v3518 = vadd.f32 0.0, %v3517
    %v3519 = vpop.f32.mrf.mxu0
    %v3520 = vpop.f32.mrf.mxu0
    %v3521 = vadd.f32 0.0, %v3520
    %v3522 = vpop.f32.mrf.mxu0
    %3523 = vmatprep.mubr.bf16.mxu0 %v1748
    %3524 = vmatmul.mubr.bf16.gmra.mxu0 %v1747
    %v3525 = vpop.f32.mrf.mxu0
    %v3526 = vadd.f32 0.0, %v3525
    %v3527 = vpop.f32.mrf.mxu0
    %v3528 = vpop.f32.mrf.mxu0
    %v3529 = vadd.f32 0.0, %v3528
    %v3530 = vpop.f32.mrf.mxu0
    %3531 = vmatprep.mubr.bf16.mxu0 %v1752
    %3532 = vmatmul.mubr.bf16.gmra.mxu0 %v1751
    %v3533 = vpop.f32.mrf.mxu0
    %v3534 = vadd.f32 0.0, %v3533
    %v3535 = vpop.f32.mrf.mxu0
    %v3536 = vpop.f32.mrf.mxu0
    %v3537 = vadd.f32 0.0, %v3536
    %v3538 = vpop.f32.mrf.mxu0
    %3539 = vmatprep.mubr.bf16.mxu0 %v1756
    %3540 = vmatmul.mubr.bf16.gmra.mxu0 %v1755
    %v3541 = vpop.f32.mrf.mxu0
    %v3542 = vadd.f32 0.0, %v3541
    %v3543 = vpop.f32.mrf.mxu0
    %v3544 = vpop.f32.mrf.mxu0
    %v3545 = vadd.f32 0.0, %v3544
    %v3546 = vpop.f32.mrf.mxu0
    %3547 = vmatprep.mubr.bf16.mxu0 %v1760
    %3548 = vmatmul.mubr.bf16.gmra.mxu0 %v1759
    %v3549 = vpop.f32.mrf.mxu0
    %v3550 = vadd.f32 0.0, %v3549
    %v3551 = vpop.f32.mrf.mxu0
    %v3552 = vpop.f32.mrf.mxu0
    %v3553 = vadd.f32 0.0, %v3552
    %v3554 = vpop.f32.mrf.mxu0
    %3555 = vmatprep.mubr.bf16.mxu0 %v1764
    %3556 = vmatmul.mubr.bf16.gmra.mxu0 %v1763
    %v3557 = vpop.f32.mrf.mxu0
    %v3558 = vadd.f32 0.0, %v3557
    %v3559 = vpop.f32.mrf.mxu0
    %v3560 = vpop.f32.mrf.mxu0
    %v3561 = vadd.f32 0.0, %v3560
    %v3562 = vpop.f32.mrf.mxu0
    %3563 = vmatprep.mubr.bf16.mxu0 %v1768
    %3564 = vmatmul.mubr.bf16.gmra.mxu0 %v1767
    %v3565 = vpop.f32.mrf.mxu0
    %v3566 = vadd.f32 0.0, %v3565
    %v3567 = vpop.f32.mrf.mxu0
    %v3568 = vpop.f32.mrf.mxu0
    %v3569 = vadd.f32 0.0, %v3568
    %v3570 = vpop.f32.mrf.mxu0
    %3571 = vmatprep.mubr.bf16.mxu0 %v1772
    %3572 = vmatmul.mubr.bf16.gmra.mxu0 %v1771
    %v3573 = vpop.f32.mrf.mxu0
    %v3574 = vadd.f32 0.0, %v3573
    %v3575 = vpop.f32.mrf.mxu0
    %v3576 = vpop.f32.mrf.mxu0
    %v3577 = vadd.f32 0.0, %v3576
    %v3578 = vpop.f32.mrf.mxu0
    %3579 = vmatprep.mubr.bf16.mxu0 %v1776
    %3580 = vmatmul.mubr.bf16.gmra.mxu0 %v1775
    %v3581 = vpop.f32.mrf.mxu0
    %v3582 = vadd.f32 0.0, %v3581
    %v3583 = vpop.f32.mrf.mxu0
    %v3584 = vpop.f32.mrf.mxu0
    %v3585 = vadd.f32 0.0, %v3584
    %v3586 = vpop.f32.mrf.mxu0
    %3587 = vmatprep.mubr.bf16.mxu0 %v1780
    %3588 = vmatmul.mubr.bf16.gmra.mxu0 %v1779
    %v3589 = vpop.f32.mrf.mxu0
    %v3590 = vadd.f32 0.0, %v3589
    %v3591 = vpop.f32.mrf.mxu0
    %v3592 = vpop.f32.mrf.mxu0
    %v3593 = vadd.f32 0.0, %v3592
    %v3594 = vpop.f32.mrf.mxu0
    %3595 = vmatprep.mubr.bf16.mxu0 %v1784
    %3596 = vmatmul.mubr.bf16.gmra.mxu0 %v1783
    %v3597 = vpop.f32.mrf.mxu0
    %v3598 = vadd.f32 0.0, %v3597
    %v3599 = vpop.f32.mrf.mxu0
    %v3600 = vpop.f32.mrf.mxu0
    %v3601 = vadd.f32 0.0, %v3600
    %v3602 = vpop.f32.mrf.mxu0
    %3603 = vmatprep.mubr.bf16.mxu0 %v1788
    %3604 = vmatmul.mubr.bf16.gmra.mxu0 %v1787
    %v3605 = vpop.f32.mrf.mxu0
    %v3606 = vadd.f32 0.0, %v3605
    %v3607 = vpop.f32.mrf.mxu0
    %v3608 = vpop.f32.mrf.mxu0
    %v3609 = vadd.f32 0.0, %v3608
    %v3610 = vpop.f32.mrf.mxu0
    %3611 = vmatprep.mubr.bf16.mxu0 %v1792
    %3612 = vmatmul.mubr.bf16.gmra.mxu0 %v1791
    %v3613 = vpop.f32.mrf.mxu0
    %v3614 = vadd.f32 0.0, %v3613
    %v3615 = vpop.f32.mrf.mxu0
    %v3616 = vpop.f32.mrf.mxu0
    %v3617 = vadd.f32 0.0, %v3616
    %v3618 = vpop.f32.mrf.mxu0
    %3619 = vmatprep.mubr.bf16.mxu0 %v1796
    %3620 = vmatmul.mubr.bf16.gmra.mxu0 %v1795
    %v3621 = vpop.f32.mrf.mxu0
    %v3622 = vadd.f32 0.0, %v3621
    %v3623 = vpop.f32.mrf.mxu0
    %v3624 = vpop.f32.mrf.mxu0
    %v3625 = vadd.f32 0.0, %v3624
    %v3626 = vpop.f32.mrf.mxu0
    %3627 = vmatprep.mubr.bf16.mxu0 %v1800
    %3628 = vmatmul.mubr.bf16.gmra.mxu0 %v1799
    %v3629 = vpop.f32.mrf.mxu0
    %v3630 = vadd.f32 0.0, %v3629
    %v3631 = vpop.f32.mrf.mxu0
    %v3632 = vpop.f32.mrf.mxu0
    %v3633 = vadd.f32 0.0, %v3632
    %v3634 = vpop.f32.mrf.mxu0
    %3635 = vmatprep.mubr.bf16.mxu0 %v1804
    %3636 = vmatmul.mubr.bf16.gmra.mxu0 %v1803
    %v3637 = vpop.f32.mrf.mxu0
    %v3638 = vadd.f32 0.0, %v3637
    %v3639 = vpop.f32.mrf.mxu0
    %v3640 = vpop.f32.mrf.mxu0
    %v3641 = vadd.f32 0.0, %v3640
    %v3642 = vpop.f32.mrf.mxu0
    %3643 = vmatprep.mubr.bf16.mxu0 %v1808
    %3644 = vmatmul.mubr.bf16.gmra.mxu0 %v1807
    %v3645 = vpop.f32.mrf.mxu0
    %v3646 = vadd.f32 0.0, %v3645
    %v3647 = vpop.f32.mrf.mxu0
    %v3648 = vpop.f32.mrf.mxu0
    %v3649 = vadd.f32 0.0, %v3648
    %v3650 = vpop.f32.mrf.mxu0
    %3651 = vmatprep.mubr.bf16.mxu0 %v1812
    %3652 = vmatmul.mubr.bf16.gmra.mxu0 %v1811
    %v3653 = vpop.f32.mrf.mxu0
    %v3654 = vadd.f32 0.0, %v3653
    %v3655 = vpop.f32.mrf.mxu0
    %v3656 = vpop.f32.mrf.mxu0
    %v3657 = vadd.f32 0.0, %v3656
    %v3658 = vpop.f32.mrf.mxu0
    %3659 = vmatprep.mubr.bf16.mxu0 %v1816
    %3660 = vmatmul.mubr.bf16.gmra.mxu0 %v1815
    %v3661 = vpop.f32.mrf.mxu0
    %v3662 = vadd.f32 0.0, %v3661
    %v3663 = vpop.f32.mrf.mxu0
    %v3664 = vpop.f32.mrf.mxu0
    %v3665 = vadd.f32 0.0, %v3664
    %v3666 = vpop.f32.mrf.mxu0
    %3667 = vmatprep.mubr.bf16.mxu0 %v1820
    %3668 = vmatmul.mubr.bf16.gmra.mxu0 %v1819
    %v3669 = vpop.f32.mrf.mxu0
    %v3670 = vadd.f32 0.0, %v3669
    %v3671 = vpop.f32.mrf.mxu0
    %v3672 = vpop.f32.mrf.mxu0
    %v3673 = vadd.f32 0.0, %v3672
    %v3674 = vpop.f32.mrf.mxu0
    %3675 = vmatprep.mubr.bf16.mxu0 %v1824
    %3676 = vmatmul.mubr.bf16.gmra.mxu0 %v1823
    %v3677 = vpop.f32.mrf.mxu0
    %v3678 = vadd.f32 0.0, %v3677
    %v3679 = vpop.f32.mrf.mxu0
    %v3680 = vpop.f32.mrf.mxu0
    %v3681 = vadd.f32 0.0, %v3680
    %v3682 = vpop.f32.mrf.mxu0
    %3683 = vmatprep.mubr.bf16.mxu0 %v1828
    %3684 = vmatmul.mubr.bf16.gmra.mxu0 %v1827
    %v3685 = vpop.f32.mrf.mxu0
    %v3686 = vadd.f32 0.0, %v3685
    %v3687 = vpop.f32.mrf.mxu0
    %v3688 = vpop.f32.mrf.mxu0
    %v3689 = vadd.f32 0.0, %v3688
    %v3690 = vpop.f32.mrf.mxu0
    %3691 = vmatprep.mubr.bf16.mxu0 %v1832
    %3692 = vmatmul.mubr.bf16.gmra.mxu0 %v1831
    %v3693 = vpop.f32.mrf.mxu0
    %v3694 = vadd.f32 0.0, %v3693
    %v3695 = vpop.f32.mrf.mxu0
    %v3696 = vpop.f32.mrf.mxu0
    %v3697 = vadd.f32 0.0, %v3696
    %v3698 = vpop.f32.mrf.mxu0
    %3699 = vmatprep.mubr.bf16.mxu0 %v1836
    %3700 = vmatmul.mubr.bf16.gmra.mxu0 %v1835
    %v3701 = vpop.f32.mrf.mxu0
    %v3702 = vadd.f32 0.0, %v3701
    %v3703 = vpop.f32.mrf.mxu0
    %v3704 = vpop.f32.mrf.mxu0
    %v3705 = vadd.f32 0.0, %v3704
    %v3706 = vpop.f32.mrf.mxu0
    %3707 = vmatprep.mubr.bf16.mxu0 %v1840
    %3708 = vmatmul.mubr.bf16.gmra.mxu0 %v1839
    %v3709 = vpop.f32.mrf.mxu0
    %v3710 = vadd.f32 0.0, %v3709
    %v3711 = vpop.f32.mrf.mxu0
    %v3712 = vpop.f32.mrf.mxu0
    %v3713 = vadd.f32 0.0, %v3712
    %v3714 = vpop.f32.mrf.mxu0
    %3715 = vmatprep.mubr.bf16.mxu0 %v1844
    %3716 = vmatmul.mubr.bf16.gmra.mxu0 %v1843
    %v3717 = vpop.f32.mrf.mxu0
    %v3718 = vadd.f32 0.0, %v3717
    %v3719 = vpop.f32.mrf.mxu0
    %v3720 = vpop.f32.mrf.mxu0
    %v3721 = vadd.f32 0.0, %v3720
    %v3722 = vpop.f32.mrf.mxu0
    %3723 = vmatprep.mubr.bf16.mxu0 %v1848
    %3724 = vmatmul.mubr.bf16.gmra.mxu0 %v1847
    %v3725 = vpop.f32.mrf.mxu0
    %v3726 = vadd.f32 0.0, %v3725
    %v3727 = vpop.f32.mrf.mxu0
    %v3728 = vpop.f32.mrf.mxu0
    %v3729 = vadd.f32 0.0, %v3728
    %v3730 = vpop.f32.mrf.mxu0
    %3731 = vmatprep.mubr.bf16.mxu0 %v1852
    %3732 = vmatmul.mubr.bf16.gmra.mxu0 %v1851
    %v3733 = vpop.f32.mrf.mxu0
    %v3734 = vadd.f32 0.0, %v3733
    %v3735 = vpop.f32.mrf.mxu0
    %v3736 = vpop.f32.mrf.mxu0
    %v3737 = vadd.f32 0.0, %v3736
    %v3738 = vpop.f32.mrf.mxu0
    %3739 = vmatprep.mubr.bf16.mxu0 %v1856
    %3740 = vmatmul.mubr.bf16.gmra.mxu0 %v1855
    %v3741 = vpop.f32.mrf.mxu0
    %v3742 = vadd.f32 0.0, %v3741
    %v3743 = vpop.f32.mrf.mxu0
    %v3744 = vpop.f32.mrf.mxu0
    %v3745 = vadd.f32 0.0, %v3744
    %v3746 = vpop.f32.mrf.mxu0
    %3747 = vmatprep.mubr.bf16.mxu0 %v1860
    %3748 = vmatmul.mubr.bf16.gmra.mxu0 %v1859
    %v3749 = vpop.f32.mrf.mxu0
    %v3750 = vadd.f32 0.0, %v3749
    %v3751 = vpop.f32.mrf.mxu0
    %v3752 = vpop.f32.mrf.mxu0
    %v3753 = vadd.f32 0.0, %v3752
    %v3754 = vpop.f32.mrf.mxu0
    %3755 = vmatprep.mubr.bf16.mxu0 %v1864
    %3756 = vmatmul.mubr.bf16.gmra.mxu0 %v1863
    %v3757 = vpop.f32.mrf.mxu0
    %v3758 = vadd.f32 0.0, %v3757
    %v3759 = vpop.f32.mrf.mxu0
    %v3760 = vpop.f32.mrf.mxu0
    %v3761 = vadd.f32 0.0, %v3760
    %v3762 = vpop.f32.mrf.mxu0
    %3763 = vdwg.mxu0
    %3764 = vmatprep.subr.bf16.mxu0 0
    %3765 = vmatpush1.bf16.msra.mxu0 %v3466
    %3766 = vmatprep.subr.bf16.mxu0 0
    %3767 = vmatpush1.bf16.msra.mxu0 %v3465
    %3768 = vmatprep.subr.bf16.mxu0 0
    %3769 = vmatpush1.bf16.msra.mxu0 %v3464
    %3770 = vmatprep.subr.bf16.mxu0 0
    %3771 = vmatpush1.bf16.msra.mxu0 %v3463
    %3772 = vmatprep.subr.bf16.mxu0 0
    %3773 = vmatpush1.bf16.msra.mxu0 %v3462
    %3774 = vmatprep.subr.bf16.mxu0 0
    %3775 = vmatpush1.bf16.msra.mxu0 %v3461
    %3776 = vmatprep.subr.bf16.mxu0 0
    %3777 = vmatpush1.bf16.msra.mxu0 %v3460
    %3778 = vmatprep.subr.bf16.mxu0 0
    %3779 = vmatpush1.bf16.msra.mxu0 %v3459
    %3780 = vmatprep.subr.bf16.mxu0 0
    %3781 = vmatpush2.bf16.msra.mxu0 %v3474
    %3782 = vmatprep.subr.bf16.mxu0 0
    %3783 = vmatpush2.bf16.msra.mxu0 %v3473
    %3784 = vmatprep.subr.bf16.mxu0 0
    %3785 = vmatpush2.bf16.msra.mxu0 %v3472
    %3786 = vmatprep.subr.bf16.mxu0 0
    %3787 = vmatpush2.bf16.msra.mxu0 %v3471
    %3788 = vmatprep.subr.bf16.mxu0 0
    %3789 = vmatpush2.bf16.msra.mxu0 %v3470
    %3790 = vmatprep.subr.bf16.mxu0 0
    %3791 = vmatpush2.bf16.msra.mxu0 %v3469
    %3792 = vmatprep.subr.bf16.mxu0 0
    %3793 = vmatpush2.bf16.msra.mxu0 %v3468
    %3794 = vmatprep.subr.bf16.mxu0 0
    %3795 = vmatpush2.bf16.msra.mxu0 %v3467
    %3796 = vmatprep.mubr.bf16.mxu0 %v1742
    %3797 = vmatmul.mubr.bf16.gmra.mxu0 %v1741
    %v3798 = vpop.f32.mrf.mxu0
    %v3799 = vadd.f32 %v3510, %v3798
    %v3800 = vpop.f32.mrf.mxu0
    %v3801 = vpop.f32.mrf.mxu0
    %v3802 = vadd.f32 %v3513, %v3801
    %v3803 = vpop.f32.mrf.mxu0
    %3804 = vmatprep.mubr.bf16.mxu0 %v1746
    %3805 = vmatmul.mubr.bf16.gmra.mxu0 %v1745
    %v3806 = vpop.f32.mrf.mxu0
    %v3807 = vadd.f32 %v3518, %v3806
    %v3808 = vpop.f32.mrf.mxu0
    %v3809 = vpop.f32.mrf.mxu0
    %v3810 = vadd.f32 %v3521, %v3809
    %v3811 = vpop.f32.mrf.mxu0
    %3812 = vmatprep.mubr.bf16.mxu0 %v1750
    %3813 = vmatmul.mubr.bf16.gmra.mxu0 %v1749
    %v3814 = vpop.f32.mrf.mxu0
    %v3815 = vadd.f32 %v3526, %v3814
    %v3816 = vpop.f32.mrf.mxu0
    %v3817 = vpop.f32.mrf.mxu0
    %v3818 = vadd.f32 %v3529, %v3817
    %v3819 = vpop.f32.mrf.mxu0
    %3820 = vmatprep.mubr.bf16.mxu0 %v1754
    %3821 = vmatmul.mubr.bf16.gmra.mxu0 %v1753
    %v3822 = vpop.f32.mrf.mxu0
    %v3823 = vadd.f32 %v3534, %v3822
    %v3824 = vpop.f32.mrf.mxu0
    %v3825 = vpop.f32.mrf.mxu0
    %v3826 = vadd.f32 %v3537, %v3825
    %v3827 = vpop.f32.mrf.mxu0
    %3828 = vmatprep.mubr.bf16.mxu0 %v1758
    %3829 = vmatmul.mubr.bf16.gmra.mxu0 %v1757
    %v3830 = vpop.f32.mrf.mxu0
    %v3831 = vadd.f32 %v3542, %v3830
    %v3832 = vpop.f32.mrf.mxu0
    %v3833 = vpop.f32.mrf.mxu0
    %v3834 = vadd.f32 %v3545, %v3833
    %v3835 = vpop.f32.mrf.mxu0
    %3836 = vmatprep.mubr.bf16.mxu0 %v1762
    %3837 = vmatmul.mubr.bf16.gmra.mxu0 %v1761
    %v3838 = vpop.f32.mrf.mxu0
    %v3839 = vadd.f32 %v3550, %v3838
    %v3840 = vpop.f32.mrf.mxu0
    %v3841 = vpop.f32.mrf.mxu0
    %v3842 = vadd.f32 %v3553, %v3841
    %v3843 = vpop.f32.mrf.mxu0
    %3844 = vmatprep.mubr.bf16.mxu0 %v1766
    %3845 = vmatmul.mubr.bf16.gmra.mxu0 %v1765
    %v3846 = vpop.f32.mrf.mxu0
    %v3847 = vadd.f32 %v3558, %v3846
    %v3848 = vpop.f32.mrf.mxu0
    %v3849 = vpop.f32.mrf.mxu0
    %v3850 = vadd.f32 %v3561, %v3849
    %v3851 = vpop.f32.mrf.mxu0
    %3852 = vmatprep.mubr.bf16.mxu0 %v1770
    %3853 = vmatmul.mubr.bf16.gmra.mxu0 %v1769
    %v3854 = vpop.f32.mrf.mxu0
    %v3855 = vadd.f32 %v3566, %v3854
    %v3856 = vpop.f32.mrf.mxu0
    %v3857 = vpop.f32.mrf.mxu0
    %v3858 = vadd.f32 %v3569, %v3857
    %v3859 = vpop.f32.mrf.mxu0
    %3860 = vmatprep.mubr.bf16.mxu0 %v1774
    %3861 = vmatmul.mubr.bf16.gmra.mxu0 %v1773
    %v3862 = vpop.f32.mrf.mxu0
    %v3863 = vadd.f32 %v3574, %v3862
    %v3864 = vpop.f32.mrf.mxu0
    %v3865 = vpop.f32.mrf.mxu0
    %v3866 = vadd.f32 %v3577, %v3865
    %v3867 = vpop.f32.mrf.mxu0
    %3868 = vmatprep.mubr.bf16.mxu0 %v1778
    %3869 = vmatmul.mubr.bf16.gmra.mxu0 %v1777
    %v3870 = vpop.f32.mrf.mxu0
    %v3871 = vadd.f32 %v3582, %v3870
    %v3872 = vpop.f32.mrf.mxu0
    %v3873 = vpop.f32.mrf.mxu0
    %v3874 = vadd.f32 %v3585, %v3873
    %v3875 = vpop.f32.mrf.mxu0
    %3876 = vmatprep.mubr.bf16.mxu0 %v1782
    %3877 = vmatmul.mubr.bf16.gmra.mxu0 %v1781
    %v3878 = vpop.f32.mrf.mxu0
    %v3879 = vadd.f32 %v3590, %v3878
    %v3880 = vpop.f32.mrf.mxu0
    %v3881 = vpop.f32.mrf.mxu0
    %v3882 = vadd.f32 %v3593, %v3881
    %v3883 = vpop.f32.mrf.mxu0
    %3884 = vmatprep.mubr.bf16.mxu0 %v1786
    %3885 = vmatmul.mubr.bf16.gmra.mxu0 %v1785
    %v3886 = vpop.f32.mrf.mxu0
    %v3887 = vadd.f32 %v3598, %v3886
    %v3888 = vpop.f32.mrf.mxu0
    %v3889 = vpop.f32.mrf.mxu0
    %v3890 = vadd.f32 %v3601, %v3889
    %v3891 = vpop.f32.mrf.mxu0
    %3892 = vmatprep.mubr.bf16.mxu0 %v1790
    %3893 = vmatmul.mubr.bf16.gmra.mxu0 %v1789
    %v3894 = vpop.f32.mrf.mxu0
    %v3895 = vadd.f32 %v3606, %v3894
    %v3896 = vpop.f32.mrf.mxu0
    %v3897 = vpop.f32.mrf.mxu0
    %v3898 = vadd.f32 %v3609, %v3897
    %v3899 = vpop.f32.mrf.mxu0
    %3900 = vmatprep.mubr.bf16.mxu0 %v1794
    %3901 = vmatmul.mubr.bf16.gmra.mxu0 %v1793
    %v3902 = vpop.f32.mrf.mxu0
    %v3903 = vadd.f32 %v3614, %v3902
    %v3904 = vpop.f32.mrf.mxu0
    %v3905 = vpop.f32.mrf.mxu0
    %v3906 = vadd.f32 %v3617, %v3905
    %v3907 = vpop.f32.mrf.mxu0
    %3908 = vmatprep.mubr.bf16.mxu0 %v1798
    %3909 = vmatmul.mubr.bf16.gmra.mxu0 %v1797
    %v3910 = vpop.f32.mrf.mxu0
    %v3911 = vadd.f32 %v3622, %v3910
    %v3912 = vpop.f32.mrf.mxu0
    %v3913 = vpop.f32.mrf.mxu0
    %v3914 = vadd.f32 %v3625, %v3913
    %v3915 = vpop.f32.mrf.mxu0
    %3916 = vmatprep.mubr.bf16.mxu0 %v1802
    %3917 = vmatmul.mubr.bf16.gmra.mxu0 %v1801
    %v3918 = vpop.f32.mrf.mxu0
    %v3919 = vadd.f32 %v3630, %v3918
    %v3920 = vpop.f32.mrf.mxu0
    %v3921 = vpop.f32.mrf.mxu0
    %v3922 = vadd.f32 %v3633, %v3921
    %v3923 = vpop.f32.mrf.mxu0
    %3924 = vmatprep.mubr.bf16.mxu0 %v1806
    %3925 = vmatmul.mubr.bf16.gmra.mxu0 %v1805
    %v3926 = vpop.f32.mrf.mxu0
    %v3927 = vadd.f32 %v3638, %v3926
    %v3928 = vpop.f32.mrf.mxu0
    %v3929 = vpop.f32.mrf.mxu0
    %v3930 = vadd.f32 %v3641, %v3929
    %v3931 = vpop.f32.mrf.mxu0
    %3932 = vmatprep.mubr.bf16.mxu0 %v1810
    %3933 = vmatmul.mubr.bf16.gmra.mxu0 %v1809
    %v3934 = vpop.f32.mrf.mxu0
    %v3935 = vadd.f32 %v3646, %v3934
    %v3936 = vpop.f32.mrf.mxu0
    %v3937 = vpop.f32.mrf.mxu0
    %v3938 = vadd.f32 %v3649, %v3937
    %v3939 = vpop.f32.mrf.mxu0
    %3940 = vmatprep.mubr.bf16.mxu0 %v1814
    %3941 = vmatmul.mubr.bf16.gmra.mxu0 %v1813
    %v3942 = vpop.f32.mrf.mxu0
    %v3943 = vadd.f32 %v3654, %v3942
    %v3944 = vpop.f32.mrf.mxu0
    %v3945 = vpop.f32.mrf.mxu0
    %v3946 = vadd.f32 %v3657, %v3945
    %v3947 = vpop.f32.mrf.mxu0
    %3948 = vmatprep.mubr.bf16.mxu0 %v1818
    %3949 = vmatmul.mubr.bf16.gmra.mxu0 %v1817
    %v3950 = vpop.f32.mrf.mxu0
    %v3951 = vadd.f32 %v3662, %v3950
    %v3952 = vpop.f32.mrf.mxu0
    %v3953 = vpop.f32.mrf.mxu0
    %v3954 = vadd.f32 %v3665, %v3953
    %v3955 = vpop.f32.mrf.mxu0
    %3956 = vmatprep.mubr.bf16.mxu0 %v1822
    %3957 = vmatmul.mubr.bf16.gmra.mxu0 %v1821
    %v3958 = vpop.f32.mrf.mxu0
    %v3959 = vadd.f32 %v3670, %v3958
    %v3960 = vpop.f32.mrf.mxu0
    %v3961 = vpop.f32.mrf.mxu0
    %v3962 = vadd.f32 %v3673, %v3961
    %v3963 = vpop.f32.mrf.mxu0
    %3964 = vmatprep.mubr.bf16.mxu0 %v1826
    %3965 = vmatmul.mubr.bf16.gmra.mxu0 %v1825
    %v3966 = vpop.f32.mrf.mxu0
    %v3967 = vadd.f32 %v3678, %v3966
    %v3968 = vpop.f32.mrf.mxu0
    %v3969 = vpop.f32.mrf.mxu0
    %v3970 = vadd.f32 %v3681, %v3969
    %v3971 = vpop.f32.mrf.mxu0
    %3972 = vmatprep.mubr.bf16.mxu0 %v1830
    %3973 = vmatmul.mubr.bf16.gmra.mxu0 %v1829
    %v3974 = vpop.f32.mrf.mxu0
    %v3975 = vadd.f32 %v3686, %v3974
    %v3976 = vpop.f32.mrf.mxu0
    %v3977 = vpop.f32.mrf.mxu0
    %v3978 = vadd.f32 %v3689, %v3977
    %v3979 = vpop.f32.mrf.mxu0
    %3980 = vmatprep.mubr.bf16.mxu0 %v1834
    %3981 = vmatmul.mubr.bf16.gmra.mxu0 %v1833
    %v3982 = vpop.f32.mrf.mxu0
    %v3983 = vadd.f32 %v3694, %v3982
    %v3984 = vpop.f32.mrf.mxu0
    %v3985 = vpop.f32.mrf.mxu0
    %v3986 = vadd.f32 %v3697, %v3985
    %v3987 = vpop.f32.mrf.mxu0
    %3988 = vmatprep.mubr.bf16.mxu0 %v1838
    %3989 = vmatmul.mubr.bf16.gmra.mxu0 %v1837
    %v3990 = vpop.f32.mrf.mxu0
    %v3991 = vadd.f32 %v3702, %v3990
    %v3992 = vpop.f32.mrf.mxu0
    %v3993 = vpop.f32.mrf.mxu0
    %v3994 = vadd.f32 %v3705, %v3993
    %v3995 = vpop.f32.mrf.mxu0
    %3996 = vmatprep.mubr.bf16.mxu0 %v1842
    %3997 = vmatmul.mubr.bf16.gmra.mxu0 %v1841
    %v3998 = vpop.f32.mrf.mxu0
    %v3999 = vadd.f32 %v3710, %v3998
    %v4000 = vpop.f32.mrf.mxu0
    %v4001 = vpop.f32.mrf.mxu0
    %v4002 = vadd.f32 %v3713, %v4001
    %v4003 = vpop.f32.mrf.mxu0
    %4004 = vmatprep.mubr.bf16.mxu0 %v1846
    %4005 = vmatmul.mubr.bf16.gmra.mxu0 %v1845
    %v4006 = vpop.f32.mrf.mxu0
    %v4007 = vadd.f32 %v3718, %v4006
    %v4008 = vpop.f32.mrf.mxu0
    %v4009 = vpop.f32.mrf.mxu0
    %v4010 = vadd.f32 %v3721, %v4009
    %v4011 = vpop.f32.mrf.mxu0
    %4012 = vmatprep.mubr.bf16.mxu0 %v1850
    %4013 = vmatmul.mubr.bf16.gmra.mxu0 %v1849
    %v4014 = vpop.f32.mrf.mxu0
    %v4015 = vadd.f32 %v3726, %v4014
    %v4016 = vpop.f32.mrf.mxu0
    %v4017 = vpop.f32.mrf.mxu0
    %v4018 = vadd.f32 %v3729, %v4017
    %v4019 = vpop.f32.mrf.mxu0
    %4020 = vmatprep.mubr.bf16.mxu0 %v1854
    %4021 = vmatmul.mubr.bf16.gmra.mxu0 %v1853
    %v4022 = vpop.f32.mrf.mxu0
    %v4023 = vadd.f32 %v3734, %v4022
    %v4024 = vpop.f32.mrf.mxu0
    %v4025 = vpop.f32.mrf.mxu0
    %v4026 = vadd.f32 %v3737, %v4025
    %v4027 = vpop.f32.mrf.mxu0
    %4028 = vmatprep.mubr.bf16.mxu0 %v1858
    %4029 = vmatmul.mubr.bf16.gmra.mxu0 %v1857
    %v4030 = vpop.f32.mrf.mxu0
    %v4031 = vadd.f32 %v3742, %v4030
    %v4032 = vpop.f32.mrf.mxu0
    %v4033 = vpop.f32.mrf.mxu0
    %v4034 = vadd.f32 %v3745, %v4033
    %v4035 = vpop.f32.mrf.mxu0
    %4036 = vmatprep.mubr.bf16.mxu0 %v1862
    %4037 = vmatmul.mubr.bf16.gmra.mxu0 %v1861
    %v4038 = vpop.f32.mrf.mxu0
    %v4039 = vadd.f32 %v3750, %v4038
    %v4040 = vpop.f32.mrf.mxu0
    %v4041 = vpop.f32.mrf.mxu0
    %v4042 = vadd.f32 %v3753, %v4041
    %v4043 = vpop.f32.mrf.mxu0
    %4044 = vmatprep.mubr.bf16.mxu0 %v1866
    %4045 = vmatmul.mubr.bf16.gmra.mxu0 %v1865
    %v4046 = vpop.f32.mrf.mxu0
    %v4047 = vadd.f32 %v3758, %v4046
    %v4048 = vpop.f32.mrf.mxu0
    %v4049 = vpop.f32.mrf.mxu0
    %v4050 = vadd.f32 %v3761, %v4049
    %v4051 = vpop.f32.mrf.mxu0
    %4052 = vdwg.mxu0
    %s4053 = sld [smem:[#allocation2 + $0x3]]
    %v4054 = vstv %s4053
    %v4055 = vmul.f32 %v4054, %v3799
    %v4056 = vmul.f32 %v4054, %v3802
    %v4057 = vmul.f32 %v4054, %v3807
    %v4058 = vmul.f32 %v4054, %v3810
    %v4059 = vmul.f32 %v4054, %v3815
    %v4060 = vmul.f32 %v4054, %v3818
    %v4061 = vmul.f32 %v4054, %v3823
    %v4062 = vmul.f32 %v4054, %v3826
    %v4063 = vmul.f32 %v4054, %v3831
    %v4064 = vmul.f32 %v4054, %v3834
    %v4065 = vmul.f32 %v4054, %v3839
    %v4066 = vmul.f32 %v4054, %v3842
    %v4067 = vmul.f32 %v4054, %v3847
    %v4068 = vmul.f32 %v4054, %v3850
    %v4069 = vmul.f32 %v4054, %v3855
    %v4070 = vmul.f32 %v4054, %v3858
    %v4071 = vmul.f32 %v4054, %v3863
    %v4072 = vmul.f32 %v4054, %v3866
    %v4073 = vmul.f32 %v4054, %v3871
    %v4074 = vmul.f32 %v4054, %v3874
    %v4075 = vmul.f32 %v4054, %v3879
    %v4076 = vmul.f32 %v4054, %v3882
    %v4077 = vmul.f32 %v4054, %v3887
    %v4078 = vmul.f32 %v4054, %v3890
    %v4079 = vmul.f32 %v4054, %v3895
    %v4080 = vmul.f32 %v4054, %v3898
    %v4081 = vmul.f32 %v4054, %v3903
    %v4082 = vmul.f32 %v4054, %v3906
    %v4083 = vmul.f32 %v4054, %v3911
    %v4084 = vmul.f32 %v4054, %v3914
    %v4085 = vmul.f32 %v4054, %v3919
    %v4086 = vmul.f32 %v4054, %v3922
    %v4087 = vmul.f32 %v4054, %v3927
    %v4088 = vmul.f32 %v4054, %v3930
    %v4089 = vmul.f32 %v4054, %v3935
    %v4090 = vmul.f32 %v4054, %v3938
    %v4091 = vmul.f32 %v4054, %v3943
    %v4092 = vmul.f32 %v4054, %v3946
    %v4093 = vmul.f32 %v4054, %v3951
    %v4094 = vmul.f32 %v4054, %v3954
    %v4095 = vmul.f32 %v4054, %v3959
    %v4096 = vmul.f32 %v4054, %v3962
    %v4097 = vmul.f32 %v4054, %v3967
    %v4098 = vmul.f32 %v4054, %v3970
    %v4099 = vmul.f32 %v4054, %v3975
    %v4100 = vmul.f32 %v4054, %v3978
    %v4101 = vmul.f32 %v4054, %v3983
    %v4102 = vmul.f32 %v4054, %v3986
    %v4103 = vmul.f32 %v4054, %v3991
    %v4104 = vmul.f32 %v4054, %v3994
    %v4105 = vmul.f32 %v4054, %v3999
    %v4106 = vmul.f32 %v4054, %v4002
    %v4107 = vmul.f32 %v4054, %v4007
    %v4108 = vmul.f32 %v4054, %v4010
    %v4109 = vmul.f32 %v4054, %v4015
    %v4110 = vmul.f32 %v4054, %v4018
    %v4111 = vmul.f32 %v4054, %v4023
    %v4112 = vmul.f32 %v4054, %v4026
    %v4113 = vmul.f32 %v4054, %v4031
    %v4114 = vmul.f32 %v4054, %v4034
    %v4115 = vmul.f32 %v4054, %v4039
    %v4116 = vmul.f32 %v4054, %v4042
    %v4117 = vmul.f32 %v4054, %v4047
    %v4118 = vmul.f32 %v4054, %v4050
    %v4119 = vadd.f32 %v3379, %v4055
    %v4120 = vadd.f32 %v3380, %v4056
    %v4121 = vadd.f32 %v3381, %v4057
    %v4122 = vadd.f32 %v3382, %v4058
    %v4123 = vadd.f32 %v3383, %v4059
    %v4124 = vadd.f32 %v3384, %v4060
    %v4125 = vadd.f32 %v3385, %v4061
    %v4126 = vadd.f32 %v3386, %v4062
    %v4127 = vadd.f32 %v3387, %v4063
    %v4128 = vadd.f32 %v3388, %v4064
    %v4129 = vadd.f32 %v3389, %v4065
    %v4130 = vadd.f32 %v3390, %v4066
    %v4131 = vadd.f32 %v3391, %v4067
    %v4132 = vadd.f32 %v3392, %v4068
    %v4133 = vadd.f32 %v3393, %v4069
    %v4134 = vadd.f32 %v3394, %v4070
    %v4135 = vadd.f32 %v3395, %v4071
    %v4136 = vadd.f32 %v3396, %v4072
    %v4137 = vadd.f32 %v3397, %v4073
    %v4138 = vadd.f32 %v3398, %v4074
    %v4139 = vadd.f32 %v3399, %v4075
    %v4140 = vadd.f32 %v3400, %v4076
    %v4141 = vadd.f32 %v3401, %v4077
    %v4142 = vadd.f32 %v3402, %v4078
    %v4143 = vadd.f32 %v3403, %v4079
    %v4144 = vadd.f32 %v3404, %v4080
    %v4145 = vadd.f32 %v3405, %v4081
    %v4146 = vadd.f32 %v3406, %v4082
    %v4147 = vadd.f32 %v3407, %v4083
    %v4148 = vadd.f32 %v3408, %v4084
    %v4149 = vadd.f32 %v3409, %v4085
    %v4150 = vadd.f32 %v3410, %v4086
    %v4151 = vadd.f32 %v3411, %v4087
    %v4152 = vadd.f32 %v3412, %v4088
    %v4153 = vadd.f32 %v3413, %v4089
    %v4154 = vadd.f32 %v3414, %v4090
    %v4155 = vadd.f32 %v3415, %v4091
    %v4156 = vadd.f32 %v3416, %v4092
    %v4157 = vadd.f32 %v3417, %v4093
    %v4158 = vadd.f32 %v3418, %v4094
    %v4159 = vadd.f32 %v3419, %v4095
    %v4160 = vadd.f32 %v3420, %v4096
    %v4161 = vadd.f32 %v3421, %v4097
    %v4162 = vadd.f32 %v3422, %v4098
    %v4163 = vadd.f32 %v3423, %v4099
    %v4164 = vadd.f32 %v3424, %v4100
    %v4165 = vadd.f32 %v3425, %v4101
    %v4166 = vadd.f32 %v3426, %v4102
    %v4167 = vadd.f32 %v3427, %v4103
    %v4168 = vadd.f32 %v3428, %v4104
    %v4169 = vadd.f32 %v3429, %v4105
    %v4170 = vadd.f32 %v3430, %v4106
    %v4171 = vadd.f32 %v3431, %v4107
    %v4172 = vadd.f32 %v3432, %v4108
    %v4173 = vadd.f32 %v3433, %v4109
    %v4174 = vadd.f32 %v3434, %v4110
    %v4175 = vadd.f32 %v3435, %v4111
    %v4176 = vadd.f32 %v3436, %v4112
    %v4177 = vadd.f32 %v3437, %v4113
    %v4178 = vadd.f32 %v3438, %v4114
    %v4179 = vadd.f32 %v3439, %v4115
    %v4180 = vadd.f32 %v3440, %v4116
    %v4181 = vadd.f32 %v3441, %v4117
    %v4182 = vadd.f32 %v3442, %v4118
    %v4183 = vpack.c.bf16 %v3802, %v3799
    %v4184 = vpack.c.bf16 %v3810, %v3807
    %v4185 = vpack.c.bf16 %v3818, %v3815
    %v4186 = vpack.c.bf16 %v3826, %v3823
    %v4187 = vpack.c.bf16 %v3834, %v3831
    %v4188 = vpack.c.bf16 %v3842, %v3839
    %v4189 = vpack.c.bf16 %v3850, %v3847
    %v4190 = vpack.c.bf16 %v3858, %v3855
    %v4191 = vpack.c.bf16 %v3866, %v3863
    %v4192 = vpack.c.bf16 %v3874, %v3871
    %v4193 = vpack.c.bf16 %v3882, %v3879
    %v4194 = vpack.c.bf16 %v3890, %v3887
    %v4195 = vpack.c.bf16 %v3898, %v3895
    %v4196 = vpack.c.bf16 %v3906, %v3903
    %v4197 = vpack.c.bf16 %v3914, %v3911
    %v4198 = vpack.c.bf16 %v3922, %v3919
    %v4199 = vpack.c.bf16 %v3930, %v3927
    %v4200 = vpack.c.bf16 %v3938, %v3935
    %v4201 = vpack.c.bf16 %v3946, %v3943
    %v4202 = vpack.c.bf16 %v3954, %v3951
    %v4203 = vpack.c.bf16 %v3962, %v3959
    %v4204 = vpack.c.bf16 %v3970, %v3967
    %v4205 = vpack.c.bf16 %v3978, %v3975
    %v4206 = vpack.c.bf16 %v3986, %v3983
    %v4207 = vpack.c.bf16 %v3994, %v3991
    %v4208 = vpack.c.bf16 %v4002, %v3999
    %v4209 = vpack.c.bf16 %v4010, %v4007
    %v4210 = vpack.c.bf16 %v4018, %v4015
    %v4211 = vpack.c.bf16 %v4026, %v4023
    %v4212 = vpack.c.bf16 %v4034, %v4031
    %v4213 = vpack.c.bf16 %v4042, %v4039
    %v4214 = vpack.c.bf16 %v4050, %v4047
    %4215 = vmatprep.subr.bf16.mxu0 0
    %4216 = vmatpush1.bf16.msra.mxu0 %v4190
    %4217 = vmatprep.subr.bf16.mxu0 0
    %4218 = vmatpush1.bf16.msra.mxu0 %v4189
    %4219 = vmatprep.subr.bf16.mxu0 0
    %4220 = vmatpush1.bf16.msra.mxu0 %v4188
    %4221 = vmatprep.subr.bf16.mxu0 0
    %4222 = vmatpush1.bf16.msra.mxu0 %v4187
    %4223 = vmatprep.subr.bf16.mxu0 0
    %4224 = vmatpush1.bf16.msra.mxu0 %v4186
    %4225 = vmatprep.subr.bf16.mxu0 0
    %4226 = vmatpush1.bf16.msra.mxu0 %v4185
    %4227 = vmatprep.subr.bf16.mxu0 0
    %4228 = vmatpush1.bf16.msra.mxu0 %v4184
    %4229 = vmatprep.subr.bf16.mxu0 0
    %4230 = vmatpush1.bf16.msra.mxu0 %v4183
    %4231 = vmatprep.subr.bf16.mxu0 0
    %4232 = vmatpush2.bf16.msra.mxu0 %v4198
    %4233 = vmatprep.subr.bf16.mxu0 0
    %4234 = vmatpush2.bf16.msra.mxu0 %v4197
    %4235 = vmatprep.subr.bf16.mxu0 0
    %4236 = vmatpush2.bf16.msra.mxu0 %v4196
    %4237 = vmatprep.subr.bf16.mxu0 0
    %4238 = vmatpush2.bf16.msra.mxu0 %v4195
    %4239 = vmatprep.subr.bf16.mxu0 0
    %4240 = vmatpush2.bf16.msra.mxu0 %v4194
    %4241 = vmatprep.subr.bf16.mxu0 0
    %4242 = vmatpush2.bf16.msra.mxu0 %v4193
    %4243 = vmatprep.subr.bf16.mxu0 0
    %4244 = vmatpush2.bf16.msra.mxu0 %v4192
    %4245 = vmatprep.subr.bf16.mxu0 0
    %4246 = vmatpush2.bf16.msra.mxu0 %v4191
    %4247 = vmatprep.mubr.bf16.mxu0 %v1740
    %4248 = vmatmul.mubr.bf16.gmra.mxu0 %v1739
    %v4249 = vpop.f32.mrf.mxu0
    %v4250 = vadd.f32 0.0, %v4249
    %v4251 = vpop.f32.mrf.mxu0
    %v4252 = vpop.f32.mrf.mxu0
    %v4253 = vadd.f32 0.0, %v4252
    %v4254 = vpop.f32.mrf.mxu0
    %4255 = vmatprep.mubr.bf16.mxu0 %v1744
    %4256 = vmatmul.mubr.bf16.gmra.mxu0 %v1743
    %v4257 = vpop.f32.mrf.mxu0
    %v4258 = vadd.f32 0.0, %v4257
    %v4259 = vpop.f32.mrf.mxu0
    %v4260 = vpop.f32.mrf.mxu0
    %v4261 = vadd.f32 0.0, %v4260
    %v4262 = vpop.f32.mrf.mxu0
    %4263 = vmatprep.mubr.bf16.mxu0 %v1748
    %4264 = vmatmul.mubr.bf16.gmra.mxu0 %v1747
    %v4265 = vpop.f32.mrf.mxu0
    %v4266 = vadd.f32 0.0, %v4265
    %v4267 = vpop.f32.mrf.mxu0
    %v4268 = vpop.f32.mrf.mxu0
    %v4269 = vadd.f32 0.0, %v4268
    %v4270 = vpop.f32.mrf.mxu0
    %4271 = vmatprep.mubr.bf16.mxu0 %v1752
    %4272 = vmatmul.mubr.bf16.gmra.mxu0 %v1751
    %v4273 = vpop.f32.mrf.mxu0
    %v4274 = vadd.f32 0.0, %v4273
    %v4275 = vpop.f32.mrf.mxu0
    %v4276 = vpop.f32.mrf.mxu0
    %v4277 = vadd.f32 0.0, %v4276
    %v4278 = vpop.f32.mrf.mxu0
    %4279 = vmatprep.mubr.bf16.mxu0 %v1756
    %4280 = vmatmul.mubr.bf16.gmra.mxu0 %v1755
    %v4281 = vpop.f32.mrf.mxu0
    %v4282 = vadd.f32 0.0, %v4281
    %v4283 = vpop.f32.mrf.mxu0
    %v4284 = vpop.f32.mrf.mxu0
    %v4285 = vadd.f32 0.0, %v4284
    %v4286 = vpop.f32.mrf.mxu0
    %4287 = vmatprep.mubr.bf16.mxu0 %v1760
    %4288 = vmatmul.mubr.bf16.gmra.mxu0 %v1759
    %v4289 = vpop.f32.mrf.mxu0
    %v4290 = vadd.f32 0.0, %v4289
    %v4291 = vpop.f32.mrf.mxu0
    %v4292 = vpop.f32.mrf.mxu0
    %v4293 = vadd.f32 0.0, %v4292
    %v4294 = vpop.f32.mrf.mxu0
    %4295 = vmatprep.mubr.bf16.mxu0 %v1764
    %4296 = vmatmul.mubr.bf16.gmra.mxu0 %v1763
    %v4297 = vpop.f32.mrf.mxu0
    %v4298 = vadd.f32 0.0, %v4297
    %v4299 = vpop.f32.mrf.mxu0
    %v4300 = vpop.f32.mrf.mxu0
    %v4301 = vadd.f32 0.0, %v4300
    %v4302 = vpop.f32.mrf.mxu0
    %4303 = vmatprep.mubr.bf16.mxu0 %v1768
    %4304 = vmatmul.mubr.bf16.gmra.mxu0 %v1767
    %v4305 = vpop.f32.mrf.mxu0
    %v4306 = vadd.f32 0.0, %v4305
    %v4307 = vpop.f32.mrf.mxu0
    %v4308 = vpop.f32.mrf.mxu0
    %v4309 = vadd.f32 0.0, %v4308
    %v4310 = vpop.f32.mrf.mxu0
    %4311 = vmatprep.mubr.bf16.mxu0 %v1772
    %4312 = vmatmul.mubr.bf16.gmra.mxu0 %v1771
    %v4313 = vpop.f32.mrf.mxu0
    %v4314 = vadd.f32 0.0, %v4313
    %v4315 = vpop.f32.mrf.mxu0
    %v4316 = vpop.f32.mrf.mxu0
    %v4317 = vadd.f32 0.0, %v4316
    %v4318 = vpop.f32.mrf.mxu0
    %4319 = vmatprep.mubr.bf16.mxu0 %v1776
    %4320 = vmatmul.mubr.bf16.gmra.mxu0 %v1775
    %v4321 = vpop.f32.mrf.mxu0
    %v4322 = vadd.f32 0.0, %v4321
    %v4323 = vpop.f32.mrf.mxu0
    %v4324 = vpop.f32.mrf.mxu0
    %v4325 = vadd.f32 0.0, %v4324
    %v4326 = vpop.f32.mrf.mxu0
    %4327 = vmatprep.mubr.bf16.mxu0 %v1780
    %4328 = vmatmul.mubr.bf16.gmra.mxu0 %v1779
    %v4329 = vpop.f32.mrf.mxu0
    %v4330 = vadd.f32 0.0, %v4329
    %v4331 = vpop.f32.mrf.mxu0
    %v4332 = vpop.f32.mrf.mxu0
    %v4333 = vadd.f32 0.0, %v4332
    %v4334 = vpop.f32.mrf.mxu0
    %4335 = vmatprep.mubr.bf16.mxu0 %v1784
    %4336 = vmatmul.mubr.bf16.gmra.mxu0 %v1783
    %v4337 = vpop.f32.mrf.mxu0
    %v4338 = vadd.f32 0.0, %v4337
    %v4339 = vpop.f32.mrf.mxu0
    %v4340 = vpop.f32.mrf.mxu0
    %v4341 = vadd.f32 0.0, %v4340
    %v4342 = vpop.f32.mrf.mxu0
    %4343 = vmatprep.mubr.bf16.mxu0 %v1788
    %4344 = vmatmul.mubr.bf16.gmra.mxu0 %v1787
    %v4345 = vpop.f32.mrf.mxu0
    %v4346 = vadd.f32 0.0, %v4345
    %v4347 = vpop.f32.mrf.mxu0
    %v4348 = vpop.f32.mrf.mxu0
    %v4349 = vadd.f32 0.0, %v4348
    %v4350 = vpop.f32.mrf.mxu0
    %4351 = vmatprep.mubr.bf16.mxu0 %v1792
    %4352 = vmatmul.mubr.bf16.gmra.mxu0 %v1791
    %v4353 = vpop.f32.mrf.mxu0
    %v4354 = vadd.f32 0.0, %v4353
    %v4355 = vpop.f32.mrf.mxu0
    %v4356 = vpop.f32.mrf.mxu0
    %v4357 = vadd.f32 0.0, %v4356
    %v4358 = vpop.f32.mrf.mxu0
    %4359 = vmatprep.mubr.bf16.mxu0 %v1796
    %4360 = vmatmul.mubr.bf16.gmra.mxu0 %v1795
    %v4361 = vpop.f32.mrf.mxu0
    %v4362 = vadd.f32 0.0, %v4361
    %v4363 = vpop.f32.mrf.mxu0
    %v4364 = vpop.f32.mrf.mxu0
    %v4365 = vadd.f32 0.0, %v4364
    %v4366 = vpop.f32.mrf.mxu0
    %4367 = vmatprep.mubr.bf16.mxu0 %v1800
    %4368 = vmatmul.mubr.bf16.gmra.mxu0 %v1799
    %v4369 = vpop.f32.mrf.mxu0
    %v4370 = vadd.f32 0.0, %v4369
    %v4371 = vpop.f32.mrf.mxu0
    %v4372 = vpop.f32.mrf.mxu0
    %v4373 = vadd.f32 0.0, %v4372
    %v4374 = vpop.f32.mrf.mxu0
    %4375 = vmatprep.mubr.bf16.mxu0 %v1804
    %4376 = vmatmul.mubr.bf16.gmra.mxu0 %v1803
    %v4377 = vpop.f32.mrf.mxu0
    %v4378 = vadd.f32 0.0, %v4377
    %v4379 = vpop.f32.mrf.mxu0
    %v4380 = vpop.f32.mrf.mxu0
    %v4381 = vadd.f32 0.0, %v4380
    %v4382 = vpop.f32.mrf.mxu0
    %4383 = vmatprep.mubr.bf16.mxu0 %v1808
    %4384 = vmatmul.mubr.bf16.gmra.mxu0 %v1807
    %v4385 = vpop.f32.mrf.mxu0
    %v4386 = vadd.f32 0.0, %v4385
    %v4387 = vpop.f32.mrf.mxu0
    %v4388 = vpop.f32.mrf.mxu0
    %v4389 = vadd.f32 0.0, %v4388
    %v4390 = vpop.f32.mrf.mxu0
    %4391 = vmatprep.mubr.bf16.mxu0 %v1812
    %4392 = vmatmul.mubr.bf16.gmra.mxu0 %v1811
    %v4393 = vpop.f32.mrf.mxu0
    %v4394 = vadd.f32 0.0, %v4393
    %v4395 = vpop.f32.mrf.mxu0
    %v4396 = vpop.f32.mrf.mxu0
    %v4397 = vadd.f32 0.0, %v4396
    %v4398 = vpop.f32.mrf.mxu0
    %4399 = vmatprep.mubr.bf16.mxu0 %v1816
    %4400 = vmatmul.mubr.bf16.gmra.mxu0 %v1815
    %v4401 = vpop.f32.mrf.mxu0
    %v4402 = vadd.f32 0.0, %v4401
    %v4403 = vpop.f32.mrf.mxu0
    %v4404 = vpop.f32.mrf.mxu0
    %v4405 = vadd.f32 0.0, %v4404
    %v4406 = vpop.f32.mrf.mxu0
    %4407 = vmatprep.mubr.bf16.mxu0 %v1820
    %4408 = vmatmul.mubr.bf16.gmra.mxu0 %v1819
    %v4409 = vpop.f32.mrf.mxu0
    %v4410 = vadd.f32 0.0, %v4409
    %v4411 = vpop.f32.mrf.mxu0
    %v4412 = vpop.f32.mrf.mxu0
    %v4413 = vadd.f32 0.0, %v4412
    %v4414 = vpop.f32.mrf.mxu0
    %4415 = vmatprep.mubr.bf16.mxu0 %v1824
    %4416 = vmatmul.mubr.bf16.gmra.mxu0 %v1823
    %v4417 = vpop.f32.mrf.mxu0
    %v4418 = vadd.f32 0.0, %v4417
    %v4419 = vpop.f32.mrf.mxu0
    %v4420 = vpop.f32.mrf.mxu0
    %v4421 = vadd.f32 0.0, %v4420
    %v4422 = vpop.f32.mrf.mxu0
    %4423 = vmatprep.mubr.bf16.mxu0 %v1828
    %4424 = vmatmul.mubr.bf16.gmra.mxu0 %v1827
    %v4425 = vpop.f32.mrf.mxu0
    %v4426 = vadd.f32 0.0, %v4425
    %v4427 = vpop.f32.mrf.mxu0
    %v4428 = vpop.f32.mrf.mxu0
    %v4429 = vadd.f32 0.0, %v4428
    %v4430 = vpop.f32.mrf.mxu0
    %4431 = vmatprep.mubr.bf16.mxu0 %v1832
    %4432 = vmatmul.mubr.bf16.gmra.mxu0 %v1831
    %v4433 = vpop.f32.mrf.mxu0
    %v4434 = vadd.f32 0.0, %v4433
    %v4435 = vpop.f32.mrf.mxu0
    %v4436 = vpop.f32.mrf.mxu0
    %v4437 = vadd.f32 0.0, %v4436
    %v4438 = vpop.f32.mrf.mxu0
    %4439 = vmatprep.mubr.bf16.mxu0 %v1836
    %4440 = vmatmul.mubr.bf16.gmra.mxu0 %v1835
    %v4441 = vpop.f32.mrf.mxu0
    %v4442 = vadd.f32 0.0, %v4441
    %v4443 = vpop.f32.mrf.mxu0
    %v4444 = vpop.f32.mrf.mxu0
    %v4445 = vadd.f32 0.0, %v4444
    %v4446 = vpop.f32.mrf.mxu0
    %4447 = vmatprep.mubr.bf16.mxu0 %v1840
    %4448 = vmatmul.mubr.bf16.gmra.mxu0 %v1839
    %v4449 = vpop.f32.mrf.mxu0
    %v4450 = vadd.f32 0.0, %v4449
    %v4451 = vpop.f32.mrf.mxu0
    %v4452 = vpop.f32.mrf.mxu0
    %v4453 = vadd.f32 0.0, %v4452
    %v4454 = vpop.f32.mrf.mxu0
    %4455 = vmatprep.mubr.bf16.mxu0 %v1844
    %4456 = vmatmul.mubr.bf16.gmra.mxu0 %v1843
    %v4457 = vpop.f32.mrf.mxu0
    %v4458 = vadd.f32 0.0, %v4457
    %v4459 = vpop.f32.mrf.mxu0
    %v4460 = vpop.f32.mrf.mxu0
    %v4461 = vadd.f32 0.0, %v4460
    %v4462 = vpop.f32.mrf.mxu0
    %4463 = vmatprep.mubr.bf16.mxu0 %v1848
    %4464 = vmatmul.mubr.bf16.gmra.mxu0 %v1847
    %v4465 = vpop.f32.mrf.mxu0
    %v4466 = vadd.f32 0.0, %v4465
    %v4467 = vpop.f32.mrf.mxu0
    %v4468 = vpop.f32.mrf.mxu0
    %v4469 = vadd.f32 0.0, %v4468
    %v4470 = vpop.f32.mrf.mxu0
    %4471 = vmatprep.mubr.bf16.mxu0 %v1852
    %4472 = vmatmul.mubr.bf16.gmra.mxu0 %v1851
    %v4473 = vpop.f32.mrf.mxu0
    %v4474 = vadd.f32 0.0, %v4473
    %v4475 = vpop.f32.mrf.mxu0
    %v4476 = vpop.f32.mrf.mxu0
    %v4477 = vadd.f32 0.0, %v4476
    %v4478 = vpop.f32.mrf.mxu0
    %4479 = vmatprep.mubr.bf16.mxu0 %v1856
    %4480 = vmatmul.mubr.bf16.gmra.mxu0 %v1855
    %v4481 = vpop.f32.mrf.mxu0
    %v4482 = vadd.f32 0.0, %v4481
    %v4483 = vpop.f32.mrf.mxu0
    %v4484 = vpop.f32.mrf.mxu0
    %v4485 = vadd.f32 0.0, %v4484
    %v4486 = vpop.f32.mrf.mxu0
    %4487 = vmatprep.mubr.bf16.mxu0 %v1860
    %4488 = vmatmul.mubr.bf16.gmra.mxu0 %v1859
    %v4489 = vpop.f32.mrf.mxu0
    %v4490 = vadd.f32 0.0, %v4489
    %v4491 = vpop.f32.mrf.mxu0
    %v4492 = vpop.f32.mrf.mxu0
    %v4493 = vadd.f32 0.0, %v4492
    %v4494 = vpop.f32.mrf.mxu0
    %4495 = vmatprep.mubr.bf16.mxu0 %v1864
    %4496 = vmatmul.mubr.bf16.gmra.mxu0 %v1863
    %v4497 = vpop.f32.mrf.mxu0
    %v4498 = vadd.f32 0.0, %v4497
    %v4499 = vpop.f32.mrf.mxu0
    %v4500 = vpop.f32.mrf.mxu0
    %v4501 = vadd.f32 0.0, %v4500
    %v4502 = vpop.f32.mrf.mxu0
    %4503 = vdwg.mxu0
    %4504 = vmatprep.subr.bf16.mxu0 0
    %4505 = vmatpush1.bf16.msra.mxu0 %v4206
    %4506 = vmatprep.subr.bf16.mxu0 0
    %4507 = vmatpush1.bf16.msra.mxu0 %v4205
    %4508 = vmatprep.subr.bf16.mxu0 0
    %4509 = vmatpush1.bf16.msra.mxu0 %v4204
    %4510 = vmatprep.subr.bf16.mxu0 0
    %4511 = vmatpush1.bf16.msra.mxu0 %v4203
    %4512 = vmatprep.subr.bf16.mxu0 0
    %4513 = vmatpush1.bf16.msra.mxu0 %v4202
    %4514 = vmatprep.subr.bf16.mxu0 0
    %4515 = vmatpush1.bf16.msra.mxu0 %v4201
    %4516 = vmatprep.subr.bf16.mxu0 0
    %4517 = vmatpush1.bf16.msra.mxu0 %v4200
    %4518 = vmatprep.subr.bf16.mxu0 0
    %4519 = vmatpush1.bf16.msra.mxu0 %v4199
    %4520 = vmatprep.subr.bf16.mxu0 0
    %4521 = vmatpush2.bf16.msra.mxu0 %v4214
    %4522 = vmatprep.subr.bf16.mxu0 0
    %4523 = vmatpush2.bf16.msra.mxu0 %v4213
    %4524 = vmatprep.subr.bf16.mxu0 0
    %4525 = vmatpush2.bf16.msra.mxu0 %v4212
    %4526 = vmatprep.subr.bf16.mxu0 0
    %4527 = vmatpush2.bf16.msra.mxu0 %v4211
    %4528 = vmatprep.subr.bf16.mxu0 0
    %4529 = vmatpush2.bf16.msra.mxu0 %v4210
    %4530 = vmatprep.subr.bf16.mxu0 0
    %4531 = vmatpush2.bf16.msra.mxu0 %v4209
    %4532 = vmatprep.subr.bf16.mxu0 0
    %4533 = vmatpush2.bf16.msra.mxu0 %v4208
    %4534 = vmatprep.subr.bf16.mxu0 0
    %4535 = vmatpush2.bf16.msra.mxu0 %v4207
    %4536 = vmatprep.mubr.bf16.mxu0 %v1742
    %4537 = vmatmul.mubr.bf16.gmra.mxu0 %v1741
    %v4538 = vpop.f32.mrf.mxu0
    %v4539 = vadd.f32 %v4250, %v4538
    %v4540 = vpop.f32.mrf.mxu0
    %v4541 = vpop.f32.mrf.mxu0
    %v4542 = vadd.f32 %v4253, %v4541
    %v4543 = vpop.f32.mrf.mxu0
    %4544 = vmatprep.mubr.bf16.mxu0 %v1746
    %4545 = vmatmul.mubr.bf16.gmra.mxu0 %v1745
    %v4546 = vpop.f32.mrf.mxu0
    %v4547 = vadd.f32 %v4258, %v4546
    %v4548 = vpop.f32.mrf.mxu0
    %v4549 = vpop.f32.mrf.mxu0
    %v4550 = vadd.f32 %v4261, %v4549
    %v4551 = vpop.f32.mrf.mxu0
    %4552 = vmatprep.mubr.bf16.mxu0 %v1750
    %4553 = vmatmul.mubr.bf16.gmra.mxu0 %v1749
    %v4554 = vpop.f32.mrf.mxu0
    %v4555 = vadd.f32 %v4266, %v4554
    %v4556 = vpop.f32.mrf.mxu0
    %v4557 = vpop.f32.mrf.mxu0
    %v4558 = vadd.f32 %v4269, %v4557
    %v4559 = vpop.f32.mrf.mxu0
    %4560 = vmatprep.mubr.bf16.mxu0 %v1754
    %4561 = vmatmul.mubr.bf16.gmra.mxu0 %v1753
    %v4562 = vpop.f32.mrf.mxu0
    %v4563 = vadd.f32 %v4274, %v4562
    %v4564 = vpop.f32.mrf.mxu0
    %v4565 = vpop.f32.mrf.mxu0
    %v4566 = vadd.f32 %v4277, %v4565
    %v4567 = vpop.f32.mrf.mxu0
    %4568 = vmatprep.mubr.bf16.mxu0 %v1758
    %4569 = vmatmul.mubr.bf16.gmra.mxu0 %v1757
    %v4570 = vpop.f32.mrf.mxu0
    %v4571 = vadd.f32 %v4282, %v4570
    %v4572 = vpop.f32.mrf.mxu0
    %v4573 = vpop.f32.mrf.mxu0
    %v4574 = vadd.f32 %v4285, %v4573
    %v4575 = vpop.f32.mrf.mxu0
    %4576 = vmatprep.mubr.bf16.mxu0 %v1762
    %4577 = vmatmul.mubr.bf16.gmra.mxu0 %v1761
    %v4578 = vpop.f32.mrf.mxu0
    %v4579 = vadd.f32 %v4290, %v4578
    %v4580 = vpop.f32.mrf.mxu0
    %v4581 = vpop.f32.mrf.mxu0
    %v4582 = vadd.f32 %v4293, %v4581
    %v4583 = vpop.f32.mrf.mxu0
    %4584 = vmatprep.mubr.bf16.mxu0 %v1766
    %4585 = vmatmul.mubr.bf16.gmra.mxu0 %v1765
    %v4586 = vpop.f32.mrf.mxu0
    %v4587 = vadd.f32 %v4298, %v4586
    %v4588 = vpop.f32.mrf.mxu0
    %v4589 = vpop.f32.mrf.mxu0
    %v4590 = vadd.f32 %v4301, %v4589
    %v4591 = vpop.f32.mrf.mxu0
    %4592 = vmatprep.mubr.bf16.mxu0 %v1770
    %4593 = vmatmul.mubr.bf16.gmra.mxu0 %v1769
    %v4594 = vpop.f32.mrf.mxu0
    %v4595 = vadd.f32 %v4306, %v4594
    %v4596 = vpop.f32.mrf.mxu0
    %v4597 = vpop.f32.mrf.mxu0
    %v4598 = vadd.f32 %v4309, %v4597
    %v4599 = vpop.f32.mrf.mxu0
    %4600 = vmatprep.mubr.bf16.mxu0 %v1774
    %4601 = vmatmul.mubr.bf16.gmra.mxu0 %v1773
    %v4602 = vpop.f32.mrf.mxu0
    %v4603 = vadd.f32 %v4314, %v4602
    %v4604 = vpop.f32.mrf.mxu0
    %v4605 = vpop.f32.mrf.mxu0
    %v4606 = vadd.f32 %v4317, %v4605
    %v4607 = vpop.f32.mrf.mxu0
    %4608 = vmatprep.mubr.bf16.mxu0 %v1778
    %4609 = vmatmul.mubr.bf16.gmra.mxu0 %v1777
    %v4610 = vpop.f32.mrf.mxu0
    %v4611 = vadd.f32 %v4322, %v4610
    %v4612 = vpop.f32.mrf.mxu0
    %v4613 = vpop.f32.mrf.mxu0
    %v4614 = vadd.f32 %v4325, %v4613
    %v4615 = vpop.f32.mrf.mxu0
    %4616 = vmatprep.mubr.bf16.mxu0 %v1782
    %4617 = vmatmul.mubr.bf16.gmra.mxu0 %v1781
    %v4618 = vpop.f32.mrf.mxu0
    %v4619 = vadd.f32 %v4330, %v4618
    %v4620 = vpop.f32.mrf.mxu0
    %v4621 = vpop.f32.mrf.mxu0
    %v4622 = vadd.f32 %v4333, %v4621
    %v4623 = vpop.f32.mrf.mxu0
    %4624 = vmatprep.mubr.bf16.mxu0 %v1786
    %4625 = vmatmul.mubr.bf16.gmra.mxu0 %v1785
    %v4626 = vpop.f32.mrf.mxu0
    %v4627 = vadd.f32 %v4338, %v4626
    %v4628 = vpop.f32.mrf.mxu0
    %v4629 = vpop.f32.mrf.mxu0
    %v4630 = vadd.f32 %v4341, %v4629
    %v4631 = vpop.f32.mrf.mxu0
    %4632 = vmatprep.mubr.bf16.mxu0 %v1790
    %4633 = vmatmul.mubr.bf16.gmra.mxu0 %v1789
    %v4634 = vpop.f32.mrf.mxu0
    %v4635 = vadd.f32 %v4346, %v4634
    %v4636 = vpop.f32.mrf.mxu0
    %v4637 = vpop.f32.mrf.mxu0
    %v4638 = vadd.f32 %v4349, %v4637
    %v4639 = vpop.f32.mrf.mxu0
    %4640 = vmatprep.mubr.bf16.mxu0 %v1794
    %4641 = vmatmul.mubr.bf16.gmra.mxu0 %v1793
    %v4642 = vpop.f32.mrf.mxu0
    %v4643 = vadd.f32 %v4354, %v4642
    %v4644 = vpop.f32.mrf.mxu0
    %v4645 = vpop.f32.mrf.mxu0
    %v4646 = vadd.f32 %v4357, %v4645
    %v4647 = vpop.f32.mrf.mxu0
    %4648 = vmatprep.mubr.bf16.mxu0 %v1798
    %4649 = vmatmul.mubr.bf16.gmra.mxu0 %v1797
    %v4650 = vpop.f32.mrf.mxu0
    %v4651 = vadd.f32 %v4362, %v4650
    %v4652 = vpop.f32.mrf.mxu0
    %v4653 = vpop.f32.mrf.mxu0
    %v4654 = vadd.f32 %v4365, %v4653
    %v4655 = vpop.f32.mrf.mxu0
    %4656 = vmatprep.mubr.bf16.mxu0 %v1802
    %4657 = vmatmul.mubr.bf16.gmra.mxu0 %v1801
    %v4658 = vpop.f32.mrf.mxu0
    %v4659 = vadd.f32 %v4370, %v4658
    %v4660 = vpop.f32.mrf.mxu0
    %v4661 = vpop.f32.mrf.mxu0
    %v4662 = vadd.f32 %v4373, %v4661
    %v4663 = vpop.f32.mrf.mxu0
    %4664 = vmatprep.mubr.bf16.mxu0 %v1806
    %4665 = vmatmul.mubr.bf16.gmra.mxu0 %v1805
    %v4666 = vpop.f32.mrf.mxu0
    %v4667 = vadd.f32 %v4378, %v4666
    %v4668 = vpop.f32.mrf.mxu0
    %v4669 = vpop.f32.mrf.mxu0
    %v4670 = vadd.f32 %v4381, %v4669
    %v4671 = vpop.f32.mrf.mxu0
    %4672 = vmatprep.mubr.bf16.mxu0 %v1810
    %4673 = vmatmul.mubr.bf16.gmra.mxu0 %v1809
    %v4674 = vpop.f32.mrf.mxu0
    %v4675 = vadd.f32 %v4386, %v4674
    %v4676 = vpop.f32.mrf.mxu0
    %v4677 = vpop.f32.mrf.mxu0
    %v4678 = vadd.f32 %v4389, %v4677
    %v4679 = vpop.f32.mrf.mxu0
    %4680 = vmatprep.mubr.bf16.mxu0 %v1814
    %4681 = vmatmul.mubr.bf16.gmra.mxu0 %v1813
    %v4682 = vpop.f32.mrf.mxu0
    %v4683 = vadd.f32 %v4394, %v4682
    %v4684 = vpop.f32.mrf.mxu0
    %v4685 = vpop.f32.mrf.mxu0
    %v4686 = vadd.f32 %v4397, %v4685
    %v4687 = vpop.f32.mrf.mxu0
    %4688 = vmatprep.mubr.bf16.mxu0 %v1818
    %4689 = vmatmul.mubr.bf16.gmra.mxu0 %v1817
    %v4690 = vpop.f32.mrf.mxu0
    %v4691 = vadd.f32 %v4402, %v4690
    %v4692 = vpop.f32.mrf.mxu0
    %v4693 = vpop.f32.mrf.mxu0
    %v4694 = vadd.f32 %v4405, %v4693
    %v4695 = vpop.f32.mrf.mxu0
    %4696 = vmatprep.mubr.bf16.mxu0 %v1822
    %4697 = vmatmul.mubr.bf16.gmra.mxu0 %v1821
    %v4698 = vpop.f32.mrf.mxu0
    %v4699 = vadd.f32 %v4410, %v4698
    %v4700 = vpop.f32.mrf.mxu0
    %v4701 = vpop.f32.mrf.mxu0
    %v4702 = vadd.f32 %v4413, %v4701
    %v4703 = vpop.f32.mrf.mxu0
    %4704 = vmatprep.mubr.bf16.mxu0 %v1826
    %4705 = vmatmul.mubr.bf16.gmra.mxu0 %v1825
    %v4706 = vpop.f32.mrf.mxu0
    %v4707 = vadd.f32 %v4418, %v4706
    %v4708 = vpop.f32.mrf.mxu0
    %v4709 = vpop.f32.mrf.mxu0
    %v4710 = vadd.f32 %v4421, %v4709
    %v4711 = vpop.f32.mrf.mxu0
    %4712 = vmatprep.mubr.bf16.mxu0 %v1830
    %4713 = vmatmul.mubr.bf16.gmra.mxu0 %v1829
    %v4714 = vpop.f32.mrf.mxu0
    %v4715 = vadd.f32 %v4426, %v4714
    %v4716 = vpop.f32.mrf.mxu0
    %v4717 = vpop.f32.mrf.mxu0
    %v4718 = vadd.f32 %v4429, %v4717
    %v4719 = vpop.f32.mrf.mxu0
    %4720 = vmatprep.mubr.bf16.mxu0 %v1834
    %4721 = vmatmul.mubr.bf16.gmra.mxu0 %v1833
    %v4722 = vpop.f32.mrf.mxu0
    %v4723 = vadd.f32 %v4434, %v4722
    %v4724 = vpop.f32.mrf.mxu0
    %v4725 = vpop.f32.mrf.mxu0
    %v4726 = vadd.f32 %v4437, %v4725
    %v4727 = vpop.f32.mrf.mxu0
    %4728 = vmatprep.mubr.bf16.mxu0 %v1838
    %4729 = vmatmul.mubr.bf16.gmra.mxu0 %v1837
    %v4730 = vpop.f32.mrf.mxu0
    %v4731 = vadd.f32 %v4442, %v4730
    %v4732 = vpop.f32.mrf.mxu0
    %v4733 = vpop.f32.mrf.mxu0
    %v4734 = vadd.f32 %v4445, %v4733
    %v4735 = vpop.f32.mrf.mxu0
    %4736 = vmatprep.mubr.bf16.mxu0 %v1842
    %4737 = vmatmul.mubr.bf16.gmra.mxu0 %v1841
    %v4738 = vpop.f32.mrf.mxu0
    %v4739 = vadd.f32 %v4450, %v4738
    %v4740 = vpop.f32.mrf.mxu0
    %v4741 = vpop.f32.mrf.mxu0
    %v4742 = vadd.f32 %v4453, %v4741
    %v4743 = vpop.f32.mrf.mxu0
    %4744 = vmatprep.mubr.bf16.mxu0 %v1846
    %4745 = vmatmul.mubr.bf16.gmra.mxu0 %v1845
    %v4746 = vpop.f32.mrf.mxu0
    %v4747 = vadd.f32 %v4458, %v4746
    %v4748 = vpop.f32.mrf.mxu0
    %v4749 = vpop.f32.mrf.mxu0
    %v4750 = vadd.f32 %v4461, %v4749
    %v4751 = vpop.f32.mrf.mxu0
    %4752 = vmatprep.mubr.bf16.mxu0 %v1850
    %4753 = vmatmul.mubr.bf16.gmra.mxu0 %v1849
    %v4754 = vpop.f32.mrf.mxu0
    %v4755 = vadd.f32 %v4466, %v4754
    %v4756 = vpop.f32.mrf.mxu0
    %v4757 = vpop.f32.mrf.mxu0
    %v4758 = vadd.f32 %v4469, %v4757
    %v4759 = vpop.f32.mrf.mxu0
    %4760 = vmatprep.mubr.bf16.mxu0 %v1854
    %4761 = vmatmul.mubr.bf16.gmra.mxu0 %v1853
    %v4762 = vpop.f32.mrf.mxu0
    %v4763 = vadd.f32 %v4474, %v4762
    %v4764 = vpop.f32.mrf.mxu0
    %v4765 = vpop.f32.mrf.mxu0
    %v4766 = vadd.f32 %v4477, %v4765
    %v4767 = vpop.f32.mrf.mxu0
    %4768 = vmatprep.mubr.bf16.mxu0 %v1858
    %4769 = vmatmul.mubr.bf16.gmra.mxu0 %v1857
    %v4770 = vpop.f32.mrf.mxu0
    %v4771 = vadd.f32 %v4482, %v4770
    %v4772 = vpop.f32.mrf.mxu0
    %v4773 = vpop.f32.mrf.mxu0
    %v4774 = vadd.f32 %v4485, %v4773
    %v4775 = vpop.f32.mrf.mxu0
    %4776 = vmatprep.mubr.bf16.mxu0 %v1862
    %4777 = vmatmul.mubr.bf16.gmra.mxu0 %v1861
    %v4778 = vpop.f32.mrf.mxu0
    %v4779 = vadd.f32 %v4490, %v4778
    %v4780 = vpop.f32.mrf.mxu0
    %v4781 = vpop.f32.mrf.mxu0
    %v4782 = vadd.f32 %v4493, %v4781
    %v4783 = vpop.f32.mrf.mxu0
    %4784 = vmatprep.mubr.bf16.mxu0 %v1866
    %4785 = vmatmul.mubr.bf16.gmra.mxu0 %v1865
    %v4786 = vpop.f32.mrf.mxu0
    %v4787 = vadd.f32 %v4498, %v4786
    %v4788 = vpop.f32.mrf.mxu0
    %v4789 = vpop.f32.mrf.mxu0
    %v4790 = vadd.f32 %v4501, %v4789
    %v4791 = vpop.f32.mrf.mxu0
    %4792 = vdwg.mxu0
    %s4793 = sld [smem:[#allocation2 + $0x4]]
    %v4794 = vstv %s4793
    %v4795 = vmul.f32 %v4794, %v4539
    %v4796 = vmul.f32 %v4794, %v4542
    %v4797 = vmul.f32 %v4794, %v4547
    %v4798 = vmul.f32 %v4794, %v4550
    %v4799 = vmul.f32 %v4794, %v4555
    %v4800 = vmul.f32 %v4794, %v4558
    %v4801 = vmul.f32 %v4794, %v4563
    %v4802 = vmul.f32 %v4794, %v4566
    %v4803 = vmul.f32 %v4794, %v4571
    %v4804 = vmul.f32 %v4794, %v4574
    %v4805 = vmul.f32 %v4794, %v4579
    %v4806 = vmul.f32 %v4794, %v4582
    %v4807 = vmul.f32 %v4794, %v4587
    %v4808 = vmul.f32 %v4794, %v4590
    %v4809 = vmul.f32 %v4794, %v4595
    %v4810 = vmul.f32 %v4794, %v4598
    %v4811 = vmul.f32 %v4794, %v4603
    %v4812 = vmul.f32 %v4794, %v4606
    %v4813 = vmul.f32 %v4794, %v4611
    %v4814 = vmul.f32 %v4794, %v4614
    %v4815 = vmul.f32 %v4794, %v4619
    %v4816 = vmul.f32 %v4794, %v4622
    %v4817 = vmul.f32 %v4794, %v4627
    %v4818 = vmul.f32 %v4794, %v4630
    %v4819 = vmul.f32 %v4794, %v4635
    %v4820 = vmul.f32 %v4794, %v4638
    %v4821 = vmul.f32 %v4794, %v4643
    %v4822 = vmul.f32 %v4794, %v4646
    %v4823 = vmul.f32 %v4794, %v4651
    %v4824 = vmul.f32 %v4794, %v4654
    %v4825 = vmul.f32 %v4794, %v4659
    %v4826 = vmul.f32 %v4794, %v4662
    %v4827 = vmul.f32 %v4794, %v4667
    %v4828 = vmul.f32 %v4794, %v4670
    %v4829 = vmul.f32 %v4794, %v4675
    %v4830 = vmul.f32 %v4794, %v4678
    %v4831 = vmul.f32 %v4794, %v4683
    %v4832 = vmul.f32 %v4794, %v4686
    %v4833 = vmul.f32 %v4794, %v4691
    %v4834 = vmul.f32 %v4794, %v4694
    %v4835 = vmul.f32 %v4794, %v4699
    %v4836 = vmul.f32 %v4794, %v4702
    %v4837 = vmul.f32 %v4794, %v4707
    %v4838 = vmul.f32 %v4794, %v4710
    %v4839 = vmul.f32 %v4794, %v4715
    %v4840 = vmul.f32 %v4794, %v4718
    %v4841 = vmul.f32 %v4794, %v4723
    %v4842 = vmul.f32 %v4794, %v4726
    %v4843 = vmul.f32 %v4794, %v4731
    %v4844 = vmul.f32 %v4794, %v4734
    %v4845 = vmul.f32 %v4794, %v4739
    %v4846 = vmul.f32 %v4794, %v4742
    %v4847 = vmul.f32 %v4794, %v4747
    %v4848 = vmul.f32 %v4794, %v4750
    %v4849 = vmul.f32 %v4794, %v4755
    %v4850 = vmul.f32 %v4794, %v4758
    %v4851 = vmul.f32 %v4794, %v4763
    %v4852 = vmul.f32 %v4794, %v4766
    %v4853 = vmul.f32 %v4794, %v4771
    %v4854 = vmul.f32 %v4794, %v4774
    %v4855 = vmul.f32 %v4794, %v4779
    %v4856 = vmul.f32 %v4794, %v4782
    %v4857 = vmul.f32 %v4794, %v4787
    %v4858 = vmul.f32 %v4794, %v4790
    %v4859 = vadd.f32 %v4119, %v4795
    %v4860 = vadd.f32 %v4120, %v4796
    %v4861 = vadd.f32 %v4121, %v4797
    %v4862 = vadd.f32 %v4122, %v4798
    %v4863 = vadd.f32 %v4123, %v4799
    %v4864 = vadd.f32 %v4124, %v4800
    %v4865 = vadd.f32 %v4125, %v4801
    %v4866 = vadd.f32 %v4126, %v4802
    %v4867 = vadd.f32 %v4127, %v4803
    %v4868 = vadd.f32 %v4128, %v4804
    %v4869 = vadd.f32 %v4129, %v4805
    %v4870 = vadd.f32 %v4130, %v4806
    %v4871 = vadd.f32 %v4131, %v4807
    %v4872 = vadd.f32 %v4132, %v4808
    %v4873 = vadd.f32 %v4133, %v4809
    %v4874 = vadd.f32 %v4134, %v4810
    %v4875 = vadd.f32 %v4135, %v4811
    %v4876 = vadd.f32 %v4136, %v4812
    %v4877 = vadd.f32 %v4137, %v4813
    %v4878 = vadd.f32 %v4138, %v4814
    %v4879 = vadd.f32 %v4139, %v4815
    %v4880 = vadd.f32 %v4140, %v4816
    %v4881 = vadd.f32 %v4141, %v4817
    %v4882 = vadd.f32 %v4142, %v4818
    %v4883 = vadd.f32 %v4143, %v4819
    %v4884 = vadd.f32 %v4144, %v4820
    %v4885 = vadd.f32 %v4145, %v4821
    %v4886 = vadd.f32 %v4146, %v4822
    %v4887 = vadd.f32 %v4147, %v4823
    %v4888 = vadd.f32 %v4148, %v4824
    %v4889 = vadd.f32 %v4149, %v4825
    %v4890 = vadd.f32 %v4150, %v4826
    %v4891 = vadd.f32 %v4151, %v4827
    %v4892 = vadd.f32 %v4152, %v4828
    %v4893 = vadd.f32 %v4153, %v4829
    %v4894 = vadd.f32 %v4154, %v4830
    %v4895 = vadd.f32 %v4155, %v4831
    %v4896 = vadd.f32 %v4156, %v4832
    %v4897 = vadd.f32 %v4157, %v4833
    %v4898 = vadd.f32 %v4158, %v4834
    %v4899 = vadd.f32 %v4159, %v4835
    %v4900 = vadd.f32 %v4160, %v4836
    %v4901 = vadd.f32 %v4161, %v4837
    %v4902 = vadd.f32 %v4162, %v4838
    %v4903 = vadd.f32 %v4163, %v4839
    %v4904 = vadd.f32 %v4164, %v4840
    %v4905 = vadd.f32 %v4165, %v4841
    %v4906 = vadd.f32 %v4166, %v4842
    %v4907 = vadd.f32 %v4167, %v4843
    %v4908 = vadd.f32 %v4168, %v4844
    %v4909 = vadd.f32 %v4169, %v4845
    %v4910 = vadd.f32 %v4170, %v4846
    %v4911 = vadd.f32 %v4171, %v4847
    %v4912 = vadd.f32 %v4172, %v4848
    %v4913 = vadd.f32 %v4173, %v4849
    %v4914 = vadd.f32 %v4174, %v4850
    %v4915 = vadd.f32 %v4175, %v4851
    %v4916 = vadd.f32 %v4176, %v4852
    %v4917 = vadd.f32 %v4177, %v4853
    %v4918 = vadd.f32 %v4178, %v4854
    %v4919 = vadd.f32 %v4179, %v4855
    %v4920 = vadd.f32 %v4180, %v4856
    %v4921 = vadd.f32 %v4181, %v4857
    %v4922 = vadd.f32 %v4182, %v4858
    %v4923 = vlaneseq
    %v4924 = vand.u32 %v4923, 127
    %vm4925 = vcmp.lt.s32.totalorder %v4924, 16
    %v4926 = vsel %vm4925, %v4859, -inf
    %v4927 = vsel %vm4925, %v4860, -inf
    %v4928 = vsel %vm4925, %v4861, -inf
    %v4929 = vsel %vm4925, %v4862, -inf
    %v4930 = vsel %vm4925, %v4863, -inf
    %v4931 = vsel %vm4925, %v4864, -inf
    %v4932 = vsel %vm4925, %v4865, -inf
    %v4933 = vsel %vm4925, %v4866, -inf
    %v4934 = vsel %vm4925, %v4867, -inf
    %v4935 = vsel %vm4925, %v4868, -inf
    %v4936 = vsel %vm4925, %v4869, -inf
    %v4937 = vsel %vm4925, %v4870, -inf
    %v4938 = vsel %vm4925, %v4871, -inf
    %v4939 = vsel %vm4925, %v4872, -inf
    %v4940 = vsel %vm4925, %v4873, -inf
    %v4941 = vsel %vm4925, %v4874, -inf
    %v4942 = vsel %vm4925, %v4875, -inf
    %v4943 = vsel %vm4925, %v4876, -inf
    %v4944 = vsel %vm4925, %v4877, -inf
    %v4945 = vsel %vm4925, %v4878, -inf
    %v4946 = vsel %vm4925, %v4879, -inf
    %v4947 = vsel %vm4925, %v4880, -inf
    %v4948 = vsel %vm4925, %v4881, -inf
    %v4949 = vsel %vm4925, %v4882, -inf
    %v4950 = vsel %vm4925, %v4883, -inf
    %v4951 = vsel %vm4925, %v4884, -inf
    %v4952 = vsel %vm4925, %v4885, -inf
    %v4953 = vsel %vm4925, %v4886, -inf
    %v4954 = vsel %vm4925, %v4887, -inf
    %v4955 = vsel %vm4925, %v4888, -inf
    %v4956 = vsel %vm4925, %v4889, -inf
    %v4957 = vsel %vm4925, %v4890, -inf
    %v4958 = vsel %vm4925, %v4891, -inf
    %v4959 = vsel %vm4925, %v4892, -inf
    %v4960 = vsel %vm4925, %v4893, -inf
    %v4961 = vsel %vm4925, %v4894, -inf
    %v4962 = vsel %vm4925, %v4895, -inf
    %v4963 = vsel %vm4925, %v4896, -inf
    %v4964 = vsel %vm4925, %v4897, -inf
    %v4965 = vsel %vm4925, %v4898, -inf
    %v4966 = vsel %vm4925, %v4899, -inf
    %v4967 = vsel %vm4925, %v4900, -inf
    %v4968 = vsel %vm4925, %v4901, -inf
    %v4969 = vsel %vm4925, %v4902, -inf
    %v4970 = vsel %vm4925, %v4903, -inf
    %v4971 = vsel %vm4925, %v4904, -inf
    %v4972 = vsel %vm4925, %v4905, -inf
    %v4973 = vsel %vm4925, %v4906, -inf
    %v4974 = vsel %vm4925, %v4907, -inf
    %v4975 = vsel %vm4925, %v4908, -inf
    %v4976 = vsel %vm4925, %v4909, -inf
    %v4977 = vsel %vm4925, %v4910, -inf
    %v4978 = vsel %vm4925, %v4911, -inf
    %v4979 = vsel %vm4925, %v4912, -inf
    %v4980 = vsel %vm4925, %v4913, -inf
    %v4981 = vsel %vm4925, %v4914, -inf
    %v4982 = vsel %vm4925, %v4915, -inf
    %v4983 = vsel %vm4925, %v4916, -inf
    %v4984 = vsel %vm4925, %v4917, -inf
    %v4985 = vsel %vm4925, %v4918, -inf
    %v4986 = vsel %vm4925, %v4919, -inf
    %v4987 = vsel %vm4925, %v4920, -inf
    %v4988 = vsel %vm4925, %v4921, -inf
    %v4989 = vsel %vm4925, %v4922, -inf
    %4990 = vmax.xlane.f32.xlu0 %v4926
    %v4991 = vpop.xlane.xlu0 %4990
    %4992 = vmax.xlane.f32.xlu0 %v4927
    %v4993 = vpop.xlane.xlu0 %4992
    %4994 = vmax.xlane.f32.xlu0 %v4928
    %v4995 = vpop.xlane.xlu0 %4994
    %4996 = vmax.xlane.f32.xlu0 %v4929
    %v4997 = vpop.xlane.xlu0 %4996
    %4998 = vmax.xlane.f32.xlu0 %v4930
    %v4999 = vpop.xlane.xlu0 %4998
    %5000 = vmax.xlane.f32.xlu0 %v4931
    %v5001 = vpop.xlane.xlu0 %5000
    %5002 = vmax.xlane.f32.xlu0 %v4932
    %v5003 = vpop.xlane.xlu0 %5002
    %5004 = vmax.xlane.f32.xlu0 %v4933
    %v5005 = vpop.xlane.xlu0 %5004
    %5006 = vmax.xlane.f32.xlu0 %v4934
    %v5007 = vpop.xlane.xlu0 %5006
    %5008 = vmax.xlane.f32.xlu0 %v4935
    %v5009 = vpop.xlane.xlu0 %5008
    %5010 = vmax.xlane.f32.xlu0 %v4936
    %v5011 = vpop.xlane.xlu0 %5010
    %5012 = vmax.xlane.f32.xlu0 %v4937
    %v5013 = vpop.xlane.xlu0 %5012
    %5014 = vmax.xlane.f32.xlu0 %v4938
    %v5015 = vpop.xlane.xlu0 %5014
    %5016 = vmax.xlane.f32.xlu0 %v4939
    %v5017 = vpop.xlane.xlu0 %5016
    %5018 = vmax.xlane.f32.xlu0 %v4940
    %v5019 = vpop.xlane.xlu0 %5018
    %5020 = vmax.xlane.f32.xlu0 %v4941
    %v5021 = vpop.xlane.xlu0 %5020
    %5022 = vmax.xlane.f32.xlu0 %v4942
    %v5023 = vpop.xlane.xlu0 %5022
    %5024 = vmax.xlane.f32.xlu0 %v4943
    %v5025 = vpop.xlane.xlu0 %5024
    %5026 = vmax.xlane.f32.xlu0 %v4944
    %v5027 = vpop.xlane.xlu0 %5026
    %5028 = vmax.xlane.f32.xlu0 %v4945
    %v5029 = vpop.xlane.xlu0 %5028
    %5030 = vmax.xlane.f32.xlu0 %v4946
    %v5031 = vpop.xlane.xlu0 %5030
    %5032 = vmax.xlane.f32.xlu0 %v4947
    %v5033 = vpop.xlane.xlu0 %5032
    %5034 = vmax.xlane.f32.xlu0 %v4948
    %v5035 = vpop.xlane.xlu0 %5034
    %5036 = vmax.xlane.f32.xlu0 %v4949
    %v5037 = vpop.xlane.xlu0 %5036
    %5038 = vmax.xlane.f32.xlu0 %v4950
    %v5039 = vpop.xlane.xlu0 %5038
    %5040 = vmax.xlane.f32.xlu0 %v4951
    %v5041 = vpop.xlane.xlu0 %5040
    %5042 = vmax.xlane.f32.xlu0 %v4952
    %v5043 = vpop.xlane.xlu0 %5042
    %5044 = vmax.xlane.f32.xlu0 %v4953
    %v5045 = vpop.xlane.xlu0 %5044
    %5046 = vmax.xlane.f32.xlu0 %v4954
    %v5047 = vpop.xlane.xlu0 %5046
    %5048 = vmax.xlane.f32.xlu0 %v4955
    %v5049 = vpop.xlane.xlu0 %5048
    %5050 = vmax.xlane.f32.xlu0 %v4956
    %v5051 = vpop.xlane.xlu0 %5050
    %5052 = vmax.xlane.f32.xlu0 %v4957
    %v5053 = vpop.xlane.xlu0 %5052
    %5054 = vmax.xlane.f32.xlu0 %v4958
    %v5055 = vpop.xlane.xlu0 %5054
    %5056 = vmax.xlane.f32.xlu0 %v4959
    %v5057 = vpop.xlane.xlu0 %5056
    %5058 = vmax.xlane.f32.xlu0 %v4960
    %v5059 = vpop.xlane.xlu0 %5058
    %5060 = vmax.xlane.f32.xlu0 %v4961
    %v5061 = vpop.xlane.xlu0 %5060
    %5062 = vmax.xlane.f32.xlu0 %v4962
    %v5063 = vpop.xlane.xlu0 %5062
    %5064 = vmax.xlane.f32.xlu0 %v4963
    %v5065 = vpop.xlane.xlu0 %5064
    %5066 = vmax.xlane.f32.xlu0 %v4964
    %v5067 = vpop.xlane.xlu0 %5066
    %5068 = vmax.xlane.f32.xlu0 %v4965
    %v5069 = vpop.xlane.xlu0 %5068
    %5070 = vmax.xlane.f32.xlu0 %v4966
    %v5071 = vpop.xlane.xlu0 %5070
    %5072 = vmax.xlane.f32.xlu0 %v4967
    %v5073 = vpop.xlane.xlu0 %5072
    %5074 = vmax.xlane.f32.xlu0 %v4968
    %v5075 = vpop.xlane.xlu0 %5074
    %5076 = vmax.xlane.f32.xlu0 %v4969
    %v5077 = vpop.xlane.xlu0 %5076
    %5078 = vmax.xlane.f32.xlu0 %v4970
    %v5079 = vpop.xlane.xlu0 %5078
    %5080 = vmax.xlane.f32.xlu0 %v4971
    %v5081 = vpop.xlane.xlu0 %5080
    %5082 = vmax.xlane.f32.xlu0 %v4972
    %v5083 = vpop.xlane.xlu0 %5082
    %5084 = vmax.xlane.f32.xlu0 %v4973
    %v5085 = vpop.xlane.xlu0 %5084
    %5086 = vmax.xlane.f32.xlu0 %v4974
    %v5087 = vpop.xlane.xlu0 %5086
    %5088 = vmax.xlane.f32.xlu0 %v4975
    %v5089 = vpop.xlane.xlu0 %5088
    %5090 = vmax.xlane.f32.xlu0 %v4976
    %v5091 = vpop.xlane.xlu0 %5090
    %5092 = vmax.xlane.f32.xlu0 %v4977
    %v5093 = vpop.xlane.xlu0 %5092
    %5094 = vmax.xlane.f32.xlu0 %v4978
    %v5095 = vpop.xlane.xlu0 %5094
    %5096 = vmax.xlane.f32.xlu0 %v4979
    %v5097 = vpop.xlane.xlu0 %5096
    %5098 = vmax.xlane.f32.xlu0 %v4980
    %v5099 = vpop.xlane.xlu0 %5098
    %5100 = vmax.xlane.f32.xlu0 %v4981
    %v5101 = vpop.xlane.xlu0 %5100
    %5102 = vmax.xlane.f32.xlu0 %v4982
    %v5103 = vpop.xlane.xlu0 %5102
    %5104 = vmax.xlane.f32.xlu0 %v4983
    %v5105 = vpop.xlane.xlu0 %5104
    %5106 = vmax.xlane.f32.xlu0 %v4984
    %v5107 = vpop.xlane.xlu0 %5106
    %5108 = vmax.xlane.f32.xlu0 %v4985
    %v5109 = vpop.xlane.xlu0 %5108
    %5110 = vmax.xlane.f32.xlu0 %v4986
    %v5111 = vpop.xlane.xlu0 %5110
    %5112 = vmax.xlane.f32.xlu0 %v4987
    %v5113 = vpop.xlane.xlu0 %5112
    %5114 = vmax.xlane.f32.xlu0 %v4988
    %v5115 = vpop.xlane.xlu0 %5114
    %5116 = vmax.xlane.f32.xlu0 %v4989
    %v5117 = vpop.xlane.xlu0 %5116
    %v5118 = vsub.f32 %v4859, %v4991
    %v5119 = vsub.f32 %v4860, %v4993
    %v5120 = vsub.f32 %v4861, %v4995
    %v5121 = vsub.f32 %v4862, %v4997
    %v5122 = vsub.f32 %v4863, %v4999
    %v5123 = vsub.f32 %v4864, %v5001
    %v5124 = vsub.f32 %v4865, %v5003
    %v5125 = vsub.f32 %v4866, %v5005
    %v5126 = vsub.f32 %v4867, %v5007
    %v5127 = vsub.f32 %v4868, %v5009
    %v5128 = vsub.f32 %v4869, %v5011
    %v5129 = vsub.f32 %v4870, %v5013
    %v5130 = vsub.f32 %v4871, %v5015
    %v5131 = vsub.f32 %v4872, %v5017
    %v5132 = vsub.f32 %v4873, %v5019
    %v5133 = vsub.f32 %v4874, %v5021
    %v5134 = vsub.f32 %v4875, %v5023
    %v5135 = vsub.f32 %v4876, %v5025
    %v5136 = vsub.f32 %v4877, %v5027
    %v5137 = vsub.f32 %v4878, %v5029
    %v5138 = vsub.f32 %v4879, %v5031
    %v5139 = vsub.f32 %v4880, %v5033
    %v5140 = vsub.f32 %v4881, %v5035
    %v5141 = vsub.f32 %v4882, %v5037
    %v5142 = vsub.f32 %v4883, %v5039
    %v5143 = vsub.f32 %v4884, %v5041
    %v5144 = vsub.f32 %v4885, %v5043
    %v5145 = vsub.f32 %v4886, %v5045
    %v5146 = vsub.f32 %v4887, %v5047
    %v5147 = vsub.f32 %v4888, %v5049
    %v5148 = vsub.f32 %v4889, %v5051
    %v5149 = vsub.f32 %v4890, %v5053
    %v5150 = vsub.f32 %v4891, %v5055
    %v5151 = vsub.f32 %v4892, %v5057
    %v5152 = vsub.f32 %v4893, %v5059
    %v5153 = vsub.f32 %v4894, %v5061
    %v5154 = vsub.f32 %v4895, %v5063
    %v5155 = vsub.f32 %v4896, %v5065
    %v5156 = vsub.f32 %v4897, %v5067
    %v5157 = vsub.f32 %v4898, %v5069
    %v5158 = vsub.f32 %v4899, %v5071
    %v5159 = vsub.f32 %v4900, %v5073
    %v5160 = vsub.f32 %v4901, %v5075
    %v5161 = vsub.f32 %v4902, %v5077
    %v5162 = vsub.f32 %v4903, %v5079
    %v5163 = vsub.f32 %v4904, %v5081
    %v5164 = vsub.f32 %v4905, %v5083
    %v5165 = vsub.f32 %v4906, %v5085
    %v5166 = vsub.f32 %v4907, %v5087
    %v5167 = vsub.f32 %v4908, %v5089
    %v5168 = vsub.f32 %v4909, %v5091
    %v5169 = vsub.f32 %v4910, %v5093
    %v5170 = vsub.f32 %v4911, %v5095
    %v5171 = vsub.f32 %v4912, %v5097
    %v5172 = vsub.f32 %v4913, %v5099
    %v5173 = vsub.f32 %v4914, %v5101
    %v5174 = vsub.f32 %v4915, %v5103
    %v5175 = vsub.f32 %v4916, %v5105
    %v5176 = vsub.f32 %v4917, %v5107
    %v5177 = vsub.f32 %v4918, %v5109
    %v5178 = vsub.f32 %v4919, %v5111
    %v5179 = vsub.f32 %v4920, %v5113
    %v5180 = vsub.f32 %v4921, %v5115
    %v5181 = vsub.f32 %v4922, %v5117
    %v5182 = vmul.f32 %v5118, 1.442695
    %v5183 = vpow.pop %v5182
    %v5184 = vmul.f32 %v5119, 1.442695
    %v5185 = vpow.pop %v5184
    %v5186 = vmul.f32 %v5120, 1.442695
    %v5187 = vpow.pop %v5186
    %v5188 = vmul.f32 %v5121, 1.442695
    %v5189 = vpow.pop %v5188
    %v5190 = vmul.f32 %v5122, 1.442695
    %v5191 = vpow.pop %v5190
    %v5192 = vmul.f32 %v5123, 1.442695
    %v5193 = vpow.pop %v5192
    %v5194 = vmul.f32 %v5124, 1.442695
    %v5195 = vpow.pop %v5194
    %v5196 = vmul.f32 %v5125, 1.442695
    %v5197 = vpow.pop %v5196
    %v5198 = vmul.f32 %v5126, 1.442695
    %v5199 = vpow.pop %v5198
    %v5200 = vmul.f32 %v5127, 1.442695
    %v5201 = vpow.pop %v5200
    %v5202 = vmul.f32 %v5128, 1.442695
    %v5203 = vpow.pop %v5202
    %v5204 = vmul.f32 %v5129, 1.442695
    %v5205 = vpow.pop %v5204
    %v5206 = vmul.f32 %v5130, 1.442695
    %v5207 = vpow.pop %v5206
    %v5208 = vmul.f32 %v5131, 1.442695
    %v5209 = vpow.pop %v5208
    %v5210 = vmul.f32 %v5132, 1.442695
    %v5211 = vpow.pop %v5210
    %v5212 = vmul.f32 %v5133, 1.442695
    %v5213 = vpow.pop %v5212
    %v5214 = vmul.f32 %v5134, 1.442695
    %v5215 = vpow.pop %v5214
    %v5216 = vmul.f32 %v5135, 1.442695
    %v5217 = vpow.pop %v5216
    %v5218 = vmul.f32 %v5136, 1.442695
    %v5219 = vpow.pop %v5218
    %v5220 = vmul.f32 %v5137, 1.442695
    %v5221 = vpow.pop %v5220
    %v5222 = vmul.f32 %v5138, 1.442695
    %v5223 = vpow.pop %v5222
    %v5224 = vmul.f32 %v5139, 1.442695
    %v5225 = vpow.pop %v5224
    %v5226 = vmul.f32 %v5140, 1.442695
    %v5227 = vpow.pop %v5226
    %v5228 = vmul.f32 %v5141, 1.442695
    %v5229 = vpow.pop %v5228
    %v5230 = vmul.f32 %v5142, 1.442695
    %v5231 = vpow.pop %v5230
    %v5232 = vmul.f32 %v5143, 1.442695
    %v5233 = vpow.pop %v5232
    %v5234 = vmul.f32 %v5144, 1.442695
    %v5235 = vpow.pop %v5234
    %v5236 = vmul.f32 %v5145, 1.442695
    %v5237 = vpow.pop %v5236
    %v5238 = vmul.f32 %v5146, 1.442695
    %v5239 = vpow.pop %v5238
    %v5240 = vmul.f32 %v5147, 1.442695
    %v5241 = vpow.pop %v5240
    %v5242 = vmul.f32 %v5148, 1.442695
    %v5243 = vpow.pop %v5242
    %v5244 = vmul.f32 %v5149, 1.442695
    %v5245 = vpow.pop %v5244
    %v5246 = vmul.f32 %v5150, 1.442695
    %v5247 = vpow.pop %v5246
    %v5248 = vmul.f32 %v5151, 1.442695
    %v5249 = vpow.pop %v5248
    %v5250 = vmul.f32 %v5152, 1.442695
    %v5251 = vpow.pop %v5250
    %v5252 = vmul.f32 %v5153, 1.442695
    %v5253 = vpow.pop %v5252
    %v5254 = vmul.f32 %v5154, 1.442695
    %v5255 = vpow.pop %v5254
    %v5256 = vmul.f32 %v5155, 1.442695
    %v5257 = vpow.pop %v5256
    %v5258 = vmul.f32 %v5156, 1.442695
    %v5259 = vpow.pop %v5258
    %v5260 = vmul.f32 %v5157, 1.442695
    %v5261 = vpow.pop %v5260
    %v5262 = vmul.f32 %v5158, 1.442695
    %v5263 = vpow.pop %v5262
    %v5264 = vmul.f32 %v5159, 1.442695
    %v5265 = vpow.pop %v5264
    %v5266 = vmul.f32 %v5160, 1.442695
    %v5267 = vpow.pop %v5266
    %v5268 = vmul.f32 %v5161, 1.442695
    %v5269 = vpow.pop %v5268
    %v5270 = vmul.f32 %v5162, 1.442695
    %v5271 = vpow.pop %v5270
    %v5272 = vmul.f32 %v5163, 1.442695
    %v5273 = vpow.pop %v5272
    %v5274 = vmul.f32 %v5164, 1.442695
    %v5275 = vpow.pop %v5274
    %v5276 = vmul.f32 %v5165, 1.442695
    %v5277 = vpow.pop %v5276
    %v5278 = vmul.f32 %v5166, 1.442695
    %v5279 = vpow.pop %v5278
    %v5280 = vmul.f32 %v5167, 1.442695
    %v5281 = vpow.pop %v5280
    %v5282 = vmul.f32 %v5168, 1.442695
    %v5283 = vpow.pop %v5282
    %v5284 = vmul.f32 %v5169, 1.442695
    %v5285 = vpow.pop %v5284
    %v5286 = vmul.f32 %v5170, 1.442695
    %v5287 = vpow.pop %v5286
    %v5288 = vmul.f32 %v5171, 1.442695
    %v5289 = vpow.pop %v5288
    %v5290 = vmul.f32 %v5172, 1.442695
    %v5291 = vpow.pop %v5290
    %v5292 = vmul.f32 %v5173, 1.442695
    %v5293 = vpow.pop %v5292
    %v5294 = vmul.f32 %v5174, 1.442695
    %v5295 = vpow.pop %v5294
    %v5296 = vmul.f32 %v5175, 1.442695
    %v5297 = vpow.pop %v5296
    %v5298 = vmul.f32 %v5176, 1.442695
    %v5299 = vpow.pop %v5298
    %v5300 = vmul.f32 %v5177, 1.442695
    %v5301 = vpow.pop %v5300
    %v5302 = vmul.f32 %v5178, 1.442695
    %v5303 = vpow.pop %v5302
    %v5304 = vmul.f32 %v5179, 1.442695
    %v5305 = vpow.pop %v5304
    %v5306 = vmul.f32 %v5180, 1.442695
    %v5307 = vpow.pop %v5306
    %v5308 = vmul.f32 %v5181, 1.442695
    %v5309 = vpow.pop %v5308
    %v5310 = vsel %vm4925, %v5183, 0.0
    %v5311 = vsel %vm4925, %v5185, 0.0
    %v5312 = vsel %vm4925, %v5187, 0.0
    %v5313 = vsel %vm4925, %v5189, 0.0
    %v5314 = vsel %vm4925, %v5191, 0.0
    %v5315 = vsel %vm4925, %v5193, 0.0
    %v5316 = vsel %vm4925, %v5195, 0.0
    %v5317 = vsel %vm4925, %v5197, 0.0
    %v5318 = vsel %vm4925, %v5199, 0.0
    %v5319 = vsel %vm4925, %v5201, 0.0
    %v5320 = vsel %vm4925, %v5203, 0.0
    %v5321 = vsel %vm4925, %v5205, 0.0
    %v5322 = vsel %vm4925, %v5207, 0.0
    %v5323 = vsel %vm4925, %v5209, 0.0
    %v5324 = vsel %vm4925, %v5211, 0.0
    %v5325 = vsel %vm4925, %v5213, 0.0
    %v5326 = vsel %vm4925, %v5215, 0.0
    %v5327 = vsel %vm4925, %v5217, 0.0
    %v5328 = vsel %vm4925, %v5219, 0.0
    %v5329 = vsel %vm4925, %v5221, 0.0
    %v5330 = vsel %vm4925, %v5223, 0.0
    %v5331 = vsel %vm4925, %v5225, 0.0
    %v5332 = vsel %vm4925, %v5227, 0.0
    %v5333 = vsel %vm4925, %v5229, 0.0
    %v5334 = vsel %vm4925, %v5231, 0.0
    %v5335 = vsel %vm4925, %v5233, 0.0
    %v5336 = vsel %vm4925, %v5235, 0.0
    %v5337 = vsel %vm4925, %v5237, 0.0
    %v5338 = vsel %vm4925, %v5239, 0.0
    %v5339 = vsel %vm4925, %v5241, 0.0
    %v5340 = vsel %vm4925, %v5243, 0.0
    %v5341 = vsel %vm4925, %v5245, 0.0
    %v5342 = vsel %vm4925, %v5247, 0.0
    %v5343 = vsel %vm4925, %v5249, 0.0
    %v5344 = vsel %vm4925, %v5251, 0.0
    %v5345 = vsel %vm4925, %v5253, 0.0
    %v5346 = vsel %vm4925, %v5255, 0.0
    %v5347 = vsel %vm4925, %v5257, 0.0
    %v5348 = vsel %vm4925, %v5259, 0.0
    %v5349 = vsel %vm4925, %v5261, 0.0
    %v5350 = vsel %vm4925, %v5263, 0.0
    %v5351 = vsel %vm4925, %v5265, 0.0
    %v5352 = vsel %vm4925, %v5267, 0.0
    %v5353 = vsel %vm4925, %v5269, 0.0
    %v5354 = vsel %vm4925, %v5271, 0.0
    %v5355 = vsel %vm4925, %v5273, 0.0
    %v5356 = vsel %vm4925, %v5275, 0.0
    %v5357 = vsel %vm4925, %v5277, 0.0
    %v5358 = vsel %vm4925, %v5279, 0.0
    %v5359 = vsel %vm4925, %v5281, 0.0
    %v5360 = vsel %vm4925, %v5283, 0.0
    %v5361 = vsel %vm4925, %v5285, 0.0
    %v5362 = vsel %vm4925, %v5287, 0.0
    %v5363 = vsel %vm4925, %v5289, 0.0
    %v5364 = vsel %vm4925, %v5291, 0.0
    %v5365 = vsel %vm4925, %v5293, 0.0
    %v5366 = vsel %vm4925, %v5295, 0.0
    %v5367 = vsel %vm4925, %v5297, 0.0
    %v5368 = vsel %vm4925, %v5299, 0.0
    %v5369 = vsel %vm4925, %v5301, 0.0
    %v5370 = vsel %vm4925, %v5303, 0.0
    %v5371 = vsel %vm4925, %v5305, 0.0
    %v5372 = vsel %vm4925, %v5307, 0.0
    %v5373 = vsel %vm4925, %v5309, 0.0
    %5374 = vadd.xlane.f32.xlu0 %v5310
    %v5375 = vpop.xlane.xlu0 %5374
    %5376 = vadd.xlane.f32.xlu0 %v5311
    %v5377 = vpop.xlane.xlu0 %5376
    %5378 = vadd.xlane.f32.xlu0 %v5312
    %v5379 = vpop.xlane.xlu0 %5378
    %5380 = vadd.xlane.f32.xlu0 %v5313
    %v5381 = vpop.xlane.xlu0 %5380
    %5382 = vadd.xlane.f32.xlu0 %v5314
    %v5383 = vpop.xlane.xlu0 %5382
    %5384 = vadd.xlane.f32.xlu0 %v5315
    %v5385 = vpop.xlane.xlu0 %5384
    %5386 = vadd.xlane.f32.xlu0 %v5316
    %v5387 = vpop.xlane.xlu0 %5386
    %5388 = vadd.xlane.f32.xlu0 %v5317
    %v5389 = vpop.xlane.xlu0 %5388
    %5390 = vadd.xlane.f32.xlu0 %v5318
    %v5391 = vpop.xlane.xlu0 %5390
    %5392 = vadd.xlane.f32.xlu0 %v5319
    %v5393 = vpop.xlane.xlu0 %5392
    %5394 = vadd.xlane.f32.xlu0 %v5320
    %v5395 = vpop.xlane.xlu0 %5394
    %5396 = vadd.xlane.f32.xlu0 %v5321
    %v5397 = vpop.xlane.xlu0 %5396
    %5398 = vadd.xlane.f32.xlu0 %v5322
    %v5399 = vpop.xlane.xlu0 %5398
    %5400 = vadd.xlane.f32.xlu0 %v5323
    %v5401 = vpop.xlane.xlu0 %5400
    %5402 = vadd.xlane.f32.xlu0 %v5324
    %v5403 = vpop.xlane.xlu0 %5402
    %5404 = vadd.xlane.f32.xlu0 %v5325
    %v5405 = vpop.xlane.xlu0 %5404
    %5406 = vadd.xlane.f32.xlu0 %v5326
    %v5407 = vpop.xlane.xlu0 %5406
    %5408 = vadd.xlane.f32.xlu0 %v5327
    %v5409 = vpop.xlane.xlu0 %5408
    %5410 = vadd.xlane.f32.xlu0 %v5328
    %v5411 = vpop.xlane.xlu0 %5410
    %5412 = vadd.xlane.f32.xlu0 %v5329
    %v5413 = vpop.xlane.xlu0 %5412
    %5414 = vadd.xlane.f32.xlu0 %v5330
    %v5415 = vpop.xlane.xlu0 %5414
    %5416 = vadd.xlane.f32.xlu0 %v5331
    %v5417 = vpop.xlane.xlu0 %5416
    %5418 = vadd.xlane.f32.xlu0 %v5332
    %v5419 = vpop.xlane.xlu0 %5418
    %5420 = vadd.xlane.f32.xlu0 %v5333
    %v5421 = vpop.xlane.xlu0 %5420
    %5422 = vadd.xlane.f32.xlu0 %v5334
    %v5423 = vpop.xlane.xlu0 %5422
    %5424 = vadd.xlane.f32.xlu0 %v5335
    %v5425 = vpop.xlane.xlu0 %5424
    %5426 = vadd.xlane.f32.xlu0 %v5336
    %v5427 = vpop.xlane.xlu0 %5426
    %5428 = vadd.xlane.f32.xlu0 %v5337
    %v5429 = vpop.xlane.xlu0 %5428
    %5430 = vadd.xlane.f32.xlu0 %v5338
    %v5431 = vpop.xlane.xlu0 %5430
    %5432 = vadd.xlane.f32.xlu0 %v5339
    %v5433 = vpop.xlane.xlu0 %5432
    %5434 = vadd.xlane.f32.xlu0 %v5340
    %v5435 = vpop.xlane.xlu0 %5434
    %5436 = vadd.xlane.f32.xlu0 %v5341
    %v5437 = vpop.xlane.xlu0 %5436
    %5438 = vadd.xlane.f32.xlu0 %v5342
    %v5439 = vpop.xlane.xlu0 %5438
    %5440 = vadd.xlane.f32.xlu0 %v5343
    %v5441 = vpop.xlane.xlu0 %5440
    %5442 = vadd.xlane.f32.xlu0 %v5344
    %v5443 = vpop.xlane.xlu0 %5442
    %5444 = vadd.xlane.f32.xlu0 %v5345
    %v5445 = vpop.xlane.xlu0 %5444
    %5446 = vadd.xlane.f32.xlu0 %v5346
    %v5447 = vpop.xlane.xlu0 %5446
    %5448 = vadd.xlane.f32.xlu0 %v5347
    %v5449 = vpop.xlane.xlu0 %5448
    %5450 = vadd.xlane.f32.xlu0 %v5348
    %v5451 = vpop.xlane.xlu0 %5450
    %5452 = vadd.xlane.f32.xlu0 %v5349
    %v5453 = vpop.xlane.xlu0 %5452
    %5454 = vadd.xlane.f32.xlu0 %v5350
    %v5455 = vpop.xlane.xlu0 %5454
    %5456 = vadd.xlane.f32.xlu0 %v5351
    %v5457 = vpop.xlane.xlu0 %5456
    %5458 = vadd.xlane.f32.xlu0 %v5352
    %v5459 = vpop.xlane.xlu0 %5458
    %5460 = vadd.xlane.f32.xlu0 %v5353
    %v5461 = vpop.xlane.xlu0 %5460
    %5462 = vadd.xlane.f32.xlu0 %v5354
    %v5463 = vpop.xlane.xlu0 %5462
    %5464 = vadd.xlane.f32.xlu0 %v5355
    %v5465 = vpop.xlane.xlu0 %5464
    %5466 = vadd.xlane.f32.xlu0 %v5356
    %v5467 = vpop.xlane.xlu0 %5466
    %5468 = vadd.xlane.f32.xlu0 %v5357
    %v5469 = vpop.xlane.xlu0 %5468
    %5470 = vadd.xlane.f32.xlu0 %v5358
    %v5471 = vpop.xlane.xlu0 %5470
    %5472 = vadd.xlane.f32.xlu0 %v5359
    %v5473 = vpop.xlane.xlu0 %5472
    %5474 = vadd.xlane.f32.xlu0 %v5360
    %v5475 = vpop.xlane.xlu0 %5474
    %5476 = vadd.xlane.f32.xlu0 %v5361
    %v5477 = vpop.xlane.xlu0 %5476
    %5478 = vadd.xlane.f32.xlu0 %v5362
    %v5479 = vpop.xlane.xlu0 %5478
    %5480 = vadd.xlane.f32.xlu0 %v5363
    %v5481 = vpop.xlane.xlu0 %5480
    %5482 = vadd.xlane.f32.xlu0 %v5364
    %v5483 = vpop.xlane.xlu0 %5482
    %5484 = vadd.xlane.f32.xlu0 %v5365
    %v5485 = vpop.xlane.xlu0 %5484
    %5486 = vadd.xlane.f32.xlu0 %v5366
    %v5487 = vpop.xlane.xlu0 %5486
    %5488 = vadd.xlane.f32.xlu0 %v5367
    %v5489 = vpop.xlane.xlu0 %5488
    %5490 = vadd.xlane.f32.xlu0 %v5368
    %v5491 = vpop.xlane.xlu0 %5490
    %5492 = vadd.xlane.f32.xlu0 %v5369
    %v5493 = vpop.xlane.xlu0 %5492
    %5494 = vadd.xlane.f32.xlu0 %v5370
    %v5495 = vpop.xlane.xlu0 %5494
    %5496 = vadd.xlane.f32.xlu0 %v5371
    %v5497 = vpop.xlane.xlu0 %5496
    %5498 = vadd.xlane.f32.xlu0 %v5372
    %v5499 = vpop.xlane.xlu0 %5498
    %5500 = vadd.xlane.f32.xlu0 %v5373
    %v5501 = vpop.xlane.xlu0 %5500
    %v5502 = vlog2.pop %v5375
    %v5503 = vmul.f32 %v5502, 0.6931472
    %v5504 = vlog2.pop %v5377
    %v5505 = vmul.f32 %v5504, 0.6931472
    %v5506 = vlog2.pop %v5379
    %v5507 = vmul.f32 %v5506, 0.6931472
    %v5508 = vlog2.pop %v5381
    %v5509 = vmul.f32 %v5508, 0.6931472
    %v5510 = vlog2.pop %v5383
    %v5511 = vmul.f32 %v5510, 0.6931472
    %v5512 = vlog2.pop %v5385
    %v5513 = vmul.f32 %v5512, 0.6931472
    %v5514 = vlog2.pop %v5387
    %v5515 = vmul.f32 %v5514, 0.6931472
    %v5516 = vlog2.pop %v5389
    %v5517 = vmul.f32 %v5516, 0.6931472
    %v5518 = vlog2.pop %v5391
    %v5519 = vmul.f32 %v5518, 0.6931472
    %v5520 = vlog2.pop %v5393
    %v5521 = vmul.f32 %v5520, 0.6931472
    %v5522 = vlog2.pop %v5395
    %v5523 = vmul.f32 %v5522, 0.6931472
    %v5524 = vlog2.pop %v5397
    %v5525 = vmul.f32 %v5524, 0.6931472
    %v5526 = vlog2.pop %v5399
    %v5527 = vmul.f32 %v5526, 0.6931472
    %v5528 = vlog2.pop %v5401
    %v5529 = vmul.f32 %v5528, 0.6931472
    %v5530 = vlog2.pop %v5403
    %v5531 = vmul.f32 %v5530, 0.6931472
    %v5532 = vlog2.pop %v5405
    %v5533 = vmul.f32 %v5532, 0.6931472
    %v5534 = vlog2.pop %v5407
    %v5535 = vmul.f32 %v5534, 0.6931472
    %v5536 = vlog2.pop %v5409
    %v5537 = vmul.f32 %v5536, 0.6931472
    %v5538 = vlog2.pop %v5411
    %v5539 = vmul.f32 %v5538, 0.6931472
    %v5540 = vlog2.pop %v5413
    %v5541 = vmul.f32 %v5540, 0.6931472
    %v5542 = vlog2.pop %v5415
    %v5543 = vmul.f32 %v5542, 0.6931472
    %v5544 = vlog2.pop %v5417
    %v5545 = vmul.f32 %v5544, 0.6931472
    %v5546 = vlog2.pop %v5419
    %v5547 = vmul.f32 %v5546, 0.6931472
    %v5548 = vlog2.pop %v5421
    %v5549 = vmul.f32 %v5548, 0.6931472
    %v5550 = vlog2.pop %v5423
    %v5551 = vmul.f32 %v5550, 0.6931472
    %v5552 = vlog2.pop %v5425
    %v5553 = vmul.f32 %v5552, 0.6931472
    %v5554 = vlog2.pop %v5427
    %v5555 = vmul.f32 %v5554, 0.6931472
    %v5556 = vlog2.pop %v5429
    %v5557 = vmul.f32 %v5556, 0.6931472
    %v5558 = vlog2.pop %v5431
    %v5559 = vmul.f32 %v5558, 0.6931472
    %v5560 = vlog2.pop %v5433
    %v5561 = vmul.f32 %v5560, 0.6931472
    %v5562 = vlog2.pop %v5435
    %v5563 = vmul.f32 %v5562, 0.6931472
    %v5564 = vlog2.pop %v5437
    %v5565 = vmul.f32 %v5564, 0.6931472
    %v5566 = vlog2.pop %v5439
    %v5567 = vmul.f32 %v5566, 0.6931472
    %v5568 = vlog2.pop %v5441
    %v5569 = vmul.f32 %v5568, 0.6931472
    %v5570 = vlog2.pop %v5443
    %v5571 = vmul.f32 %v5570, 0.6931472
    %v5572 = vlog2.pop %v5445
    %v5573 = vmul.f32 %v5572, 0.6931472
    %v5574 = vlog2.pop %v5447
    %v5575 = vmul.f32 %v5574, 0.6931472
    %v5576 = vlog2.pop %v5449
    %v5577 = vmul.f32 %v5576, 0.6931472
    %v5578 = vlog2.pop %v5451
    %v5579 = vmul.f32 %v5578, 0.6931472
    %v5580 = vlog2.pop %v5453
    %v5581 = vmul.f32 %v5580, 0.6931472
    %v5582 = vlog2.pop %v5455
    %v5583 = vmul.f32 %v5582, 0.6931472
    %v5584 = vlog2.pop %v5457
    %v5585 = vmul.f32 %v5584, 0.6931472
    %v5586 = vlog2.pop %v5459
    %v5587 = vmul.f32 %v5586, 0.6931472
    %v5588 = vlog2.pop %v5461
    %v5589 = vmul.f32 %v5588, 0.6931472
    %v5590 = vlog2.pop %v5463
    %v5591 = vmul.f32 %v5590, 0.6931472
    %v5592 = vlog2.pop %v5465
    %v5593 = vmul.f32 %v5592, 0.6931472
    %v5594 = vlog2.pop %v5467
    %v5595 = vmul.f32 %v5594, 0.6931472
    %v5596 = vlog2.pop %v5469
    %v5597 = vmul.f32 %v5596, 0.6931472
    %v5598 = vlog2.pop %v5471
    %v5599 = vmul.f32 %v5598, 0.6931472
    %v5600 = vlog2.pop %v5473
    %v5601 = vmul.f32 %v5600, 0.6931472
    %v5602 = vlog2.pop %v5475
    %v5603 = vmul.f32 %v5602, 0.6931472
    %v5604 = vlog2.pop %v5477
    %v5605 = vmul.f32 %v5604, 0.6931472
    %v5606 = vlog2.pop %v5479
    %v5607 = vmul.f32 %v5606, 0.6931472
    %v5608 = vlog2.pop %v5481
    %v5609 = vmul.f32 %v5608, 0.6931472
    %v5610 = vlog2.pop %v5483
    %v5611 = vmul.f32 %v5610, 0.6931472
    %v5612 = vlog2.pop %v5485
    %v5613 = vmul.f32 %v5612, 0.6931472
    %v5614 = vlog2.pop %v5487
    %v5615 = vmul.f32 %v5614, 0.6931472
    %v5616 = vlog2.pop %v5489
    %v5617 = vmul.f32 %v5616, 0.6931472
    %v5618 = vlog2.pop %v5491
    %v5619 = vmul.f32 %v5618, 0.6931472
    %v5620 = vlog2.pop %v5493
    %v5621 = vmul.f32 %v5620, 0.6931472
    %v5622 = vlog2.pop %v5495
    %v5623 = vmul.f32 %v5622, 0.6931472
    %v5624 = vlog2.pop %v5497
    %v5625 = vmul.f32 %v5624, 0.6931472
    %v5626 = vlog2.pop %v5499
    %v5627 = vmul.f32 %v5626, 0.6931472
    %v5628 = vlog2.pop %v5501
    %v5629 = vmul.f32 %v5628, 0.6931472
    %v5630 = vsub.f32 %v5118, %v5503
    %v5631 = vsub.f32 %v5119, %v5505
    %v5632 = vsub.f32 %v5120, %v5507
    %v5633 = vsub.f32 %v5121, %v5509
    %v5634 = vsub.f32 %v5122, %v5511
    %v5635 = vsub.f32 %v5123, %v5513
    %v5636 = vsub.f32 %v5124, %v5515
    %v5637 = vsub.f32 %v5125, %v5517
    %v5638 = vsub.f32 %v5126, %v5519
    %v5639 = vsub.f32 %v5127, %v5521
    %v5640 = vsub.f32 %v5128, %v5523
    %v5641 = vsub.f32 %v5129, %v5525
    %v5642 = vsub.f32 %v5130, %v5527
    %v5643 = vsub.f32 %v5131, %v5529
    %v5644 = vsub.f32 %v5132, %v5531
    %v5645 = vsub.f32 %v5133, %v5533
    %v5646 = vsub.f32 %v5134, %v5535
    %v5647 = vsub.f32 %v5135, %v5537
    %v5648 = vsub.f32 %v5136, %v5539
    %v5649 = vsub.f32 %v5137, %v5541
    %v5650 = vsub.f32 %v5138, %v5543
    %v5651 = vsub.f32 %v5139, %v5545
    %v5652 = vsub.f32 %v5140, %v5547
    %v5653 = vsub.f32 %v5141, %v5549
    %v5654 = vsub.f32 %v5142, %v5551
    %v5655 = vsub.f32 %v5143, %v5553
    %v5656 = vsub.f32 %v5144, %v5555
    %v5657 = vsub.f32 %v5145, %v5557
    %v5658 = vsub.f32 %v5146, %v5559
    %v5659 = vsub.f32 %v5147, %v5561
    %v5660 = vsub.f32 %v5148, %v5563
    %v5661 = vsub.f32 %v5149, %v5565
    %v5662 = vsub.f32 %v5150, %v5567
    %v5663 = vsub.f32 %v5151, %v5569
    %v5664 = vsub.f32 %v5152, %v5571
    %v5665 = vsub.f32 %v5153, %v5573
    %v5666 = vsub.f32 %v5154, %v5575
    %v5667 = vsub.f32 %v5155, %v5577
    %v5668 = vsub.f32 %v5156, %v5579
    %v5669 = vsub.f32 %v5157, %v5581
    %v5670 = vsub.f32 %v5158, %v5583
    %v5671 = vsub.f32 %v5159, %v5585
    %v5672 = vsub.f32 %v5160, %v5587
    %v5673 = vsub.f32 %v5161, %v5589
    %v5674 = vsub.f32 %v5162, %v5591
    %v5675 = vsub.f32 %v5163, %v5593
    %v5676 = vsub.f32 %v5164, %v5595
    %v5677 = vsub.f32 %v5165, %v5597
    %v5678 = vsub.f32 %v5166, %v5599
    %v5679 = vsub.f32 %v5167, %v5601
    %v5680 = vsub.f32 %v5168, %v5603
    %v5681 = vsub.f32 %v5169, %v5605
    %v5682 = vsub.f32 %v5170, %v5607
    %v5683 = vsub.f32 %v5171, %v5609
    %v5684 = vsub.f32 %v5172, %v5611
    %v5685 = vsub.f32 %v5173, %v5613
    %v5686 = vsub.f32 %v5174, %v5615
    %v5687 = vsub.f32 %v5175, %v5617
    %v5688 = vsub.f32 %v5176, %v5619
    %v5689 = vsub.f32 %v5177, %v5621
    %v5690 = vsub.f32 %v5178, %v5623
    %v5691 = vsub.f32 %v5179, %v5625
    %v5692 = vsub.f32 %v5180, %v5627
    %v5693 = vsub.f32 %v5181, %v5629
    %v5694 = vsel %vm4925, %v5630, 0.0
    %v5695 = vsel %vm4925, %v5631, 0.0
    %v5696 = vsel %vm4925, %v5632, 0.0
    %v5697 = vsel %vm4925, %v5633, 0.0
    %v5698 = vsel %vm4925, %v5634, 0.0
    %v5699 = vsel %vm4925, %v5635, 0.0
    %v5700 = vsel %vm4925, %v5636, 0.0
    %v5701 = vsel %vm4925, %v5637, 0.0
    %v5702 = vsel %vm4925, %v5638, 0.0
    %v5703 = vsel %vm4925, %v5639, 0.0
    %v5704 = vsel %vm4925, %v5640, 0.0
    %v5705 = vsel %vm4925, %v5641, 0.0
    %v5706 = vsel %vm4925, %v5642, 0.0
    %v5707 = vsel %vm4925, %v5643, 0.0
    %v5708 = vsel %vm4925, %v5644, 0.0
    %v5709 = vsel %vm4925, %v5645, 0.0
    %v5710 = vsel %vm4925, %v5646, 0.0
    %v5711 = vsel %vm4925, %v5647, 0.0
    %v5712 = vsel %vm4925, %v5648, 0.0
    %v5713 = vsel %vm4925, %v5649, 0.0
    %v5714 = vsel %vm4925, %v5650, 0.0
    %v5715 = vsel %vm4925, %v5651, 0.0
    %v5716 = vsel %vm4925, %v5652, 0.0
    %v5717 = vsel %vm4925, %v5653, 0.0
    %v5718 = vsel %vm4925, %v5654, 0.0
    %v5719 = vsel %vm4925, %v5655, 0.0
    %v5720 = vsel %vm4925, %v5656, 0.0
    %v5721 = vsel %vm4925, %v5657, 0.0
    %v5722 = vsel %vm4925, %v5658, 0.0
    %v5723 = vsel %vm4925, %v5659, 0.0
    %v5724 = vsel %vm4925, %v5660, 0.0
    %v5725 = vsel %vm4925, %v5661, 0.0
    %v5726 = vsel %vm4925, %v5662, 0.0
    %v5727 = vsel %vm4925, %v5663, 0.0
    %v5728 = vsel %vm4925, %v5664, 0.0
    %v5729 = vsel %vm4925, %v5665, 0.0
    %v5730 = vsel %vm4925, %v5666, 0.0
    %v5731 = vsel %vm4925, %v5667, 0.0
    %v5732 = vsel %vm4925, %v5668, 0.0
    %v5733 = vsel %vm4925, %v5669, 0.0
    %v5734 = vsel %vm4925, %v5670, 0.0
    %v5735 = vsel %vm4925, %v5671, 0.0
    %v5736 = vsel %vm4925, %v5672, 0.0
    %v5737 = vsel %vm4925, %v5673, 0.0
    %v5738 = vsel %vm4925, %v5674, 0.0
    %v5739 = vsel %vm4925, %v5675, 0.0
    %v5740 = vsel %vm4925, %v5676, 0.0
    %v5741 = vsel %vm4925, %v5677, 0.0
    %v5742 = vsel %vm4925, %v5678, 0.0
    %v5743 = vsel %vm4925, %v5679, 0.0
    %v5744 = vsel %vm4925, %v5680, 0.0
    %v5745 = vsel %vm4925, %v5681, 0.0
    %v5746 = vsel %vm4925, %v5682, 0.0
    %v5747 = vsel %vm4925, %v5683, 0.0
    %v5748 = vsel %vm4925, %v5684, 0.0
    %v5749 = vsel %vm4925, %v5685, 0.0
    %v5750 = vsel %vm4925, %v5686, 0.0
    %v5751 = vsel %vm4925, %v5687, 0.0
    %v5752 = vsel %vm4925, %v5688, 0.0
    %v5753 = vsel %vm4925, %v5689, 0.0
    %v5754 = vsel %vm4925, %v5690, 0.0
    %v5755 = vsel %vm4925, %v5691, 0.0
    %v5756 = vsel %vm4925, %v5692, 0.0
    %v5757 = vsel %vm4925, %v5693, 0.0
    %5758 = vst [vmem:[%s7] sm:$0xff] %v5694
    %5759 = vst [vmem:[%s7 + $0x8] sm:$0xff] %v5695
    %5760 = vst [vmem:[%s7 + $0x10] sm:$0xff] %v5696
    %5761 = vst [vmem:[%s7 + $0x18] sm:$0xff] %v5697
    %5762 = vst [vmem:[%s7 + $0x20] sm:$0xff] %v5698
    %5763 = vst [vmem:[%s7 + $0x28] sm:$0xff] %v5699
    %5764 = vst [vmem:[%s7 + $0x30] sm:$0xff] %v5700
    %5765 = vst [vmem:[%s7 + $0x38] sm:$0xff] %v5701
    %5766 = vst [vmem:[%s7 + $0x40] sm:$0xff] %v5702
    %5767 = vst [vmem:[%s7 + $0x48] sm:$0xff] %v5703
    %5768 = vst [vmem:[%s7 + $0x50] sm:$0xff] %v5704
    %5769 = vst [vmem:[%s7 + $0x58] sm:$0xff] %v5705
    %5770 = vst [vmem:[%s7 + $0x60] sm:$0xff] %v5706
    %5771 = vst [vmem:[%s7 + $0x68] sm:$0xff] %v5707
    %5772 = vst [vmem:[%s7 + $0x70] sm:$0xff] %v5708
    %5773 = vst [vmem:[%s7 + $0x78] sm:$0xff] %v5709
    %5774 = vst [vmem:[%s7 + $0x80] sm:$0xff] %v5710
    %5775 = vst [vmem:[%s7 + $0x88] sm:$0xff] %v5711
    %5776 = vst [vmem:[%s7 + $0x90] sm:$0xff] %v5712
    %5777 = vst [vmem:[%s7 + $0x98] sm:$0xff] %v5713
    %5778 = vst [vmem:[%s7 + $0xa0] sm:$0xff] %v5714
    %5779 = vst [vmem:[%s7 + $0xa8] sm:$0xff] %v5715
    %5780 = vst [vmem:[%s7 + $0xb0] sm:$0xff] %v5716
    %5781 = vst [vmem:[%s7 + $0xb8] sm:$0xff] %v5717
    %5782 = vst [vmem:[%s7 + $0xc0] sm:$0xff] %v5718
    %5783 = vst [vmem:[%s7 + $0xc8] sm:$0xff] %v5719
    %5784 = vst [vmem:[%s7 + $0xd0] sm:$0xff] %v5720
    %5785 = vst [vmem:[%s7 + $0xd8] sm:$0xff] %v5721
    %5786 = vst [vmem:[%s7 + $0xe0] sm:$0xff] %v5722
    %5787 = vst [vmem:[%s7 + $0xe8] sm:$0xff] %v5723
    %5788 = vst [vmem:[%s7 + $0xf0] sm:$0xff] %v5724
    %5789 = vst [vmem:[%s7 + $0xf8] sm:$0xff] %v5725
    %5790 = vst [vmem:[%s7 + $0x100] sm:$0xff] %v5726
    %5791 = vst [vmem:[%s7 + $0x108] sm:$0xff] %v5727
    %5792 = vst [vmem:[%s7 + $0x110] sm:$0xff] %v5728
    %5793 = vst [vmem:[%s7 + $0x118] sm:$0xff] %v5729
    %5794 = vst [vmem:[%s7 + $0x120] sm:$0xff] %v5730
    %5795 = vst [vmem:[%s7 + $0x128] sm:$0xff] %v5731
    %5796 = vst [vmem:[%s7 + $0x130] sm:$0xff] %v5732
    %5797 = vst [vmem:[%s7 + $0x138] sm:$0xff] %v5733
    %5798 = vst [vmem:[%s7 + $0x140] sm:$0xff] %v5734
    %5799 = vst [vmem:[%s7 + $0x148] sm:$0xff] %v5735
    %5800 = vst [vmem:[%s7 + $0x150] sm:$0xff] %v5736
    %5801 = vst [vmem:[%s7 + $0x158] sm:$0xff] %v5737
    %5802 = vst [vmem:[%s7 + $0x160] sm:$0xff] %v5738
    %5803 = vst [vmem:[%s7 + $0x168] sm:$0xff] %v5739
    %5804 = vst [vmem:[%s7 + $0x170] sm:$0xff] %v5740
    %5805 = vst [vmem:[%s7 + $0x178] sm:$0xff] %v5741
    %5806 = vst [vmem:[%s7 + $0x180] sm:$0xff] %v5742
    %5807 = vst [vmem:[%s7 + $0x188] sm:$0xff] %v5743
    %5808 = vst [vmem:[%s7 + $0x190] sm:$0xff] %v5744
    %5809 = vst [vmem:[%s7 + $0x198] sm:$0xff] %v5745
    %5810 = vst [vmem:[%s7 + $0x1a0] sm:$0xff] %v5746
    %5811 = vst [vmem:[%s7 + $0x1a8] sm:$0xff] %v5747
    %5812 = vst [vmem:[%s7 + $0x1b0] sm:$0xff] %v5748
    %5813 = vst [vmem:[%s7 + $0x1b8] sm:$0xff] %v5749
    %5814 = vst [vmem:[%s7 + $0x1c0] sm:$0xff] %v5750
    %5815 = vst [vmem:[%s7 + $0x1c8] sm:$0xff] %v5751
    %5816 = vst [vmem:[%s7 + $0x1d0] sm:$0xff] %v5752
    %5817 = vst [vmem:[%s7 + $0x1d8] sm:$0xff] %v5753
    %5818 = vst [vmem:[%s7 + $0x1e0] sm:$0xff] %v5754
    %5819 = vst [vmem:[%s7 + $0x1e8] sm:$0xff] %v5755
    %5820 = vst [vmem:[%s7 + $0x1f0] sm:$0xff] %v5756
    %5821 = vst [vmem:[%s7 + $0x1f8] sm:$0xff] %v5757
    // Predicated region
    $region34: #{gprgnn_forward.1} parent=1 // pred_check
      _
    $region35: #{gprgnn_forward.1} parent=1 // pred_check_branch
      %5823 = sbr.rel (0) target = $region37
    $region36: #{gprgnn_forward.1} parent=1 // pred_region
      _
    $region37: #{gprgnn_forward.1} parent=1 // pred_fallthru
      _
    // Predicated region
    $region38: #{gprgnn_forward.1} parent=1 // pred_check
      _
    $region39: #{gprgnn_forward.1} parent=1 // pred_check_branch
      %5825 = sbr.rel (0) target = $region41
    $region40: #{gprgnn_forward.1} parent=1 // pred_region
      _
    $region41: #{gprgnn_forward.1} parent=1 // pred_fallthru
      _
    %5826 = vsyncpa [#allocation3], 1

</llo_original>
